<compile_context>
chip_gen: v7x
topology: tpu7x:2x2x1
jax: 0.10.0
libtpu: 0.0.40
codegen_flags: <defaults>
</compile_context>

<pallas_src>
import functools
import numpy as np
import jax
import jax.numpy as jnp
from jax import lax
from jax.experimental import pallas as pl
from jax.experimental.pallas import tpu as pltpu

F32 = jnp.float32
BF16 = jnp.bfloat16
EA_PAD = 128  # edge_attr feature dim padded 100 -> 128 (lane-dense loads)


def _relu(x):
    return jnp.maximum(x, 0.0)


# --------------------------------------------------------------------------
# Kernel A: edge decoder + GINEConv message/aggregate + MLP + outer ReLU
#           + pool1 score.
# --------------------------------------------------------------------------
def _gine_kernel(ea_ref, x_ref, src_ref, dstr_ref,
                 d1w_ref, d1b_ref, d2w_ref, d2b_ref,
                 m1w_ref, m1b_ref, m2w_ref, m2b_ref, w1n_ref,
                 h_ref, s1_ref):
    E = ea_ref.shape[0]
    N = x_ref.shape[0]
    # dec1 -> relu -> dec2 -> relu (bf16 MXU operands, f32 accumulation)
    ea = _relu(jnp.dot(ea_ref[...].astype(BF16), d1w_ref[...],
                       preferred_element_type=F32) + d1b_ref[...])
    ea = _relu(jnp.dot(ea.astype(BF16), d2w_ref[...],
                       preferred_element_type=F32) + d2b_ref[...])           # (E, 32)
    x = x_ref[...]                                                           # (N, 32) f32
    # gather x[src] via in-kernel bf16 one-hot (exact: entries are 0/1)
    gsrc = (src_ref[...] ==
            lax.broadcasted_iota(jnp.int32, (E, N), 1)).astype(BF16)         # (E, N)
    x_src = jnp.dot(gsrc, x.astype(BF16), preferred_element_type=F32)        # (E, 32)
    msgs = _relu(x_src + ea)                                                 # GINE message
    # scatter-add over destinations: transposed one-hot built directly in-kernel
    sdst = (lax.broadcasted_iota(jnp.int32, (N, E), 0) ==
            dstr_ref[...]).astype(BF16)                                      # (N, E)
    aggr = jnp.dot(sdst, msgs.astype(BF16), preferred_element_type=F32)      # (N, 32)
    h = aggr + x                                                             # eps = 0
    h = _relu(jnp.dot(h.astype(BF16), m1w_ref[...],
                      preferred_element_type=F32) + m1b_ref[...])            # (N, 128)
    h = _relu(jnp.dot(h.astype(BF16), m2w_ref[...],
                      preferred_element_type=F32) + m2b_ref[...])            # (N, 512) + fused outer F.relu
    h_ref[...] = h
    s1_ref[...] = jnp.tanh(jnp.dot(h, w1n_ref[...],
                                   preferred_element_type=F32))              # pool1 score (tanh'd)


# --------------------------------------------------------------------------
# Kernel B: pool1 index-gather + gate, global max/mean pool (x1),
#           GATConv(512 -> 4x128) + bias + outer ReLU, pool2 score.
# --------------------------------------------------------------------------
def _gat_kernel(h_ref, perm_ref, gate_ref, src_ref, dstc_ref, dstr_ref, valid_ref,
                expand_ref, linw_ref, was_ref, wad_ref, bias_ref, w2n_ref,
                out_ref, s2_ref, x1_ref, xg_ref, *, seg_starts, seg_counts):
    N1 = xg_ref.shape[0]
    Ea = src_ref.shape[0]

    # ---- TopKPooling #1: index gather of kept rows (perm in SMEM, pl.ds row copies)
    def gather(i, carry):
        xg_ref[pl.ds(i, 1), :] = h_ref[pl.ds(perm_ref[i], 1), :]
        return carry
    lax.fori_loop(0, N1, gather, 0)
    xp = xg_ref[...] * gate_ref[...]                                         # gate by tanh score

    # ---- global max / mean pool -> x1 (static per-graph slices, lane-dense store)
    gmax, gmean = [], []
    for g in range(len(seg_counts)):
        s0, c = seg_starts[g], seg_counts[g]
        seg = xp[s0:s0 + c, :]
        gmax.append(jnp.max(seg, axis=0, keepdims=True))
        gmean.append(jnp.sum(seg, axis=0, keepdims=True) * (1.0 / c))
    x1_ref[...] = jnp.concatenate(
        [jnp.concatenate(gmax, axis=0), jnp.concatenate(gmean, axis=0)], axis=1)

    # ---- GATConv ----
    xpb = xp.astype(BF16)
    xw = jnp.dot(xpb, linw_ref[...], preferred_element_type=F32)             # (N1, 512)
    xwb = xw.astype(BF16)
    a_src = jnp.dot(xwb, was_ref[...], preferred_element_type=F32)           # (N1, 4)
    a_dst = jnp.dot(xwb, wad_ref[...], preferred_element_type=F32)           # (N1, 4)

    # adjacency one-hots built in-kernel in bf16 from int vectors;
    # invalid (cut) edges carry index -1 -> all-zero rows/columns.
    gs = (src_ref[...] ==
          lax.broadcasted_iota(jnp.int32, (Ea, N1), 1)).astype(BF16)         # (Ea, N1)
    gd = (dstc_ref[...] ==
          lax.broadcasted_iota(jnp.int32, (Ea, N1), 1)).astype(BF16)         # (Ea, N1)
    gdt = (lax.broadcasted_iota(jnp.int32, (N1, Ea), 0) ==
           dstr_ref[...]).astype(BF16)                                       # (N1, Ea)
    valid = valid_ref[...] > 0                                               # (Ea, 1)

    alpha = (jnp.dot(gs, a_src.astype(BF16), preferred_element_type=F32)
             + jnp.dot(gd, a_dst.astype(BF16), preferred_element_type=F32))  # (Ea, 4)
    alpha = jnp.where(alpha > 0, alpha, 0.2 * alpha)                         # leaky_relu(0.2)
    # single per-head stabilizer (softmax is shift-invariant) — no per-dst loop
    amax = jnp.max(jnp.where(valid, alpha, -1e30), axis=0, keepdims=True)    # (1, 4)
    ae = jnp.exp(jnp.where(valid, alpha - amax, -1e30))                      # invalid edges -> exactly 0
    asum = jnp.dot(gdt, ae.astype(BF16), preferred_element_type=F32)         # (N1, 4) per-dst sums
    denom = jnp.dot(gd, asum.astype(BF16), preferred_element_type=F32)       # (Ea, 4)
    attn = ae * pl.reciprocal(denom + 1e-16, approx=True)                    # softmax over dst (EUP recip)
    # per-head broadcast 4 -> 512 via tiny expansion matmul (no jnp.repeat)
    attn_rep = jnp.dot(attn.astype(BF16), expand_ref[...],
                       preferred_element_type=F32)                           # (Ea, 512)
    xw_src = jnp.dot(gs, xwb, preferred_element_type=F32)                    # (Ea, 512)
    msgs = (xw_src * attn_rep).astype(BF16)
    out = jnp.dot(gdt, msgs, preferred_element_type=F32)                     # (N1, 512)
    out = _relu(out + bias_ref[...])                                         # bias + outer F.relu
    out_ref[...] = out
    s2_ref[...] = jnp.tanh(jnp.dot(out, w2n_ref[...],
                                   preferred_element_type=F32))              # pool2 score


# --------------------------------------------------------------------------
# Kernel C: pool2 index-gather + gate, global max/mean pool (x2), x1 + x2,
#           lin1 -> relu -> lin2 -> relu -> lin3 -> log_softmax.
# --------------------------------------------------------------------------
def _head_kernel(x_ref, perm_ref, gate_ref, x1_ref,
                 l1w_ref, l1b_ref, l2w_ref, l2b_ref, l3w_ref, l3b_ref,
                 o_ref, xg_ref, *, seg_starts, seg_counts):
    N2 = xg_ref.shape[0]

    def gather(i, carry):
        xg_ref[pl.ds(i, 1), :] = x_ref[pl.ds(perm_ref[i], 1), :]
        return carry
    lax.fori_loop(0, N2, gather, 0)
    xp = xg_ref[...] * gate_ref[...]

    gmax, gmean = [], []
    for g in range(len(seg_counts)):
        s0, c = seg_starts[g], seg_counts[g]
        seg = xp[s0:s0 + c, :]
        gmax.append(jnp.max(seg, axis=0, keepdims=True))
        gmean.append(jnp.sum(seg, axis=0, keepdims=True) * (1.0 / c))
    x2 = jnp.concatenate(
        [jnp.concatenate(gmax, axis=0), jnp.concatenate(gmean, axis=0)], axis=1)

    x = x1_ref[...] + x2                                                     # (G, 1024)
    x = _relu(jnp.dot(x, l1w_ref[...], preferred_element_type=F32) + l1b_ref[...])
    # TODO(synk): F.dropout(p=0.4) modeled as identity (eval mode); training-time RNG dropout omitted.
    x = _relu(jnp.dot(x, l2w_ref[...], preferred_element_type=F32) + l2b_ref[...])
    y = jnp.dot(x, l3w_ref[...], preferred_element_type=F32) + l3b_ref[...]
    z = y - jnp.max(y, axis=-1, keepdims=True)
    o_ref[...] = z - jnp.log(jnp.sum(jnp.exp(z), axis=-1, keepdims=True))    # log_softmax


# ----------------------------- parameters -----------------------------

def init_params(key):
    def dense(k, fan_in, fan_out, w_dtype=jnp.float32):
        k1, k2 = jax.random.split(k)
        bound = 1.0 / np.sqrt(fan_in)
        w = jax.random.uniform(k1, (fan_in, fan_out), jnp.float32, -bound, bound)
        b = jax.random.uniform(k2, (1, fan_out), jnp.float32, -bound, bound)
        return w.astype(w_dtype), b

    ks = jax.random.split(key, 12)
    p = {}
    d1w, p["dec1_b"] = dense(ks[0], 100, 64)
    # pad 100 -> 128 input rows once (zeros contribute nothing)
    p["dec1_w"] = jnp.zeros((EA_PAD, 64), jnp.float32).at[:100, :].set(d1w).astype(BF16)
    p["dec2_w"], p["dec2_b"] = dense(ks[1], 64, 32, BF16)
    p["mlp1_w"], p["mlp1_b"] = dense(ks[2], 32, 128, BF16)
    p["mlp2_w"], p["mlp2_b"] = dense(ks[3], 128, 512, BF16)

    pool1_w = jax.random.normal(ks[4], (512,), jnp.float32)
    p["pool1_wn"] = (pool1_w / jnp.linalg.norm(pool1_w)).reshape(512, 1)     # pre-normalized

    p["gat_lin_w"], _ = dense(ks[5], 512, 512, BF16)                         # GATConv lin (no bias)
    H, C = 4, 128
    att_src = 0.1 * np.asarray(jax.random.normal(ks[6], (H, C), jnp.float32))
    att_dst = 0.1 * np.asarray(jax.random.normal(ks[7], (H, C), jnp.float32))
    wa_src = np.zeros((H * C, H), np.float32)
    wa_dst = np.zeros((H * C, H), np.float32)
    for h in range(H):                                                       # block-structured att projections
        wa_src[h * C:(h + 1) * C, h] = att_src[h]
        wa_dst[h * C:(h + 1) * C, h] = att_dst[h]
    p["gat_wa_src"] = jnp.asarray(wa_src, BF16)
    p["gat_wa_dst"] = jnp.asarray(wa_dst, BF16)
    p["gat_bias"] = jnp.zeros((1, 512), jnp.float32)

    pool2_w = jax.random.normal(ks[8], (512,), jnp.float32)
    p["pool2_wn"] = (pool2_w / jnp.linalg.norm(pool2_w)).reshape(512, 1)

    p["lin1_w"], p["lin1_b"] = dense(ks[9], 1024, 128)
    p["lin2_w"], p["lin2_b"] = dense(ks[10], 128, 64)
    p["lin3_w"], p["lin3_b"] = dense(ks[11], 64, 8)
    return p


# ----------------------------- forward builder -----------------------------

def make_forward(edge_index, batch, ratio=0.8, heads=4, head_dim=128):
    """Builds a jitted forward(params, x, edge_attr); edge_index/batch are static structure."""
    edge_index = np.asarray(edge_index)
    batch = np.asarray(batch)
    src = edge_index[0].astype(np.int32)
    dst = edge_index[1].astype(np.int32)
    N = int(batch.shape[0])
    E = int(src.shape[0])
    G = int(batch.max()) + 1

    # static per-graph segment structure (batch contiguous per graph, as PyG produces)
    counts = np.array([int((batch == g).sum()) for g in range(G)])
    starts = np.concatenate([[0], np.cumsum(counts)[:-1]]).astype(int)
    k1 = np.ceil(ratio * counts).astype(int)
    N1 = int(k1.sum())
    starts1 = np.concatenate([[0], np.cumsum(k1)[:-1]]).astype(int)
    k2 = np.ceil(ratio * k1).astype(int)
    N2 = int(k2.sum())
    starts2 = np.concatenate([[0], np.cumsum(k2)[:-1]]).astype(int)
    Ea = E + N1                                                              # edges + self-loops

    # static index tables so the per-graph top-k is ONE batched lax.top_k
    maxC1, kmax1 = int(counts.max()), int(k1.max())
    seg_idx1 = jnp.asarray(np.minimum(starts[:, None] + np.arange(maxC1)[None, :], N - 1).astype(np.int32))
    seg_msk1 = jnp.asarray(np.arange(maxC1)[None, :] < counts[:, None])
    maxC2, kmax2 = int(k1.max()), int(k2.max())
    seg_idx2 = jnp.asarray(np.minimum(starts1[:, None] + np.arange(maxC2)[None, :], N1 - 1).astype(np.int32))
    seg_msk2 = jnp.asarray(np.arange(maxC2)[None, :] < k1[:, None])

    # tiny static edge-index constants (int32)
    src_col = jnp.asarray(src.reshape(E, 1))
    dst_row = jnp.asarray(dst.reshape(1, E))
    src_dev = jnp.asarray(src)
    dst_dev = jnp.asarray(dst)

    # per-head broadcast matrix (4 -> 512), bf16 one-hot (exact)
    expand_np = np.zeros((heads, heads * head_dim), np.float32)
    for h in range(heads):
        expand_np[h, h * head_dim:(h + 1) * head_dim] = 1.0
    expand = jnp.asarray(expand_np, BF16)

    VMEM = pl.BlockSpec(memory_space=pltpu.MemorySpace.VMEM)
    SMEM = pl.BlockSpec(memory_space=pltpu.MemorySpace.SMEM)

    gine_call = pl.pallas_call(
        _gine_kernel,
        out_shape=(jax.ShapeDtypeStruct((N, 512), F32),
                   jax.ShapeDtypeStruct((N, 1), F32)))
    gat_call = pl.pallas_call(
        functools.partial(_gat_kernel,
                          seg_starts=tuple(int(v) for v in starts1),
                          seg_counts=tuple(int(v) for v in k1)),
        in_specs=[VMEM, SMEM] + [VMEM] * 11,
        out_shape=(jax.ShapeDtypeStruct((N1, 512), F32),
                   jax.ShapeDtypeStruct((N1, 1), F32),
                   jax.ShapeDtypeStruct((G, 1024), F32)),
        scratch_shapes=[pltpu.VMEM((N1, 512), F32)])
    head_call = pl.pallas_call(
        functools.partial(_head_kernel,
                          seg_starts=tuple(int(v) for v in starts2),
                          seg_counts=tuple(int(v) for v in k2)),
        in_specs=[VMEM, SMEM] + [VMEM] * 8,
        out_shape=jax.ShapeDtypeStruct((G, 8), F32),
        scratch_shapes=[pltpu.VMEM((N2, 512), F32)])

    def batched_topk(score_flat, seg_idx, seg_msk, base, keep, kmax):
        s = jnp.where(seg_msk, score_flat[seg_idx], -jnp.inf)                # (G, maxC)
        vals, idx = lax.top_k(s, kmax)                                       # one batched top-k
        perm = jnp.concatenate(
            [int(base[g]) + idx[g, :int(keep[g])] for g in range(G)]).astype(jnp.int32)
        gate = jnp.concatenate(
            [vals[g, :int(keep[g])] for g in range(G)]).reshape(-1, 1)
        return perm, gate

    @jax.jit
    def forward(params, x, edge_attr_raw):
        ea = jnp.pad(edge_attr_raw, ((0, 0), (0, EA_PAD - edge_attr_raw.shape[1])))

        # ---- kernel A: decoder + GINE + MLP + outer ReLU + pool1 score ----
        h, score1 = gine_call(
            ea, x, src_col, dst_row,
            params["dec1_w"], params["dec1_b"], params["dec2_w"], params["dec2_b"],
            params["mlp1_w"], params["mlp1_b"], params["mlp2_w"], params["mlp2_b"],
            params["pool1_wn"])

        # ---- TopKPooling #1 selection + edge remap (tiny int/f32 vectors only) ----
        perm1, gate1 = batched_topk(score1[:, 0], seg_idx1, seg_msk1, starts, k1, kmax1)
        node_map = jnp.full((N,), -1, jnp.int32).at[perm1].set(jnp.arange(N1, dtype=jnp.int32))
        src_m = node_map[src_dev]
        dst_m = node_map[dst_dev]
        valid = (src_m >= 0) & (dst_m >= 0) & (src_m != dst_m)               # drop cut edges & old self-loops
        loops = jnp.arange(N1, dtype=jnp.int32)
        src_a = jnp.concatenate([jnp.where(valid, src_m, -1), loops])        # -1 => all-zero one-hot row
        dst_a = jnp.concatenate([jnp.where(valid, dst_m, -1), loops])
        valid_a = jnp.concatenate([valid.astype(F32), jnp.ones((N1,), F32)])

        # ---- kernel B: pool1 gather/gate + x1 pools + GAT + ReLU + pool2 score ----
        gat_out, score2, x1 = gat_call(
            h, perm1, gate1,
            src_a.reshape(Ea, 1), dst_a.reshape(Ea, 1), dst_a.reshape(1, Ea),
            valid_a.reshape(Ea, 1), expand,
            params["gat_lin_w"], params["gat_wa_src"], params["gat_wa_dst"],
            params["gat_bias"], params["pool2_wn"])

        # ---- TopKPooling #2 selection (post-pool2 edges are unused downstream) ----
        perm2, gate2 = batched_topk(score2[:, 0], seg_idx2, seg_msk2, starts1, k2, kmax2)

        # ---- kernel C: pool2 gather/gate + x2 pools + MLP head + log_softmax ----
        return head_call(
            gat_out, perm2, gate2, x1,
            params["lin1_w"], params["lin1_b"], params["lin2_w"], params["lin2_b"],
            params["lin3_w"], params["lin3_b"])

    return forward


# ----------------------------- demo -----------------------------

if __name__ == "__main__":
    key = jax.random.PRNGKey(0)
    kp, kx, ka = jax.random.split(key, 3)
    params = init_params(kp)

    num_graphs = 2
    nodes_per_graph = 6
    N = num_graphs * nodes_per_graph
    x = jax.random.normal(kx, (N, 32), jnp.float32)
    batch = np.repeat(np.arange(num_graphs), nodes_per_graph)

    rng = np.random.RandomState(0)
    srcs, dsts = [], []
    for g in range(num_graphs):
        base = g * nodes_per_graph
        for _ in range(12):
            s, d = rng.choice(nodes_per_graph, 2, replace=False)
            srcs.append(base + int(s))
            dsts.append(base + int(d))
    edge_index = np.stack([np.array(srcs), np.array(dsts)])
    E = edge_index.shape[1]
    edge_attr = jax.random.normal(ka, (E, 100), jnp.float32)

    forward = make_forward(edge_index, batch, ratio=0.8)
    out = forward(params, x, edge_attr)
    out = jax.block_until_ready(out)

    assert out.shape == (num_graphs, 8), out.shape
    out_np = np.asarray(out, dtype=np.float64)
    assert np.all(np.isfinite(out_np)), out_np
    probs_sum = np.exp(out_np).sum(axis=-1)
    assert np.allclose(probs_sum, 1.0, atol=1e-4), probs_sum
    print("KERNEL_OK")
</pallas_src>

<mosaic_0001>
module attributes {stable_mosaic.version = 11 : i64} {
  func.func @_gine_kernel(%arg0: memref<24x128xf32, #tpu.memory_space<vmem>>, %arg1: memref<12x32xf32, #tpu.memory_space<vmem>>, %arg2: memref<24x1xi32, #tpu.memory_space<vmem>>, %arg3: memref<1x24xi32, #tpu.memory_space<vmem>>, %arg4: memref<128x64xbf16, #tpu.memory_space<vmem>>, %arg5: memref<1x64xf32, #tpu.memory_space<vmem>>, %arg6: memref<64x32xbf16, #tpu.memory_space<vmem>>, %arg7: memref<1x32xf32, #tpu.memory_space<vmem>>, %arg8: memref<32x128xbf16, #tpu.memory_space<vmem>>, %arg9: memref<1x128xf32, #tpu.memory_space<vmem>>, %arg10: memref<128x512xbf16, #tpu.memory_space<vmem>>, %arg11: memref<1x512xf32, #tpu.memory_space<vmem>>, %arg12: memref<512x1xf32, #tpu.memory_space<vmem>>, %arg13: memref<12x512xf32, #tpu.memory_space<vmem>>, %arg14: memref<12x1xf32, #tpu.memory_space<vmem>>) attributes {dimension_semantics = [], scalar_prefetch = 0 : i64, scratch_operands = 0 : i64, tpu.core_type = #tpu.core_type<tc>} {
    %c0 = arith.constant 0 : index
    %c0_0 = arith.constant 0 : index
    %0 = vector.load %arg0[%c0, %c0_0] : memref<24x128xf32, #tpu.memory_space<vmem>>, vector<24x128xf32>
    %1 = arith.truncf %0 : vector<24x128xf32> to vector<24x128xbf16>
    %c0_1 = arith.constant 0 : index
    %c0_2 = arith.constant 0 : index
    %2 = vector.load %arg4[%c0_1, %c0_2] : memref<128x64xbf16, #tpu.memory_space<vmem>>, vector<128x64xbf16>
    %cst = arith.constant dense<0.000000e+00> : vector<24x64xf32>
    %3 = tpu.matmul %1, %2, %cst {dimension_numbers = #tpu.dot_dimension_numbers<[1], [0], [0], [1], [0, 0, 1, 1], [], []>} : vector<24x128xbf16>, vector<128x64xbf16>, vector<24x64xf32> -> vector<24x64xf32>
    %c0_3 = arith.constant 0 : index
    %c0_4 = arith.constant 0 : index
    %4 = vector.load %arg5[%c0_3, %c0_4] : memref<1x64xf32, #tpu.memory_space<vmem>>, vector<1x64xf32>
    %5 = vector.broadcast %4 : vector<1x64xf32> to vector<24x64xf32>
    %6 = arith.addf %3, %5 : vector<24x64xf32>
    %cst_5 = arith.constant 0.000000e+00 : f32
    %7 = vector.broadcast %cst_5 : f32 to vector<24x64xf32>
    %8 = arith.maximumf %6, %7 : vector<24x64xf32>
    %9 = arith.truncf %8 : vector<24x64xf32> to vector<24x64xbf16>
    %c0_6 = arith.constant 0 : index
    %c0_7 = arith.constant 0 : index
    %10 = vector.load %arg6[%c0_6, %c0_7] : memref<64x32xbf16, #tpu.memory_space<vmem>>, vector<64x32xbf16>
    %cst_8 = arith.constant dense<0.000000e+00> : vector<24x32xf32>
    %11 = tpu.matmul %9, %10, %cst_8 {dimension_numbers = #tpu.dot_dimension_numbers<[1], [0], [0], [1], [0, 0, 1, 1], [], []>} : vector<24x64xbf16>, vector<64x32xbf16>, vector<24x32xf32> -> vector<24x32xf32>
    %c0_9 = arith.constant 0 : index
    %c0_10 = arith.constant 0 : index
    %12 = vector.load %arg7[%c0_9, %c0_10] : memref<1x32xf32, #tpu.memory_space<vmem>>, vector<1x32xf32>
    %13 = vector.broadcast %12 : vector<1x32xf32> to vector<24x32xf32>
    %14 = arith.addf %11, %13 : vector<24x32xf32>
    %cst_11 = arith.constant 0.000000e+00 : f32
    %15 = vector.broadcast %cst_11 : f32 to vector<24x32xf32>
    %16 = arith.maximumf %14, %15 : vector<24x32xf32>
    %c0_12 = arith.constant 0 : index
    %c0_13 = arith.constant 0 : index
    %17 = vector.load %arg1[%c0_12, %c0_13] : memref<12x32xf32, #tpu.memory_space<vmem>>, vector<12x32xf32>
    %c0_14 = arith.constant 0 : index
    %c0_15 = arith.constant 0 : index
    %18 = vector.load %arg2[%c0_14, %c0_15] : memref<24x1xi32, #tpu.memory_space<vmem>>, vector<24x1xi32>
    %19 = tpu.iota {dimensions = array<i32: 1>} : vector<24x12xi32>
    %20 = vector.broadcast %18 : vector<24x1xi32> to vector<24x12xi32>
    %21 = arith.cmpi eq, %20, %19 : vector<24x12xi32>
    %22 = arith.extui %21 : vector<24x12xi1> to vector<24x12xi32>
    %23 = arith.sitofp %22 : vector<24x12xi32> to vector<24x12xf32>
    %24 = arith.truncf %23 : vector<24x12xf32> to vector<24x12xbf16>
    %25 = arith.truncf %17 : vector<12x32xf32> to vector<12x32xbf16>
    %cst_16 = arith.constant dense<0.000000e+00> : vector<24x32xf32>
    %26 = tpu.matmul %24, %25, %cst_16 {dimension_numbers = #tpu.dot_dimension_numbers<[1], [0], [0], [1], [0, 0, 1, 1], [], []>} : vector<24x12xbf16>, vector<12x32xbf16>, vector<24x32xf32> -> vector<24x32xf32>
    %27 = arith.addf %26, %16 : vector<24x32xf32>
    %cst_17 = arith.constant 0.000000e+00 : f32
    %28 = vector.broadcast %cst_17 : f32 to vector<24x32xf32>
    %29 = arith.maximumf %27, %28 : vector<24x32xf32>
    %30 = tpu.iota {dimensions = array<i32: 0>} : vector<12x24xi32>
    %c0_18 = arith.constant 0 : index
    %c0_19 = arith.constant 0 : index
    %31 = vector.load %arg3[%c0_18, %c0_19] : memref<1x24xi32, #tpu.memory_space<vmem>>, vector<1x24xi32>
    %32 = vector.broadcast %31 : vector<1x24xi32> to vector<12x24xi32>
    %33 = arith.cmpi eq, %30, %32 : vector<12x24xi32>
    %34 = arith.extui %33 : vector<12x24xi1> to vector<12x24xi32>
    %35 = arith.sitofp %34 : vector<12x24xi32> to vector<12x24xf32>
    %36 = arith.truncf %35 : vector<12x24xf32> to vector<12x24xbf16>
    %37 = arith.truncf %29 : vector<24x32xf32> to vector<24x32xbf16>
    %cst_20 = arith.constant dense<0.000000e+00> : vector<12x32xf32>
    %38 = tpu.matmul %36, %37, %cst_20 {dimension_numbers = #tpu.dot_dimension_numbers<[1], [0], [0], [1], [0, 0, 1, 1], [], []>} : vector<12x24xbf16>, vector<24x32xbf16>, vector<12x32xf32> -> vector<12x32xf32>
    %39 = arith.addf %38, %17 : vector<12x32xf32>
    %40 = arith.truncf %39 : vector<12x32xf32> to vector<12x32xbf16>
    %c0_21 = arith.constant 0 : index
    %c0_22 = arith.constant 0 : index
    %41 = vector.load %arg8[%c0_21, %c0_22] : memref<32x128xbf16, #tpu.memory_space<vmem>>, vector<32x128xbf16>
    %cst_23 = arith.constant dense<0.000000e+00> : vector<12x128xf32>
    %42 = tpu.matmul %40, %41, %cst_23 {dimension_numbers = #tpu.dot_dimension_numbers<[1], [0], [0], [1], [0, 0, 1, 1], [], []>} : vector<12x32xbf16>, vector<32x128xbf16>, vector<12x128xf32> -> vector<12x128xf32>
    %c0_24 = arith.constant 0 : index
    %c0_25 = arith.constant 0 : index
    %43 = vector.load %arg9[%c0_24, %c0_25] : memref<1x128xf32, #tpu.memory_space<vmem>>, vector<1x128xf32>
    %44 = vector.broadcast %43 : vector<1x128xf32> to vector<12x128xf32>
    %45 = arith.addf %42, %44 : vector<12x128xf32>
    %cst_26 = arith.constant 0.000000e+00 : f32
    %46 = vector.broadcast %cst_26 : f32 to vector<12x128xf32>
    %47 = arith.maximumf %45, %46 : vector<12x128xf32>
    %48 = arith.truncf %47 : vector<12x128xf32> to vector<12x128xbf16>
    %c0_27 = arith.constant 0 : index
    %c0_28 = arith.constant 0 : index
    %49 = vector.load %arg10[%c0_27, %c0_28] : memref<128x512xbf16, #tpu.memory_space<vmem>>, vector<128x512xbf16>
    %cst_29 = arith.constant dense<0.000000e+00> : vector<12x512xf32>
    %50 = tpu.matmul %48, %49, %cst_29 {dimension_numbers = #tpu.dot_dimension_numbers<[1], [0], [0], [1], [0, 0, 1, 1], [], []>} : vector<12x128xbf16>, vector<128x512xbf16>, vector<12x512xf32> -> vector<12x512xf32>
    %c0_30 = arith.constant 0 : index
    %c0_31 = arith.constant 0 : index
    %51 = vector.load %arg11[%c0_30, %c0_31] : memref<1x512xf32, #tpu.memory_space<vmem>>, vector<1x512xf32>
    %52 = vector.broadcast %51 : vector<1x512xf32> to vector<12x512xf32>
    %53 = arith.addf %50, %52 : vector<12x512xf32>
    %cst_32 = arith.constant 0.000000e+00 : f32
    %54 = vector.broadcast %cst_32 : f32 to vector<12x512xf32>
    %55 = arith.maximumf %53, %54 : vector<12x512xf32>
    %c0_33 = arith.constant 0 : index
    %c0_34 = arith.constant 0 : index
    %56 = vector.load %arg13[%c0_33, %c0_34] : memref<12x512xf32, #tpu.memory_space<vmem>>, vector<12x512xf32>
    tpu.vector_store %arg13[%c0_33, %c0_34], %55 {strides = array<i32>} : memref<12x512xf32, #tpu.memory_space<vmem>>, vector<12x512xf32>,
    %c0_35 = arith.constant 0 : index
    %c0_36 = arith.constant 0 : index
    %57 = vector.load %arg12[%c0_35, %c0_36] : memref<512x1xf32, #tpu.memory_space<vmem>>, vector<512x1xf32>
    %cst_37 = arith.constant dense<0.000000e+00> : vector<12x1xf32>
    %58 = tpu.matmul %55, %57, %cst_37 {dimension_numbers = #tpu.dot_dimension_numbers<[1], [0], [0], [1], [0, 0, 1, 1], [], []>} : vector<12x512xf32>, vector<512x1xf32>, vector<12x1xf32> -> vector<12x1xf32>
    %59 = math.tanh %58 : vector<12x1xf32>
    %c0_38 = arith.constant 0 : index
    %c0_39 = arith.constant 0 : index
    %60 = vector.load %arg14[%c0_38, %c0_39] : memref<12x1xf32, #tpu.memory_space<vmem>>, vector<12x1xf32>
    tpu.vector_store %arg14[%c0_38, %c0_39], %59 {strides = array<i32>} : memref<12x1xf32, #tpu.memory_space<vmem>>, vector<12x1xf32>,
    return
  }
}

module attributes {stable_mosaic.version = 11 : i64} {
  func.func @_gat_kernel(%arg0: memref<12x512xf32, #tpu.memory_space<vmem>>, %arg1: memref<10xi32, #tpu.memory_space<smem>>, %arg2: memref<10x1xf32, #tpu.memory_space<vmem>>, %arg3: memref<34x1xi32, #tpu.memory_space<vmem>>, %arg4: memref<34x1xi32, #tpu.memory_space<vmem>>, %arg5: memref<1x34xi32, #tpu.memory_space<vmem>>, %arg6: memref<34x1xf32, #tpu.memory_space<vmem>>, %arg7: memref<4x512xbf16, #tpu.memory_space<vmem>>, %arg8: memref<512x512xbf16, #tpu.memory_space<vmem>>, %arg9: memref<512x4xbf16, #tpu.memory_space<vmem>>, %arg10: memref<512x4xbf16, #tpu.memory_space<vmem>>, %arg11: memref<1x512xf32, #tpu.memory_space<vmem>>, %arg12: memref<512x1xf32, #tpu.memory_space<vmem>>, %arg13: memref<10x512xf32, #tpu.memory_space<vmem>>, %arg14: memref<10x1xf32, #tpu.memory_space<vmem>>, %arg15: memref<2x1024xf32, #tpu.memory_space<vmem>>, %arg16: memref<10x512xf32, #tpu.memory_space<vmem>>) attributes {dimension_semantics = [], scalar_prefetch = 0 : i64, scratch_operands = 1 : i64, tpu.core_type = #tpu.core_type<tc>} {
    %c0_i32 = arith.constant 0 : i32
    %c10_i32 = arith.constant 10 : i32
    %0 = arith.addi %c0_i32, %c10_i32 : i32
    %c1_i32 = arith.constant 1 : i32
    scf.for %arg17 = %c0_i32 to %0 step %c1_i32  : i32 {
      %103 = arith.index_cast %arg17 : i32 to index
      %104 = memref.load %arg1[%103] : memref<10xi32, #tpu.memory_space<smem>>
      %105 = arith.index_cast %104 : i32 to index
      %c0_54 = arith.constant 0 : index
      %106 = vector.load %arg0[%105, %c0_54] : memref<12x512xf32, #tpu.memory_space<vmem>>, vector<1x512xf32>
      %107 = arith.index_cast %arg17 : i32 to index
      %c0_55 = arith.constant 0 : index
      %108 = vector.load %arg16[%107, %c0_55] : memref<10x512xf32, #tpu.memory_space<vmem>>, vector<1x512xf32>
      tpu.vector_store %arg16[%107, %c0_55], %106 {strides = array<i32>} : memref<10x512xf32, #tpu.memory_space<vmem>>, vector<1x512xf32>,
    }
    %c10_i32_0 = arith.constant 10 : i32
    %c0 = arith.constant 0 : index
    %c0_1 = arith.constant 0 : index
    %1 = vector.load %arg16[%c0, %c0_1] : memref<10x512xf32, #tpu.memory_space<vmem>>, vector<10x512xf32>
    %c0_2 = arith.constant 0 : index
    %c0_3 = arith.constant 0 : index
    %2 = vector.load %arg2[%c0_2, %c0_3] : memref<10x1xf32, #tpu.memory_space<vmem>>, vector<10x1xf32>
    %3 = vector.broadcast %2 : vector<10x1xf32> to vector<10x512xf32>
    %4 = arith.mulf %1, %3 : vector<10x512xf32>
    %5 = vector.extract_strided_slice %4 {offsets = [0, 0], sizes = [5, 512], strides = [1, 1]} : vector<10x512xf32> to vector<5x512xf32>
    %cst = arith.constant dense<0xFF800000> : vector<512xf32>
    %6 = vector.multi_reduction <maximumf>, %5, %cst [0] : vector<5x512xf32> to vector<512xf32>
    %7 = vector.shape_cast %6 : vector<512xf32> to vector<1x512xf32>
    %cst_4 = arith.constant dense<0.000000e+00> : vector<512xf32>
    %8 = vector.multi_reduction <add>, %5, %cst_4 [0] : vector<5x512xf32> to vector<512xf32>
    %9 = vector.shape_cast %8 : vector<512xf32> to vector<1x512xf32>
    %cst_5 = arith.constant 2.000000e-01 : f32
    %10 = vector.broadcast %cst_5 : f32 to vector<1x512xf32>
    %11 = arith.mulf %9, %10 : vector<1x512xf32>
    %12 = vector.extract_strided_slice %4 {offsets = [5, 0], sizes = [5, 512], strides = [1, 1]} : vector<10x512xf32> to vector<5x512xf32>
    %cst_6 = arith.constant dense<0xFF800000> : vector<512xf32>
    %13 = vector.multi_reduction <maximumf>, %12, %cst_6 [0] : vector<5x512xf32> to vector<512xf32>
    %14 = vector.shape_cast %13 : vector<512xf32> to vector<1x512xf32>
    %cst_7 = arith.constant dense<0.000000e+00> : vector<512xf32>
    %15 = vector.multi_reduction <add>, %12, %cst_7 [0] : vector<5x512xf32> to vector<512xf32>
    %16 = vector.shape_cast %15 : vector<512xf32> to vector<1x512xf32>
    %cst_8 = arith.constant 2.000000e-01 : f32
    %17 = vector.broadcast %cst_8 : f32 to vector<1x512xf32>
    %18 = arith.mulf %16, %17 : vector<1x512xf32>
    %19 = tpu.concatenate %7, %14 in 0 : vector<1x512xf32>, vector<1x512xf32> -> vector<2x512xf32>
    %20 = tpu.concatenate %11, %18 in 0 : vector<1x512xf32>, vector<1x512xf32> -> vector<2x512xf32>
    %21 = tpu.concatenate %19, %20 in 1 : vector<2x512xf32>, vector<2x512xf32> -> vector<2x1024xf32>
    %c0_9 = arith.constant 0 : index
    %c0_10 = arith.constant 0 : index
    %22 = vector.load %arg15[%c0_9, %c0_10] : memref<2x1024xf32, #tpu.memory_space<vmem>>, vector<2x1024xf32>
    tpu.vector_store %arg15[%c0_9, %c0_10], %21 {strides = array<i32>} : memref<2x1024xf32, #tpu.memory_space<vmem>>, vector<2x1024xf32>,
    %23 = arith.truncf %4 : vector<10x512xf32> to vector<10x512xbf16>
    %c0_11 = arith.constant 0 : index
    %c0_12 = arith.constant 0 : index
    %24 = vector.load %arg8[%c0_11, %c0_12] : memref<512x512xbf16, #tpu.memory_space<vmem>>, vector<512x512xbf16>
    %cst_13 = arith.constant dense<0.000000e+00> : vector<10x512xf32>
    %25 = tpu.matmul %23, %24, %cst_13 {dimension_numbers = #tpu.dot_dimension_numbers<[1], [0], [0], [1], [0, 0, 1, 1], [], []>} : vector<10x512xbf16>, vector<512x512xbf16>, vector<10x512xf32> -> vector<10x512xf32>
    %26 = arith.truncf %25 : vector<10x512xf32> to vector<10x512xbf16>
    %c0_14 = arith.constant 0 : index
    %c0_15 = arith.constant 0 : index
    %27 = vector.load %arg9[%c0_14, %c0_15] : memref<512x4xbf16, #tpu.memory_space<vmem>>, vector<512x4xbf16>
    %cst_16 = arith.constant dense<0.000000e+00> : vector<10x4xf32>
    %28 = tpu.matmul %26, %27, %cst_16 {dimension_numbers = #tpu.dot_dimension_numbers<[1], [0], [0], [1], [0, 0, 1, 1], [], []>} : vector<10x512xbf16>, vector<512x4xbf16>, vector<10x4xf32> -> vector<10x4xf32>
    %c0_17 = arith.constant 0 : index
    %c0_18 = arith.constant 0 : index
    %29 = vector.load %arg10[%c0_17, %c0_18] : memref<512x4xbf16, #tpu.memory_space<vmem>>, vector<512x4xbf16>
    %cst_19 = arith.constant dense<0.000000e+00> : vector<10x4xf32>
    %30 = tpu.matmul %26, %29, %cst_19 {dimension_numbers = #tpu.dot_dimension_numbers<[1], [0], [0], [1], [0, 0, 1, 1], [], []>} : vector<10x512xbf16>, vector<512x4xbf16>, vector<10x4xf32> -> vector<10x4xf32>
    %c0_20 = arith.constant 0 : index
    %c0_21 = arith.constant 0 : index
    %31 = vector.load %arg3[%c0_20, %c0_21] : memref<34x1xi32, #tpu.memory_space<vmem>>, vector<34x1xi32>
    %32 = tpu.iota {dimensions = array<i32: 1>} : vector<34x10xi32>
    %33 = vector.broadcast %31 : vector<34x1xi32> to vector<34x10xi32>
    %34 = arith.cmpi eq, %33, %32 : vector<34x10xi32>
    %35 = arith.extui %34 : vector<34x10xi1> to vector<34x10xi32>
    %36 = arith.sitofp %35 : vector<34x10xi32> to vector<34x10xf32>
    %37 = arith.truncf %36 : vector<34x10xf32> to vector<34x10xbf16>
    %c0_22 = arith.constant 0 : index
    %c0_23 = arith.constant 0 : index
    %38 = vector.load %arg4[%c0_22, %c0_23] : memref<34x1xi32, #tpu.memory_space<vmem>>, vector<34x1xi32>
    %39 = tpu.iota {dimensions = array<i32: 1>} : vector<34x10xi32>
    %40 = vector.broadcast %38 : vector<34x1xi32> to vector<34x10xi32>
    %41 = arith.cmpi eq, %40, %39 : vector<34x10xi32>
    %42 = arith.extui %41 : vector<34x10xi1> to vector<34x10xi32>
    %43 = arith.sitofp %42 : vector<34x10xi32> to vector<34x10xf32>
    %44 = arith.truncf %43 : vector<34x10xf32> to vector<34x10xbf16>
    %45 = tpu.iota {dimensions = array<i32: 0>} : vector<10x34xi32>
    %c0_24 = arith.constant 0 : index
    %c0_25 = arith.constant 0 : index
    %46 = vector.load %arg5[%c0_24, %c0_25] : memref<1x34xi32, #tpu.memory_space<vmem>>, vector<1x34xi32>
    %47 = vector.broadcast %46 : vector<1x34xi32> to vector<10x34xi32>
    %48 = arith.cmpi eq, %45, %47 : vector<10x34xi32>
    %49 = arith.extui %48 : vector<10x34xi1> to vector<10x34xi32>
    %50 = arith.sitofp %49 : vector<10x34xi32> to vector<10x34xf32>
    %51 = arith.truncf %50 : vector<10x34xf32> to vector<10x34xbf16>
    %c0_26 = arith.constant 0 : index
    %c0_27 = arith.constant 0 : index
    %52 = vector.load %arg6[%c0_26, %c0_27] : memref<34x1xf32, #tpu.memory_space<vmem>>, vector<34x1xf32>
    %cst_28 = arith.constant 0.000000e+00 : f32
    %53 = vector.broadcast %cst_28 : f32 to vector<34x1xf32>
    %54 = arith.cmpf ogt, %52, %53 : vector<34x1xf32>
    %55 = arith.truncf %28 : vector<10x4xf32> to vector<10x4xbf16>
    %cst_29 = arith.constant dense<0.000000e+00> : vector<34x4xf32>
    %56 = tpu.matmul %37, %55, %cst_29 {dimension_numbers = #tpu.dot_dimension_numbers<[1], [0], [0], [1], [0, 0, 1, 1], [], []>} : vector<34x10xbf16>, vector<10x4xbf16>, vector<34x4xf32> -> vector<34x4xf32>
    %57 = arith.truncf %30 : vector<10x4xf32> to vector<10x4xbf16>
    %cst_30 = arith.constant dense<0.000000e+00> : vector<34x4xf32>
    %58 = tpu.matmul %44, %57, %cst_30 {dimension_numbers = #tpu.dot_dimension_numbers<[1], [0], [0], [1], [0, 0, 1, 1], [], []>} : vector<34x10xbf16>, vector<10x4xbf16>, vector<34x4xf32> -> vector<34x4xf32>
    %59 = arith.addf %56, %58 : vector<34x4xf32>
    %cst_31 = arith.constant 0.000000e+00 : f32
    %60 = vector.broadcast %cst_31 : f32 to vector<34x4xf32>
    %61 = arith.cmpf ogt, %59, %60 : vector<34x4xf32>
    %cst_32 = arith.constant 2.000000e-01 : f32
    %62 = vector.broadcast %cst_32 : f32 to vector<34x4xf32>
    %63 = arith.mulf %62, %59 : vector<34x4xf32>
    %64 = arith.select %61, %59, %63 : vector<34x4xi1>, vector<34x4xf32>
    %cst_33 = arith.constant -1.000000e+30 : f32
    %65 = vector.shape_cast %54 : vector<34x1xi1> to vector<34x1xi1>
    %66 = vector.broadcast %65 : vector<34x1xi1> to vector<34x4xi1>
    %67 = vector.broadcast %cst_33 : f32 to vector<34x4xf32>
    %68 = arith.select %66, %64, %67 : vector<34x4xi1>, vector<34x4xf32>
    %cst_34 = arith.constant dense<0xFF800000> : vector<4xf32>
    %69 = vector.multi_reduction <maximumf>, %68, %cst_34 [0] : vector<34x4xf32> to vector<4xf32>
    %70 = vector.shape_cast %69 : vector<4xf32> to vector<1x4xf32>
    %71 = vector.broadcast %70 : vector<1x4xf32> to vector<34x4xf32>
    %72 = arith.subf %64, %71 : vector<34x4xf32>
    %cst_35 = arith.constant -1.000000e+30 : f32
    %73 = vector.shape_cast %54 : vector<34x1xi1> to vector<34x1xi1>
    %74 = vector.broadcast %73 : vector<34x1xi1> to vector<34x4xi1>
    %75 = vector.broadcast %cst_35 : f32 to vector<34x4xf32>
    %76 = arith.select %74, %72, %75 : vector<34x4xi1>, vector<34x4xf32>
    %77 = math.exp %76 : vector<34x4xf32>
    %78 = arith.truncf %77 : vector<34x4xf32> to vector<34x4xbf16>
    %cst_36 = arith.constant dense<0.000000e+00> : vector<10x4xf32>
    %79 = tpu.matmul %51, %78, %cst_36 {dimension_numbers = #tpu.dot_dimension_numbers<[1], [0], [0], [1], [0, 0, 1, 1], [], []>} : vector<10x34xbf16>, vector<34x4xbf16>, vector<10x4xf32> -> vector<10x4xf32>
    %80 = arith.truncf %79 : vector<10x4xf32> to vector<10x4xbf16>
    %cst_37 = arith.constant dense<0.000000e+00> : vector<34x4xf32>
    %81 = tpu.matmul %44, %80, %cst_37 {dimension_numbers = #tpu.dot_dimension_numbers<[1], [0], [0], [1], [0, 0, 1, 1], [], []>} : vector<34x10xbf16>, vector<10x4xbf16>, vector<34x4xf32> -> vector<34x4xf32>
    %cst_38 = arith.constant 1.000000e-16 : f32
    %82 = vector.broadcast %cst_38 : f32 to vector<34x4xf32>
    %83 = arith.addf %81, %82 : vector<34x4xf32>
    %84 = tpu.reciprocal %83 {approx = true} : vector<34x4xf32> -> vector<34x4xf32>
    %85 = arith.mulf %77, %84 : vector<34x4xf32>
    %86 = arith.truncf %85 : vector<34x4xf32> to vector<34x4xbf16>
    %c0_39 = arith.constant 0 : index
    %c0_40 = arith.constant 0 : index
    %87 = vector.load %arg7[%c0_39, %c0_40] : memref<4x512xbf16, #tpu.memory_space<vmem>>, vector<4x512xbf16>
    %cst_41 = arith.constant dense<0.000000e+00> : vector<34x512xf32>
    %88 = tpu.matmul %86, %87, %cst_41 {dimension_numbers = #tpu.dot_dimension_numbers<[1], [0], [0], [1], [0, 0, 1, 1], [], []>} : vector<34x4xbf16>, vector<4x512xbf16>, vector<34x512xf32> -> vector<34x512xf32>
    %cst_42 = arith.constant dense<0.000000e+00> : vector<34x512xf32>
    %89 = tpu.matmul %37, %26, %cst_42 {dimension_numbers = #tpu.dot_dimension_numbers<[1], [0], [0], [1], [0, 0, 1, 1], [], []>} : vector<34x10xbf16>, vector<10x512xbf16>, vector<34x512xf32> -> vector<34x512xf32>
    %90 = arith.mulf %89, %88 : vector<34x512xf32>
    %91 = arith.truncf %90 : vector<34x512xf32> to vector<34x512xbf16>
    %cst_43 = arith.constant dense<0.000000e+00> : vector<10x512xf32>
    %92 = tpu.matmul %51, %91, %cst_43 {dimension_numbers = #tpu.dot_dimension_numbers<[1], [0], [0], [1], [0, 0, 1, 1], [], []>} : vector<10x34xbf16>, vector<34x512xbf16>, vector<10x512xf32> -> vector<10x512xf32>
    %c0_44 = arith.constant 0 : index
    %c0_45 = arith.constant 0 : index
    %93 = vector.load %arg11[%c0_44, %c0_45] : memref<1x512xf32, #tpu.memory_space<vmem>>, vector<1x512xf32>
    %94 = vector.broadcast %93 : vector<1x512xf32> to vector<10x512xf32>
    %95 = arith.addf %92, %94 : vector<10x512xf32>
    %cst_46 = arith.constant 0.000000e+00 : f32
    %96 = vector.broadcast %cst_46 : f32 to vector<10x512xf32>
    %97 = arith.maximumf %95, %96 : vector<10x512xf32>
    %c0_47 = arith.constant 0 : index
    %c0_48 = arith.constant 0 : index
    %98 = vector.load %arg13[%c0_47, %c0_48] : memref<10x512xf32, #tpu.memory_space<vmem>>, vector<10x512xf32>
    tpu.vector_store %arg13[%c0_47, %c0_48], %97 {strides = array<i32>} : memref<10x512xf32, #tpu.memory_space<vmem>>, vector<10x512xf32>,
    %c0_49 = arith.constant 0 : index
    %c0_50 = arith.constant 0 : index
    %99 = vector.load %arg12[%c0_49, %c0_50] : memref<512x1xf32, #tpu.memory_space<vmem>>, vector<512x1xf32>
    %cst_51 = arith.constant dense<0.000000e+00> : vector<10x1xf32>
    %100 = tpu.matmul %97, %99, %cst_51 {dimension_numbers = #tpu.dot_dimension_numbers<[1], [0], [0], [1], [0, 0, 1, 1], [], []>} : vector<10x512xf32>, vector<512x1xf32>, vector<10x1xf32> -> vector<10x1xf32>
    %101 = math.tanh %100 : vector<10x1xf32>
    %c0_52 = arith.constant 0 : index
    %c0_53 = arith.constant 0 : index
    %102 = vector.load %arg14[%c0_52, %c0_53] : memref<10x1xf32, #tpu.memory_space<vmem>>, vector<10x1xf32>
    tpu.vector_store %arg14[%c0_52, %c0_53], %101 {strides = array<i32>} : memref<10x1xf32, #tpu.memory_space<vmem>>, vector<10x1xf32>,
    return
  }
}

module attributes {stable_mosaic.version = 11 : i64} {
  func.func @_head_kernel(%arg0: memref<10x512xf32, #tpu.memory_space<vmem>>, %arg1: memref<8xi32, #tpu.memory_space<smem>>, %arg2: memref<8x1xf32, #tpu.memory_space<vmem>>, %arg3: memref<2x1024xf32, #tpu.memory_space<vmem>>, %arg4: memref<1024x128xf32, #tpu.memory_space<vmem>>, %arg5: memref<1x128xf32, #tpu.memory_space<vmem>>, %arg6: memref<128x64xf32, #tpu.memory_space<vmem>>, %arg7: memref<1x64xf32, #tpu.memory_space<vmem>>, %arg8: memref<64x8xf32, #tpu.memory_space<vmem>>, %arg9: memref<1x8xf32, #tpu.memory_space<vmem>>, %arg10: memref<2x8xf32, #tpu.memory_space<vmem>>, %arg11: memref<8x512xf32, #tpu.memory_space<vmem>>) attributes {dimension_semantics = [], scalar_prefetch = 0 : i64, scratch_operands = 1 : i64, tpu.core_type = #tpu.core_type<tc>} {
    %c0_i32 = arith.constant 0 : i32
    %c8_i32 = arith.constant 8 : i32
    %0 = arith.addi %c0_i32, %c8_i32 : i32
    %c1_i32 = arith.constant 1 : i32
    scf.for %arg12 = %c0_i32 to %0 step %c1_i32  : i32 {
      %54 = arith.index_cast %arg12 : i32 to index
      %55 = memref.load %arg1[%54] : memref<8xi32, #tpu.memory_space<smem>>
      %56 = arith.index_cast %55 : i32 to index
      %c0_32 = arith.constant 0 : index
      %57 = vector.load %arg0[%56, %c0_32] : memref<10x512xf32, #tpu.memory_space<vmem>>, vector<1x512xf32>
      %58 = arith.index_cast %arg12 : i32 to index
      %c0_33 = arith.constant 0 : index
      %59 = vector.load %arg11[%58, %c0_33] : memref<8x512xf32, #tpu.memory_space<vmem>>, vector<1x512xf32>
      tpu.vector_store %arg11[%58, %c0_33], %57 {strides = array<i32>} : memref<8x512xf32, #tpu.memory_space<vmem>>, vector<1x512xf32>,
    }
    %c8_i32_0 = arith.constant 8 : i32
    %c0 = arith.constant 0 : index
    %c0_1 = arith.constant 0 : index
    %1 = vector.load %arg11[%c0, %c0_1] : memref<8x512xf32, #tpu.memory_space<vmem>>, vector<8x512xf32>
    %c0_2 = arith.constant 0 : index
    %c0_3 = arith.constant 0 : index
    %2 = vector.load %arg2[%c0_2, %c0_3] : memref<8x1xf32, #tpu.memory_space<vmem>>, vector<8x1xf32>
    %3 = vector.broadcast %2 : vector<8x1xf32> to vector<8x512xf32>
    %4 = arith.mulf %1, %3 : vector<8x512xf32>
    %5 = vector.extract_strided_slice %4 {offsets = [0, 0], sizes = [4, 512], strides = [1, 1]} : vector<8x512xf32> to vector<4x512xf32>
    %cst = arith.constant dense<0xFF800000> : vector<512xf32>
    %6 = vector.multi_reduction <maximumf>, %5, %cst [0] : vector<4x512xf32> to vector<512xf32>
    %7 = vector.shape_cast %6 : vector<512xf32> to vector<1x512xf32>
    %cst_4 = arith.constant dense<0.000000e+00> : vector<512xf32>
    %8 = vector.multi_reduction <add>, %5, %cst_4 [0] : vector<4x512xf32> to vector<512xf32>
    %9 = vector.shape_cast %8 : vector<512xf32> to vector<1x512xf32>
    %cst_5 = arith.constant 2.500000e-01 : f32
    %10 = vector.broadcast %cst_5 : f32 to vector<1x512xf32>
    %11 = arith.mulf %9, %10 : vector<1x512xf32>
    %12 = vector.extract_strided_slice %4 {offsets = [4, 0], sizes = [4, 512], strides = [1, 1]} : vector<8x512xf32> to vector<4x512xf32>
    %cst_6 = arith.constant dense<0xFF800000> : vector<512xf32>
    %13 = vector.multi_reduction <maximumf>, %12, %cst_6 [0] : vector<4x512xf32> to vector<512xf32>
    %14 = vector.shape_cast %13 : vector<512xf32> to vector<1x512xf32>
    %cst_7 = arith.constant dense<0.000000e+00> : vector<512xf32>
    %15 = vector.multi_reduction <add>, %12, %cst_7 [0] : vector<4x512xf32> to vector<512xf32>
    %16 = vector.shape_cast %15 : vector<512xf32> to vector<1x512xf32>
    %cst_8 = arith.constant 2.500000e-01 : f32
    %17 = vector.broadcast %cst_8 : f32 to vector<1x512xf32>
    %18 = arith.mulf %16, %17 : vector<1x512xf32>
    %19 = tpu.concatenate %7, %14 in 0 : vector<1x512xf32>, vector<1x512xf32> -> vector<2x512xf32>
    %20 = tpu.concatenate %11, %18 in 0 : vector<1x512xf32>, vector<1x512xf32> -> vector<2x512xf32>
    %21 = tpu.concatenate %19, %20 in 1 : vector<2x512xf32>, vector<2x512xf32> -> vector<2x1024xf32>
    %c0_9 = arith.constant 0 : index
    %c0_10 = arith.constant 0 : index
    %22 = vector.load %arg3[%c0_9, %c0_10] : memref<2x1024xf32, #tpu.memory_space<vmem>>, vector<2x1024xf32>
    %23 = arith.addf %22, %21 : vector<2x1024xf32>
    %c0_11 = arith.constant 0 : index
    %c0_12 = arith.constant 0 : index
    %24 = vector.load %arg4[%c0_11, %c0_12] : memref<1024x128xf32, #tpu.memory_space<vmem>>, vector<1024x128xf32>
    %cst_13 = arith.constant dense<0.000000e+00> : vector<2x128xf32>
    %25 = tpu.matmul %23, %24, %cst_13 {dimension_numbers = #tpu.dot_dimension_numbers<[1], [0], [0], [1], [0, 0, 1, 1], [], []>} : vector<2x1024xf32>, vector<1024x128xf32>, vector<2x128xf32> -> vector<2x128xf32>
    %c0_14 = arith.constant 0 : index
    %c0_15 = arith.constant 0 : index
    %26 = vector.load %arg5[%c0_14, %c0_15] : memref<1x128xf32, #tpu.memory_space<vmem>>, vector<1x128xf32>
    %27 = vector.broadcast %26 : vector<1x128xf32> to vector<2x128xf32>
    %28 = arith.addf %25, %27 : vector<2x128xf32>
    %cst_16 = arith.constant 0.000000e+00 : f32
    %29 = vector.broadcast %cst_16 : f32 to vector<2x128xf32>
    %30 = arith.maximumf %28, %29 : vector<2x128xf32>
    %c0_17 = arith.constant 0 : index
    %c0_18 = arith.constant 0 : index
    %31 = vector.load %arg6[%c0_17, %c0_18] : memref<128x64xf32, #tpu.memory_space<vmem>>, vector<128x64xf32>
    %cst_19 = arith.constant dense<0.000000e+00> : vector<2x64xf32>
    %32 = tpu.matmul %30, %31, %cst_19 {dimension_numbers = #tpu.dot_dimension_numbers<[1], [0], [0], [1], [0, 0, 1, 1], [], []>} : vector<2x128xf32>, vector<128x64xf32>, vector<2x64xf32> -> vector<2x64xf32>
    %c0_20 = arith.constant 0 : index
    %c0_21 = arith.constant 0 : index
    %33 = vector.load %arg7[%c0_20, %c0_21] : memref<1x64xf32, #tpu.memory_space<vmem>>, vector<1x64xf32>
    %34 = vector.broadcast %33 : vector<1x64xf32> to vector<2x64xf32>
    %35 = arith.addf %32, %34 : vector<2x64xf32>
    %cst_22 = arith.constant 0.000000e+00 : f32
    %36 = vector.broadcast %cst_22 : f32 to vector<2x64xf32>
    %37 = arith.maximumf %35, %36 : vector<2x64xf32>
    %c0_23 = arith.constant 0 : index
    %c0_24 = arith.constant 0 : index
    %38 = vector.load %arg8[%c0_23, %c0_24] : memref<64x8xf32, #tpu.memory_space<vmem>>, vector<64x8xf32>
    %cst_25 = arith.constant dense<0.000000e+00> : vector<2x8xf32>
    %39 = tpu.matmul %37, %38, %cst_25 {dimension_numbers = #tpu.dot_dimension_numbers<[1], [0], [0], [1], [0, 0, 1, 1], [], []>} : vector<2x64xf32>, vector<64x8xf32>, vector<2x8xf32> -> vector<2x8xf32>
    %c0_26 = arith.constant 0 : index
    %c0_27 = arith.constant 0 : index
    %40 = vector.load %arg9[%c0_26, %c0_27] : memref<1x8xf32, #tpu.memory_space<vmem>>, vector<1x8xf32>
    %41 = vector.broadcast %40 : vector<1x8xf32> to vector<2x8xf32>
    %42 = arith.addf %39, %41 : vector<2x8xf32>
    %cst_28 = arith.constant dense<0xFF800000> : vector<2xf32>
    %43 = vector.multi_reduction <maximumf>, %42, %cst_28 [1] : vector<2x8xf32> to vector<2xf32>
    %44 = vector.shape_cast %43 : vector<2xf32> to vector<2x1xf32>
    %45 = vector.broadcast %44 : vector<2x1xf32> to vector<2x8xf32>
    %46 = arith.subf %42, %45 : vector<2x8xf32>
    %47 = math.exp %46 : vector<2x8xf32>
    %cst_29 = arith.constant dense<0.000000e+00> : vector<2xf32>
    %48 = vector.multi_reduction <add>, %47, %cst_29 [1] : vector<2x8xf32> to vector<2xf32>
    %49 = vector.shape_cast %48 : vector<2xf32> to vector<2x1xf32>
    %50 = math.log %49 : vector<2x1xf32>
    %51 = vector.broadcast %50 : vector<2x1xf32> to vector<2x8xf32>
    %52 = arith.subf %46, %51 : vector<2x8xf32>
    %c0_30 = arith.constant 0 : index
    %c0_31 = arith.constant 0 : index
    %53 = vector.load %arg10[%c0_30, %c0_31] : memref<2x8xf32, #tpu.memory_space<vmem>>, vector<2x8xf32>
    tpu.vector_store %arg10[%c0_30, %c0_31], %52 {strides = array<i32>} : memref<2x8xf32, #tpu.memory_space<vmem>>, vector<2x8xf32>,
    return
  }
}

</mosaic_0001>

<llo_original>
// kernel: forward.3
$region0: #{forward.3}
  #allocation0 [shape = 'u32[]', space=smem, size = 0x4, offset = 0x4, fixed_abs, tag = 'smem constant byte address 0x4 - core index']
  #allocation1 [shape = 'u32[144,128]{1,0:T(1,128)}', space=vmem, size = 0x12000, scoped, tag = 'internal scratch']
  %s0 = inlined_call_operand.vmem [shape: f32[24,128], index: 0, kind: input, shape index: {}]
  %s1 = inlined_call_operand.vmem [shape: f32[12,32], index: 1, kind: input, shape index: {}]
  %s2 = inlined_call_operand.vmem [shape: s32[24,1], index: 2, kind: input, shape index: {}]
  %s3 = inlined_call_operand.vmem [shape: s32[1,24], index: 3, kind: input, shape index: {}]
  %s4 = inlined_call_operand.vmem [shape: bf16[128,64], index: 4, kind: input, shape index: {}]
  %s5 = inlined_call_operand.vmem [shape: f32[1,64], index: 5, kind: input, shape index: {}]
  %s6 = inlined_call_operand.vmem [shape: bf16[64,32], index: 6, kind: input, shape index: {}]
  %s7 = inlined_call_operand.vmem [shape: f32[1,32], index: 7, kind: input, shape index: {}]
  %s8 = inlined_call_operand.vmem [shape: bf16[32,128], index: 8, kind: input, shape index: {}]
  %s9 = inlined_call_operand.vmem [shape: f32[1,128], index: 9, kind: input, shape index: {}]
  %s10 = inlined_call_operand.vmem [shape: bf16[128,512], index: 10, kind: input, shape index: {}]
  %s11 = inlined_call_operand.vmem [shape: f32[1,512], index: 11, kind: input, shape index: {}]
  %s12 = inlined_call_operand.vmem [shape: f32[512,1], index: 12, kind: input, shape index: {}]
  %s13 = inlined_call_operand.vmem [shape: f32[12,512], index: 13, kind: output, shape index: {0}]
  %s14 = inlined_call_operand.vmem [shape: f32[12,1], index: 14, kind: output, shape index: {1}]
  %15 = xla_tuple %s13, %s14
  %s16 = sld [smem:[#allocation0]]
  $region70: #{forward.3} parent=0
    _
  %s18 = ssub.s32 1, %s16
  %s19 = scalar_select 0, %s18, %s16
  // Predicated region
  $region2: #{forward.3} parent=0 // pred_check
    _
  $region3: #{forward.3} parent=0 // pred_check_branch
    %21 = sbr.rel (0) target = $region5
  $region4: #{forward.3} parent=0 // pred_region
    _
  $region5: #{forward.3} parent=0 // pred_fallthru
    _
  // Predicated region
  $region6: #{forward.3} parent=0 // pred_check
    _
  $region7: #{forward.3} parent=0 // pred_check_branch
    %23 = sbr.rel (0) target = $region9
  $region8: #{forward.3} parent=0 // pred_region
    _
  $region9: #{forward.3} parent=0 // pred_fallthru
    _
  // Predicated region
  $region10: #{forward.3} parent=0 // pred_check
    _
  $region11: #{forward.3} parent=0 // pred_check_branch
    %25 = sbr.rel (0) target = $region13
  $region12: #{forward.3} parent=0 // pred_region
    _
  $region13: #{forward.3} parent=0 // pred_fallthru
    _
  // Predicated region
  $region14: #{forward.3} parent=0 // pred_check
    _
  $region15: #{forward.3} parent=0 // pred_check_branch
    %27 = sbr.rel (0) target = $region17
  $region16: #{forward.3} parent=0 // pred_region
    _
  $region17: #{forward.3} parent=0 // pred_fallthru
    _
  // Predicated region
  $region18: #{forward.3} parent=0 // pred_check
    _
  $region19: #{forward.3} parent=0 // pred_check_branch
    %29 = sbr.rel (0) target = $region21
  $region20: #{forward.3} parent=0 // pred_region
    _
  $region21: #{forward.3} parent=0 // pred_fallthru
    _
  // Predicated region
  $region22: #{forward.3} parent=0 // pred_check
    _
  $region23: #{forward.3} parent=0 // pred_check_branch
    %31 = sbr.rel (0) target = $region25
  $region24: #{forward.3} parent=0 // pred_region
    _
  $region25: #{forward.3} parent=0 // pred_fallthru
    _
  // Predicated region
  $region26: #{forward.3} parent=0 // pred_check
    _
  $region27: #{forward.3} parent=0 // pred_check_branch
    %33 = sbr.rel (0) target = $region29
  $region28: #{forward.3} parent=0 // pred_region
    _
  $region29: #{forward.3} parent=0 // pred_fallthru
    _
  // Predicated region
  $region30: #{forward.3} parent=0 // pred_check
    _
  $region31: #{forward.3} parent=0 // pred_check_branch
    %35 = sbr.rel (0) target = $region33
  $region32: #{forward.3} parent=0 // pred_region
    _
  $region33: #{forward.3} parent=0 // pred_fallthru
    _
  // Predicated region
  $region34: #{forward.3} parent=0 // pred_check
    _
  $region35: #{forward.3} parent=0 // pred_check_branch
    %37 = sbr.rel (0) target = $region37
  $region36: #{forward.3} parent=0 // pred_region
    _
  $region37: #{forward.3} parent=0 // pred_fallthru
    _
  // Predicated region
  $region38: #{forward.3} parent=0 // pred_check
    _
  $region39: #{forward.3} parent=0 // pred_check_branch
    %39 = sbr.rel (0) target = $region41
  $region40: #{forward.3} parent=0 // pred_region
    _
  $region41: #{forward.3} parent=0 // pred_fallthru
    _
  // Predicated region
  $region42: #{forward.3} parent=0 // pred_check
    _
  $region43: #{forward.3} parent=0 // pred_check_branch
    %41 = sbr.rel (0) target = $region45
  $region44: #{forward.3} parent=0 // pred_region
    _
  $region45: #{forward.3} parent=0 // pred_fallthru
    _
  // Predicated region
  $region46: #{forward.3} parent=0 // pred_check
    _
  $region47: #{forward.3} parent=0 // pred_check_branch
    %43 = sbr.rel (0) target = $region49
  $region48: #{forward.3} parent=0 // pred_region
    _
  $region49: #{forward.3} parent=0 // pred_fallthru
    _
  // Predicated region
  $region50: #{forward.3} parent=0 // pred_check
    _
  $region51: #{forward.3} parent=0 // pred_check_branch
    %45 = sbr.rel (0) target = $region53
  $region52: #{forward.3} parent=0 // pred_region
    _
  $region53: #{forward.3} parent=0 // pred_fallthru
    _
  %v47 = vld [vmem:[%s0] sm:$0xff]
  %v48 = vld [vmem:[%s0 + $0x8] sm:$0xff]
  %v49 = vld [vmem:[%s0 + $0x10] sm:$0xff]
  %v50 = vpack.c.bf16 %v48, %v47
  %v51 = vpack.c.bf16 %v49, %v49
  %v52 = vld [vmem:[%s4] sm:$0xf]
  %v53 = vld [vmem:[%s4 + $0x4] sm:$0xf]
  %v54 = vld [vmem:[%s4 + $0x8] sm:$0xf]
  %v55 = vld [vmem:[%s4 + $0xc] sm:$0xf]
  %v56 = vld [vmem:[%s4 + $0x10] sm:$0xf]
  %v57 = vld [vmem:[%s4 + $0x14] sm:$0xf]
  %v58 = vld [vmem:[%s4 + $0x18] sm:$0xf]
  %v59 = vld [vmem:[%s4 + $0x1c] sm:$0xf]
  %v60 = vld [vmem:[%s4 + $0x20] sm:$0xf]
  %v61 = vld [vmem:[%s4 + $0x24] sm:$0xf]
  %v62 = vld [vmem:[%s4 + $0x28] sm:$0xf]
  %v63 = vld [vmem:[%s4 + $0x2c] sm:$0xf]
  %v64 = vld [vmem:[%s4 + $0x30] sm:$0xf]
  %v65 = vld [vmem:[%s4 + $0x34] sm:$0xf]
  %v66 = vld [vmem:[%s4 + $0x38] sm:$0xf]
  %v67 = vld [vmem:[%s4 + $0x3c] sm:$0xf]
  %v68 = vld [vmem:[%s5] sm:$0x1]
  %v70 = vlaneseq
  %v71 = vshrl.u32 %v70, 7
  %v72 = vsub.s32 0, %v71
  %v73 = vrot.slane %v68, %v72
  %v91 = vunpack.c.l.b16 %v52
  %v92 = vunpack.c.l.b16 %v53
  %v93 = vunpack.c.l.b16 %v54
  %v94 = vunpack.c.l.b16 %v55
  %v95 = vunpack.c.l.b16 %v56
  %v96 = vunpack.c.l.b16 %v57
  %v97 = vunpack.c.l.b16 %v58
  %v98 = vunpack.c.l.b16 %v59
  %v99 = vunpack.c.l.b16 %v60
  %v100 = vunpack.c.l.b16 %v61
  %v101 = vunpack.c.l.b16 %v62
  %v102 = vunpack.c.l.b16 %v63
  %v103 = vunpack.c.l.b16 %v64
  %v104 = vunpack.c.l.b16 %v65
  %v105 = vunpack.c.l.b16 %v66
  %v106 = vunpack.c.l.b16 %v67
  %v107 = vpack.c.b16 %v92, %v91
  %v108 = vpack.c.b16 %v94, %v93
  %v109 = vpack.c.b16 %v96, %v95
  %v110 = vpack.c.b16 %v98, %v97
  %v111 = vpack.c.b16 %v100, %v99
  %v112 = vpack.c.b16 %v102, %v101
  %v113 = vpack.c.b16 %v104, %v103
  %v114 = vpack.c.b16 %v106, %v105
  %123 = vmatprep.subr.bf16.mxu0 0
  %124 = vmatpush1.bf16.msra.mxu0 %v107
  %125 = vmatprep.subr.bf16.mxu0 0
  %126 = vmatpush1.bf16.msra.mxu0 %v108
  %127 = vmatprep.subr.bf16.mxu0 0
  %128 = vmatpush1.bf16.msra.mxu0 %v109
  %129 = vmatprep.subr.bf16.mxu0 0
  %130 = vmatpush1.bf16.msra.mxu0 %v110
  %131 = vmatprep.subr.bf16.mxu0 0
  %132 = vmatpush1.bf16.msra.mxu0 %v111
  %133 = vmatprep.subr.bf16.mxu0 0
  %134 = vmatpush1.bf16.msra.mxu0 %v112
  %135 = vmatprep.subr.bf16.mxu0 0
  %136 = vmatpush1.bf16.msra.mxu0 %v113
  %137 = vmatprep.subr.bf16.mxu0 0
  %138 = vmatpush1.bf16.msra.mxu0 %v114
  %139 = vmatprep.subr.bf16.mxu0 0
  %140 = vmatpush1.bf16.msra.mxu0 0
  %141 = vmatprep.subr.bf16.mxu0 0
  %142 = vmatpush1.bf16.msra.mxu0 0
  %143 = vmatprep.subr.bf16.mxu0 0
  %144 = vmatpush1.bf16.msra.mxu0 0
  %145 = vmatprep.subr.bf16.mxu0 0
  %146 = vmatpush1.bf16.msra.mxu0 0
  %147 = vmatprep.subr.bf16.mxu0 0
  %148 = vmatpush1.bf16.msra.mxu0 0
  %149 = vmatprep.subr.bf16.mxu0 0
  %150 = vmatpush1.bf16.msra.mxu0 0
  %151 = vmatprep.subr.bf16.mxu0 0
  %152 = vmatpush1.bf16.msra.mxu0 0
  %153 = vmatprep.subr.bf16.mxu0 0
  %154 = vmatpush1.bf16.msra.mxu0 0
  %155 = vmatprep.mubr.bf16.mxu0 0
  %156 = vmatmul.mubr.bf16.gmra.mrb[0].mxu0 %v50
  %v157 = vpop.f32.mrb[0].mxu0
  %v158 = vadd.f32 %v73, %v157
  %v159 = vpop.f32.mrb[0].mxu0
  %v160 = vpop.f32.mrb[0].mxu0
  %v161 = vadd.f32 %v73, %v160
  %v162 = vpop.f32.mrb[0].mxu0
  %163 = vmatprep.mubr.bf16.mxu0 0
  %164 = vmatmul.mubr.bf16.gmra.mrb[0].mxu0 %v51
  %v165 = vpop.f32.mrb[0].mxu0
  %v166 = vadd.f32 %v73, %v165
  %v167 = vpop.f32.mrb[0].mxu0
  %v168 = vpop.f32.mrb[0].mxu0
  %v169 = vpop.f32.mrb[0].mxu0
  %170 = vdwg.mxu0
  %v171 = vmax.f32 %v158, 0.0
  %v172 = vmax.f32 %v161, 0.0
  %v173 = vmax.f32 %v166, 0.0
  %v174 = vpack.c.bf16 %v172, %v171
  %v175 = vpack.c.bf16 %v173, %v173
  %v176 = vld [vmem:[%s6] sm:$0xf]
  %v177 = vld [vmem:[%s6 + $0x4] sm:$0xf]
  %v178 = vld [vmem:[%s6 + $0x8] sm:$0xf]
  %v179 = vld [vmem:[%s6 + $0xc] sm:$0xf]
  %v180 = vld [vmem:[%s6 + $0x10] sm:$0xf]
  %v181 = vld [vmem:[%s6 + $0x14] sm:$0xf]
  %v182 = vld [vmem:[%s6 + $0x18] sm:$0xf]
  %v183 = vld [vmem:[%s6 + $0x1c] sm:$0xf]
  %v184 = vld [vmem:[%s7] sm:$0x1]
  %v186 = vlaneseq
  %v187 = vshrl.u32 %v186, 7
  %v188 = vsub.s32 0, %v187
  %v189 = vrot.slane %v184, %v188
  %v199 = vunpack.c.l.b16 %v176
  %v200 = vunpack.c.l.b16 %v177
  %v201 = vunpack.c.l.b16 %v178
  %v202 = vunpack.c.l.b16 %v179
  %v203 = vunpack.c.l.b16 %v180
  %v204 = vunpack.c.l.b16 %v181
  %v205 = vunpack.c.l.b16 %v182
  %v206 = vunpack.c.l.b16 %v183
  %v207 = vpack.c.b16 %v200, %v199
  %v208 = vpack.c.b16 %v202, %v201
  %v209 = vpack.c.b16 %v204, %v203
  %v210 = vpack.c.b16 %v206, %v205
  %vm215 = vcmask 523264
  %v217 = vsel %vm215, %v174, 0
  %v220 = vsel %vm215, %v175, 0
  %222 = vmatprep.subr.bf16.mxu0 0
  %223 = vmatpush1.bf16.msra.mxu0 %v207
  %224 = vmatprep.subr.bf16.mxu0 0
  %225 = vmatpush1.bf16.msra.mxu0 %v208
  %226 = vmatprep.subr.bf16.mxu0 0
  %227 = vmatpush1.bf16.msra.mxu0 %v209
  %228 = vmatprep.subr.bf16.mxu0 0
  %229 = vmatpush1.bf16.msra.mxu0 %v210
  %230 = vmatprep.subr.bf16.mxu0 0
  %231 = vmatpush1.bf16.msra.mxu0 0
  %232 = vmatprep.subr.bf16.mxu0 0
  %233 = vmatpush1.bf16.msra.mxu0 0
  %234 = vmatprep.subr.bf16.mxu0 0
  %235 = vmatpush1.bf16.msra.mxu0 0
  %236 = vmatprep.subr.bf16.mxu0 0
  %237 = vmatpush1.bf16.msra.mxu0 0
  %238 = vmatprep.subr.bf16.mxu0 0
  %239 = vmatpush1.bf16.msra.mxu0 0
  %240 = vmatprep.subr.bf16.mxu0 0
  %241 = vmatpush1.bf16.msra.mxu0 0
  %242 = vmatprep.subr.bf16.mxu0 0
  %243 = vmatpush1.bf16.msra.mxu0 0
  %244 = vmatprep.subr.bf16.mxu0 0
  %245 = vmatpush1.bf16.msra.mxu0 0
  %246 = vmatprep.subr.bf16.mxu0 0
  %247 = vmatpush1.bf16.msra.mxu0 0
  %248 = vmatprep.subr.bf16.mxu0 0
  %249 = vmatpush1.bf16.msra.mxu0 0
  %250 = vmatprep.subr.bf16.mxu0 0
  %251 = vmatpush1.bf16.msra.mxu0 0
  %252 = vmatprep.subr.bf16.mxu0 0
  %253 = vmatpush1.bf16.msra.mxu0 0
  %254 = vmatprep.mubr.bf16.mxu0 0
  %255 = vmatmul.mubr.bf16.gmra.mrb[0].mxu0 %v217
  %v256 = vpop.f32.mrb[0].mxu0
  %v257 = vadd.f32 %v189, %v256
  %v258 = vpop.f32.mrb[0].mxu0
  %v259 = vpop.f32.mrb[0].mxu0
  %v260 = vadd.f32 %v189, %v259
  %v261 = vpop.f32.mrb[0].mxu0
  %262 = vmatprep.mubr.bf16.mxu0 0
  %263 = vmatmul.mubr.bf16.gmra.mrb[0].mxu0 %v220
  %v264 = vpop.f32.mrb[0].mxu0
  %v265 = vadd.f32 %v189, %v264
  %v266 = vpop.f32.mrb[0].mxu0
  %v267 = vpop.f32.mrb[0].mxu0
  %v268 = vpop.f32.mrb[0].mxu0
  %269 = vdwg.mxu0
  %v270 = vmax.f32 %v257, 0.0
  %v271 = vmax.f32 %v260, 0.0
  %v272 = vmax.f32 %v265, 0.0
  %v273 = vld [vmem:[%s1] sm:$0xff]
  %v274 = vld [vmem:[%s1 + $0x8] sm:$0xf]
  %v275 = vld [vmem:[%s2] sm:$0xff]
  %v276 = vld [vmem:[%s2 + $0x8] sm:$0xff]
  %v277 = vld [vmem:[%s2 + $0x10] sm:$0xff]
  %v278 = vlaneseq
  %v279 = vand.u32 %v278, 127
  %280 = vset.pattern.permute.xlu0 0
  %281 = vperm.xlu0 %280, %v275
  %v282 = vpop.permute.xlu0 %281
  %283 = vset.pattern.permute.xlu0 0
  %284 = vperm.xlu0 %283, %v276
  %v285 = vpop.permute.xlu0 %284
  %286 = vset.pattern.permute.xlu0 0
  %287 = vperm.xlu0 %286, %v277
  %v288 = vpop.permute.xlu0 %287
  %vm289 = vcmp.eq.s32.totalorder %v282, %v279
  %vm290 = vcmp.eq.s32.totalorder %v285, %v279
  %vm291 = vcmp.eq.s32.totalorder %v288, %v279
  %v292 = vsel %vm289, 1, 0
  %v293 = vsel %vm290, 1, 0
  %v294 = vsel %vm291, 1, 0
  %v295 = vcvt.s32.f32 %v292
  %v296 = vcvt.s32.f32 %v293
  %v297 = vcvt.s32.f32 %v294
  %v298 = vpack.c.bf16 %v296, %v295
  %v299 = vpack.c.bf16 %v297, %v297
  %v300 = vpack.c.bf16 %v274, %v273
  %vm301 = vcmask 97280
  %v303 = vsel %vm301, %v298, 0
  %v306 = vsel %vm301, %v299, 0
  %vm308 = vcmask 1045504
  %v310 = vsel %vm308, %v300, 0
  %312 = vmatprep.subr.bf16.mxu0 0
  %313 = vmatpush1.bf16.msra.mxu0 %v310
  %314 = vmatprep.subr.bf16.mxu0 0
  %315 = vmatpush1.bf16.msra.mxu0 0
  %316 = vmatprep.subr.bf16.mxu0 0
  %317 = vmatpush1.bf16.msra.mxu0 0
  %318 = vmatprep.subr.bf16.mxu0 0
  %319 = vmatpush1.bf16.msra.mxu0 0
  %320 = vmatprep.subr.bf16.mxu0 0
  %321 = vmatpush1.bf16.msra.mxu0 0
  %322 = vmatprep.subr.bf16.mxu0 0
  %323 = vmatpush1.bf16.msra.mxu0 0
  %324 = vmatprep.subr.bf16.mxu0 0
  %325 = vmatpush1.bf16.msra.mxu0 0
  %326 = vmatprep.subr.bf16.mxu0 0
  %327 = vmatpush1.bf16.msra.mxu0 0
  %328 = vmatprep.subr.bf16.mxu0 0
  %329 = vmatpush1.bf16.msra.mxu0 0
  %330 = vmatprep.subr.bf16.mxu0 0
  %331 = vmatpush1.bf16.msra.mxu0 0
  %332 = vmatprep.subr.bf16.mxu0 0
  %333 = vmatpush1.bf16.msra.mxu0 0
  %334 = vmatprep.subr.bf16.mxu0 0
  %335 = vmatpush1.bf16.msra.mxu0 0
  %336 = vmatprep.subr.bf16.mxu0 0
  %337 = vmatpush1.bf16.msra.mxu0 0
  %338 = vmatprep.subr.bf16.mxu0 0
  %339 = vmatpush1.bf16.msra.mxu0 0
  %340 = vmatprep.subr.bf16.mxu0 0
  %341 = vmatpush1.bf16.msra.mxu0 0
  %342 = vmatprep.subr.bf16.mxu0 0
  %343 = vmatpush1.bf16.msra.mxu0 0
  %344 = vmatprep.mubr.bf16.mxu0 0
  %345 = vmatmul.mubr.bf16.gmra.mrb[0].mxu0 %v303
  %v346 = vpop.f32.mrb[0].mxu0
  %v347 = vadd.f32 %v270, %v346
  %v348 = vpop.f32.mrb[0].mxu0
  %v349 = vpop.f32.mrb[0].mxu0
  %v350 = vadd.f32 %v271, %v349
  %v351 = vpop.f32.mrb[0].mxu0
  %352 = vmatprep.mubr.bf16.mxu0 0
  %353 = vmatmul.mubr.bf16.gmra.mrb[0].mxu0 %v306
  %v354 = vpop.f32.mrb[0].mxu0
  %v355 = vadd.f32 %v272, %v354
  %v356 = vpop.f32.mrb[0].mxu0
  %v357 = vpop.f32.mrb[0].mxu0
  %v358 = vpop.f32.mrb[0].mxu0
  %359 = vdwg.mxu0
  %v360 = vmax.f32 %v347, 0.0
  %v361 = vmax.f32 %v350, 0.0
  %v362 = vmax.f32 %v355, 0.0
  %v363 = vlaneseq
  %v364 = vshrl.u32 %v363, 7
  %v365 = vadd.s32 %v364, 8
  %v366 = vld [vmem:[%s3] sm:$0x1]
  %v367 = vlaneseq
  %v368 = vshrl.u32 %v367, 7
  %v369 = vsub.s32 0, %v368
  %v370 = vrot.slane %v366, %v369
  %vm371 = vcmp.eq.s32.totalorder %v364, %v370
  %vm372 = vcmp.eq.s32.totalorder %v365, %v370
  %v373 = vsel %vm371, 1, 0
  %v374 = vsel %vm372, 1, 0
  %v375 = vcvt.s32.f32 %v373
  %v376 = vcvt.s32.f32 %v374
  %v377 = vpack.c.bf16 %v376, %v375
  %v378 = vpack.c.bf16 %v361, %v360
  %v379 = vpack.c.bf16 %v362, %v362
  %vm380 = vcmask 195584
  %v382 = vsel %vm380, %v377, 0
  %vm384 = vcmask 1043456
  %v386 = vsel %vm384, %v379, 0
  %388 = vmatprep.subr.bf16.mxu0 0
  %389 = vmatpush1.bf16.msra.mxu0 %v378
  %390 = vmatprep.subr.bf16.mxu0 0
  %391 = vmatpush1.bf16.msra.mxu0 %v386
  %392 = vmatprep.subr.bf16.mxu0 0
  %393 = vmatpush1.bf16.msra.mxu0 0
  %394 = vmatprep.subr.bf16.mxu0 0
  %395 = vmatpush1.bf16.msra.mxu0 0
  %396 = vmatprep.subr.bf16.mxu0 0
  %397 = vmatpush1.bf16.msra.mxu0 0
  %398 = vmatprep.subr.bf16.mxu0 0
  %399 = vmatpush1.bf16.msra.mxu0 0
  %400 = vmatprep.subr.bf16.mxu0 0
  %401 = vmatpush1.bf16.msra.mxu0 0
  %402 = vmatprep.subr.bf16.mxu0 0
  %403 = vmatpush1.bf16.msra.mxu0 0
  %404 = vmatprep.subr.bf16.mxu0 0
  %405 = vmatpush1.bf16.msra.mxu0 0
  %406 = vmatprep.subr.bf16.mxu0 0
  %407 = vmatpush1.bf16.msra.mxu0 0
  %408 = vmatprep.subr.bf16.mxu0 0
  %409 = vmatpush1.bf16.msra.mxu0 0
  %410 = vmatprep.subr.bf16.mxu0 0
  %411 = vmatpush1.bf16.msra.mxu0 0
  %412 = vmatprep.subr.bf16.mxu0 0
  %413 = vmatpush1.bf16.msra.mxu0 0
  %414 = vmatprep.subr.bf16.mxu0 0
  %415 = vmatpush1.bf16.msra.mxu0 0
  %416 = vmatprep.subr.bf16.mxu0 0
  %417 = vmatpush1.bf16.msra.mxu0 0
  %418 = vmatprep.subr.bf16.mxu0 0
  %419 = vmatpush1.bf16.msra.mxu0 0
  %420 = vmatprep.mubr.bf16.mxu0 0
  %421 = vmatmul.mubr.bf16.gmra.mrb[0].mxu0 %v382
  %v422 = vpop.f32.mrb[0].mxu0
  %v423 = vadd.f32 %v273, %v422
  %v424 = vpop.f32.mrb[0].mxu0
  %v425 = vpop.f32.mrb[0].mxu0
  %v426 = vadd.f32 %v274, %v425
  %v427 = vpop.f32.mrb[0].mxu0
  %428 = vdwg.mxu0
  %v429 = vpack.c.bf16 %v426, %v423
  %v430 = vld [vmem:[%s8] sm:$0xf]
  %v431 = vld [vmem:[%s8 + $0x4] sm:$0xf]
  %v432 = vld [vmem:[%s8 + $0x8] sm:$0xf]
  %v433 = vld [vmem:[%s8 + $0xc] sm:$0xf]
  %v434 = vld [vmem:[%s9] sm:$0x1]
  %v436 = vlaneseq
  %v437 = vshrl.u32 %v436, 7
  %v438 = vsub.s32 0, %v437
  %v439 = vrot.slane %v434, %v438
  %v445 = vunpack.c.l.b16 %v430
  %v446 = vunpack.c.l.b16 %v431
  %v447 = vunpack.c.l.b16 %v432
  %v448 = vunpack.c.l.b16 %v433
  %v449 = vpack.c.b16 %v446, %v445
  %v450 = vpack.c.b16 %v448, %v447
  %vm453 = vcmask 261120
  %v455 = vsel %vm453, %v429, 0
  %457 = vmatprep.subr.bf16.mxu0 0
  %458 = vmatpush1.bf16.msra.mxu0 %v449
  %459 = vmatprep.subr.bf16.mxu0 0
  %460 = vmatpush1.bf16.msra.mxu0 %v450
  %461 = vmatprep.subr.bf16.mxu0 0
  %462 = vmatpush1.bf16.msra.mxu0 0
  %463 = vmatprep.subr.bf16.mxu0 0
  %464 = vmatpush1.bf16.msra.mxu0 0
  %465 = vmatprep.subr.bf16.mxu0 0
  %466 = vmatpush1.bf16.msra.mxu0 0
  %467 = vmatprep.subr.bf16.mxu0 0
  %468 = vmatpush1.bf16.msra.mxu0 0
  %469 = vmatprep.subr.bf16.mxu0 0
  %470 = vmatpush1.bf16.msra.mxu0 0
  %471 = vmatprep.subr.bf16.mxu0 0
  %472 = vmatpush1.bf16.msra.mxu0 0
  %473 = vmatprep.subr.bf16.mxu0 0
  %474 = vmatpush1.bf16.msra.mxu0 0
  %475 = vmatprep.subr.bf16.mxu0 0
  %476 = vmatpush1.bf16.msra.mxu0 0
  %477 = vmatprep.subr.bf16.mxu0 0
  %478 = vmatpush1.bf16.msra.mxu0 0
  %479 = vmatprep.subr.bf16.mxu0 0
  %480 = vmatpush1.bf16.msra.mxu0 0
  %481 = vmatprep.subr.bf16.mxu0 0
  %482 = vmatpush1.bf16.msra.mxu0 0
  %483 = vmatprep.subr.bf16.mxu0 0
  %484 = vmatpush1.bf16.msra.mxu0 0
  %485 = vmatprep.subr.bf16.mxu0 0
  %486 = vmatpush1.bf16.msra.mxu0 0
  %487 = vmatprep.subr.bf16.mxu0 0
  %488 = vmatpush1.bf16.msra.mxu0 0
  %489 = vmatprep.mubr.bf16.mxu0 0
  %490 = vmatmul.mubr.bf16.gmra.mrb[0].mxu0 %v455
  %v491 = vpop.f32.mrb[0].mxu0
  %v492 = vadd.f32 %v439, %v491
  %v493 = vpop.f32.mrb[0].mxu0
  %v494 = vpop.f32.mrb[0].mxu0
  %v495 = vadd.f32 %v439, %v494
  %v496 = vpop.f32.mrb[0].mxu0
  %497 = vdwg.mxu0
  %v498 = vmax.f32 %v492, 0.0
  %v499 = vmax.f32 %v495, 0.0
  %v500 = vpack.c.bf16 %v499, %v498
  %v501 = vld [vmem:[%s10] sm:$0xff]
  %v502 = vld [vmem:[%s10 + $0x8] sm:$0xff]
  %v503 = vld [vmem:[%s10 + $0x10] sm:$0xff]
  %v504 = vld [vmem:[%s10 + $0x18] sm:$0xff]
  %v505 = vld [vmem:[%s10 + $0x20] sm:$0xff]
  %v506 = vld [vmem:[%s10 + $0x28] sm:$0xff]
  %v507 = vld [vmem:[%s10 + $0x30] sm:$0xff]
  %v508 = vld [vmem:[%s10 + $0x38] sm:$0xff]
  %v509 = vld [vmem:[%s10 + $0x40] sm:$0xff]
  %v510 = vld [vmem:[%s10 + $0x48] sm:$0xff]
  %v511 = vld [vmem:[%s10 + $0x50] sm:$0xff]
  %v512 = vld [vmem:[%s10 + $0x58] sm:$0xff]
  %v513 = vld [vmem:[%s10 + $0x60] sm:$0xff]
  %v514 = vld [vmem:[%s10 + $0x68] sm:$0xff]
  %v515 = vld [vmem:[%s10 + $0x70] sm:$0xff]
  %v516 = vld [vmem:[%s10 + $0x78] sm:$0xff]
  %v517 = vld [vmem:[%s10 + $0x80] sm:$0xff]
  %v518 = vld [vmem:[%s10 + $0x88] sm:$0xff]
  %v519 = vld [vmem:[%s10 + $0x90] sm:$0xff]
  %v520 = vld [vmem:[%s10 + $0x98] sm:$0xff]
  %v521 = vld [vmem:[%s10 + $0xa0] sm:$0xff]
  %v522 = vld [vmem:[%s10 + $0xa8] sm:$0xff]
  %v523 = vld [vmem:[%s10 + $0xb0] sm:$0xff]
  %v524 = vld [vmem:[%s10 + $0xb8] sm:$0xff]
  %v525 = vld [vmem:[%s10 + $0xc0] sm:$0xff]
  %v526 = vld [vmem:[%s10 + $0xc8] sm:$0xff]
  %v527 = vld [vmem:[%s10 + $0xd0] sm:$0xff]
  %v528 = vld [vmem:[%s10 + $0xd8] sm:$0xff]
  %v529 = vld [vmem:[%s10 + $0xe0] sm:$0xff]
  %v530 = vld [vmem:[%s10 + $0xe8] sm:$0xff]
  %v531 = vld [vmem:[%s10 + $0xf0] sm:$0xff]
  %v532 = vld [vmem:[%s10 + $0xf8] sm:$0xff]
  %v533 = vld [vmem:[%s11] sm:$0xf]
  %v535 = vlaneseq
  %v536 = vshrl.u32 %v535, 7
  %v537 = vsub.s32 0, %v536
  %v538 = vrot.slane %v533, %v537
  %v539 = vlaneseq
  %v540 = vshrl.u32 %v539, 7
  %v541 = vsub.s32 1, %v540
  %v542 = vrot.slane %v533, %v541
  %v543 = vlaneseq
  %v544 = vshrl.u32 %v543, 7
  %v545 = vsub.s32 2, %v544
  %v546 = vrot.slane %v533, %v545
  %v547 = vlaneseq
  %v548 = vshrl.u32 %v547, 7
  %v549 = vsub.s32 3, %v548
  %v550 = vrot.slane %v533, %v549
  %v587 = vunpack.c.l.b16 %v501
  %v588 = vunpack.c.h.b16 %v501
  %v589 = vunpack.c.l.b16 %v502
  %v590 = vunpack.c.h.b16 %v502
  %v591 = vunpack.c.l.b16 %v503
  %v592 = vunpack.c.h.b16 %v503
  %v593 = vunpack.c.l.b16 %v504
  %v594 = vunpack.c.h.b16 %v504
  %v595 = vunpack.c.l.b16 %v505
  %v596 = vunpack.c.h.b16 %v505
  %v597 = vunpack.c.l.b16 %v506
  %v598 = vunpack.c.h.b16 %v506
  %v599 = vunpack.c.l.b16 %v507
  %v600 = vunpack.c.h.b16 %v507
  %v601 = vunpack.c.l.b16 %v508
  %v602 = vunpack.c.h.b16 %v508
  %v603 = vunpack.c.l.b16 %v509
  %v604 = vunpack.c.h.b16 %v509
  %v605 = vunpack.c.l.b16 %v510
  %v606 = vunpack.c.h.b16 %v510
  %v607 = vunpack.c.l.b16 %v511
  %v608 = vunpack.c.h.b16 %v511
  %v609 = vunpack.c.l.b16 %v512
  %v610 = vunpack.c.h.b16 %v512
  %v611 = vunpack.c.l.b16 %v513
  %v612 = vunpack.c.h.b16 %v513
  %v613 = vunpack.c.l.b16 %v514
  %v614 = vunpack.c.h.b16 %v514
  %v615 = vunpack.c.l.b16 %v515
  %v616 = vunpack.c.h.b16 %v515
  %v617 = vunpack.c.l.b16 %v516
  %v618 = vunpack.c.h.b16 %v516
  %v619 = vunpack.c.l.b16 %v517
  %v620 = vunpack.c.h.b16 %v517
  %v621 = vunpack.c.l.b16 %v518
  %v622 = vunpack.c.h.b16 %v518
  %v623 = vunpack.c.l.b16 %v519
  %v624 = vunpack.c.h.b16 %v519
  %v625 = vunpack.c.l.b16 %v520
  %v626 = vunpack.c.h.b16 %v520
  %v627 = vunpack.c.l.b16 %v521
  %v628 = vunpack.c.h.b16 %v521
  %v629 = vunpack.c.l.b16 %v522
  %v630 = vunpack.c.h.b16 %v522
  %v631 = vunpack.c.l.b16 %v523
  %v632 = vunpack.c.h.b16 %v523
  %v633 = vunpack.c.l.b16 %v524
  %v634 = vunpack.c.h.b16 %v524
  %v635 = vunpack.c.l.b16 %v525
  %v636 = vunpack.c.h.b16 %v525
  %v637 = vunpack.c.l.b16 %v526
  %v638 = vunpack.c.h.b16 %v526
  %v639 = vunpack.c.l.b16 %v527
  %v640 = vunpack.c.h.b16 %v527
  %v641 = vunpack.c.l.b16 %v528
  %v642 = vunpack.c.h.b16 %v528
  %v643 = vunpack.c.l.b16 %v529
  %v644 = vunpack.c.h.b16 %v529
  %v645 = vunpack.c.l.b16 %v530
  %v646 = vunpack.c.h.b16 %v530
  %v647 = vunpack.c.l.b16 %v531
  %v648 = vunpack.c.h.b16 %v531
  %v649 = vunpack.c.l.b16 %v532
  %v650 = vunpack.c.h.b16 %v532
  %v651 = vpack.c.b16 %v591, %v587
  %v652 = vpack.c.b16 %v592, %v588
  %v653 = vpack.c.b16 %v593, %v589
  %v654 = vpack.c.b16 %v594, %v590
  %v655 = vpack.c.b16 %v599, %v595
  %v656 = vpack.c.b16 %v600, %v596
  %v657 = vpack.c.b16 %v601, %v597
  %v658 = vpack.c.b16 %v602, %v598
  %v659 = vpack.c.b16 %v607, %v603
  %v660 = vpack.c.b16 %v608, %v604
  %v661 = vpack.c.b16 %v609, %v605
  %v662 = vpack.c.b16 %v610, %v606
  %v663 = vpack.c.b16 %v615, %v611
  %v664 = vpack.c.b16 %v616, %v612
  %v665 = vpack.c.b16 %v617, %v613
  %v666 = vpack.c.b16 %v618, %v614
  %v667 = vpack.c.b16 %v623, %v619
  %v668 = vpack.c.b16 %v624, %v620
  %v669 = vpack.c.b16 %v625, %v621
  %v670 = vpack.c.b16 %v626, %v622
  %v671 = vpack.c.b16 %v631, %v627
  %v672 = vpack.c.b16 %v632, %v628
  %v673 = vpack.c.b16 %v633, %v629
  %v674 = vpack.c.b16 %v634, %v630
  %v675 = vpack.c.b16 %v639, %v635
  %v676 = vpack.c.b16 %v640, %v636
  %v677 = vpack.c.b16 %v641, %v637
  %v678 = vpack.c.b16 %v642, %v638
  %v679 = vpack.c.b16 %v647, %v643
  %v680 = vpack.c.b16 %v648, %v644
  %v681 = vpack.c.b16 %v649, %v645
  %v682 = vpack.c.b16 %v650, %v646
  %715 = vmatprep.subr.bf16.mxu0 %v652
  %716 = vmatpush1.bf16.msra.mxu0 %v651
  %717 = vmatprep.subr.bf16.mxu0 %v656
  %718 = vmatpush1.bf16.msra.mxu0 %v655
  %719 = vmatprep.subr.bf16.mxu0 %v660
  %720 = vmatpush1.bf16.msra.mxu0 %v659
  %721 = vmatprep.subr.bf16.mxu0 %v664
  %722 = vmatpush1.bf16.msra.mxu0 %v663
  %723 = vmatprep.subr.bf16.mxu0 %v668
  %724 = vmatpush1.bf16.msra.mxu0 %v667
  %725 = vmatprep.subr.bf16.mxu0 %v672
  %726 = vmatpush1.bf16.msra.mxu0 %v671
  %727 = vmatprep.subr.bf16.mxu0 %v676
  %728 = vmatpush1.bf16.msra.mxu0 %v675
  %729 = vmatprep.subr.bf16.mxu0 %v680
  %730 = vmatpush1.bf16.msra.mxu0 %v679
  %731 = vmatprep.subr.bf16.mxu0 0
  %732 = vmatpush1.bf16.msra.mxu0 0
  %733 = vmatprep.subr.bf16.mxu0 0
  %734 = vmatpush1.bf16.msra.mxu0 0
  %735 = vmatprep.subr.bf16.mxu0 0
  %736 = vmatpush1.bf16.msra.mxu0 0
  %737 = vmatprep.subr.bf16.mxu0 0
  %738 = vmatpush1.bf16.msra.mxu0 0
  %739 = vmatprep.subr.bf16.mxu0 0
  %740 = vmatpush1.bf16.msra.mxu0 0
  %741 = vmatprep.subr.bf16.mxu0 0
  %742 = vmatpush1.bf16.msra.mxu0 0
  %743 = vmatprep.subr.bf16.mxu0 0
  %744 = vmatpush1.bf16.msra.mxu0 0
  %745 = vmatprep.subr.bf16.mxu0 0
  %746 = vmatpush1.bf16.msra.mxu0 0
  %747 = vmatprep.mubr.bf16.mxu0 0
  %748 = vmatmul.mubr.bf16.gmra.mrb[0].mxu0 %v500
  %v749 = vpop.f32.mrb[0].mxu0
  %v750 = vadd.f32 %v538, %v749
  %v751 = vpop.f32.mrb[0].mxu0
  %v752 = vadd.f32 %v542, %v751
  %v753 = vpop.f32.mrb[0].mxu0
  %v754 = vadd.f32 %v538, %v753
  %v755 = vpop.f32.mrb[0].mxu0
  %v756 = vadd.f32 %v542, %v755
  %757 = vdwg.mxu0
  %758 = vmatprep.subr.bf16.mxu0 %v654
  %759 = vmatpush1.bf16.msra.mxu0 %v653
  %760 = vmatprep.subr.bf16.mxu0 %v658
  %761 = vmatpush1.bf16.msra.mxu0 %v657
  %762 = vmatprep.subr.bf16.mxu0 %v662
  %763 = vmatpush1.bf16.msra.mxu0 %v661
  %764 = vmatprep.subr.bf16.mxu0 %v666
  %765 = vmatpush1.bf16.msra.mxu0 %v665
  %766 = vmatprep.subr.bf16.mxu0 %v670
  %767 = vmatpush1.bf16.msra.mxu0 %v669
  %768 = vmatprep.subr.bf16.mxu0 %v674
  %769 = vmatpush1.bf16.msra.mxu0 %v673
  %770 = vmatprep.subr.bf16.mxu0 %v678
  %771 = vmatpush1.bf16.msra.mxu0 %v677
  %772 = vmatprep.subr.bf16.mxu0 %v682
  %773 = vmatpush1.bf16.msra.mxu0 %v681
  %774 = vmatprep.subr.bf16.mxu0 0
  %775 = vmatpush1.bf16.msra.mxu0 0
  %776 = vmatprep.subr.bf16.mxu0 0
  %777 = vmatpush1.bf16.msra.mxu0 0
  %778 = vmatprep.subr.bf16.mxu0 0
  %779 = vmatpush1.bf16.msra.mxu0 0
  %780 = vmatprep.subr.bf16.mxu0 0
  %781 = vmatpush1.bf16.msra.mxu0 0
  %782 = vmatprep.subr.bf16.mxu0 0
  %783 = vmatpush1.bf16.msra.mxu0 0
  %784 = vmatprep.subr.bf16.mxu0 0
  %785 = vmatpush1.bf16.msra.mxu0 0
  %786 = vmatprep.subr.bf16.mxu0 0
  %787 = vmatpush1.bf16.msra.mxu0 0
  %788 = vmatprep.subr.bf16.mxu0 0
  %789 = vmatpush1.bf16.msra.mxu0 0
  %790 = vmatprep.mubr.bf16.mxu0 0
  %791 = vmatmul.mubr.bf16.gmra.mrb[0].mxu0 %v500
  %v792 = vpop.f32.mrb[0].mxu0
  %v793 = vadd.f32 %v546, %v792
  %v794 = vpop.f32.mrb[0].mxu0
  %v795 = vadd.f32 %v550, %v794
  %v796 = vpop.f32.mrb[0].mxu0
  %v797 = vadd.f32 %v546, %v796
  %v798 = vpop.f32.mrb[0].mxu0
  %v799 = vadd.f32 %v550, %v798
  %800 = vdwg.mxu0
  %v801 = vmax.f32 %v750, 0.0
  %v802 = vmax.f32 %v752, 0.0
  %v803 = vmax.f32 %v793, 0.0
  %v804 = vmax.f32 %v795, 0.0
  %v805 = vmax.f32 %v754, 0.0
  %v806 = vmax.f32 %v756, 0.0
  %v807 = vmax.f32 %v797, 0.0
  %v808 = vmax.f32 %v799, 0.0
  %809 = vst [vmem:[%s13] sm:$0xff] %v801
  %810 = vst [vmem:[%s13 + $0x8] sm:$0xff] %v802
  %811 = vst [vmem:[%s13 + $0x10] sm:$0xff] %v803
  %812 = vst [vmem:[%s13 + $0x18] sm:$0xff] %v804
  %813 = vst [vmem:[%s13 + $0x20] sm:$0xf] %v805
  %814 = vst [vmem:[%s13 + $0x28] sm:$0xf] %v806
  %815 = vst [vmem:[%s13 + $0x30] sm:$0xf] %v807
  %816 = vst [vmem:[%s13 + $0x38] sm:$0xf] %v808
  %v817 = vld [vmem:[%s12] sm:$0xff]
  %v818 = vld [vmem:[%s12 + $0x8] sm:$0xff]
  %v819 = vld [vmem:[%s12 + $0x10] sm:$0xff]
  %v820 = vld [vmem:[%s12 + $0x18] sm:$0xff]
  %v821 = vld [vmem:[%s12 + $0x20] sm:$0xff]
  %v822 = vld [vmem:[%s12 + $0x28] sm:$0xff]
  %v823 = vld [vmem:[%s12 + $0x30] sm:$0xff]
  %v824 = vld [vmem:[%s12 + $0x38] sm:$0xff]
  %v825 = vld [vmem:[%s12 + $0x40] sm:$0xff]
  %v826 = vld [vmem:[%s12 + $0x48] sm:$0xff]
  %v827 = vld [vmem:[%s12 + $0x50] sm:$0xff]
  %v828 = vld [vmem:[%s12 + $0x58] sm:$0xff]
  %v829 = vld [vmem:[%s12 + $0x60] sm:$0xff]
  %v830 = vld [vmem:[%s12 + $0x68] sm:$0xff]
  %v831 = vld [vmem:[%s12 + $0x70] sm:$0xff]
  %v832 = vld [vmem:[%s12 + $0x78] sm:$0xff]
  %v833 = vld [vmem:[%s12 + $0x80] sm:$0xff]
  %v834 = vld [vmem:[%s12 + $0x88] sm:$0xff]
  %v835 = vld [vmem:[%s12 + $0x90] sm:$0xff]
  %v836 = vld [vmem:[%s12 + $0x98] sm:$0xff]
  %v837 = vld [vmem:[%s12 + $0xa0] sm:$0xff]
  %v838 = vld [vmem:[%s12 + $0xa8] sm:$0xff]
  %v839 = vld [vmem:[%s12 + $0xb0] sm:$0xff]
  %v840 = vld [vmem:[%s12 + $0xb8] sm:$0xff]
  %v841 = vld [vmem:[%s12 + $0xc0] sm:$0xff]
  %v842 = vld [vmem:[%s12 + $0xc8] sm:$0xff]
  %v843 = vld [vmem:[%s12 + $0xd0] sm:$0xff]
  %v844 = vld [vmem:[%s12 + $0xd8] sm:$0xff]
  %v845 = vld [vmem:[%s12 + $0xe0] sm:$0xff]
  %v846 = vld [vmem:[%s12 + $0xe8] sm:$0xff]
  %v847 = vld [vmem:[%s12 + $0xf0] sm:$0xff]
  %v848 = vld [vmem:[%s12 + $0xf8] sm:$0xff]
  %v849 = vld [vmem:[%s12 + $0x100] sm:$0xff]
  %v850 = vld [vmem:[%s12 + $0x108] sm:$0xff]
  %v851 = vld [vmem:[%s12 + $0x110] sm:$0xff]
  %v852 = vld [vmem:[%s12 + $0x118] sm:$0xff]
  %v853 = vld [vmem:[%s12 + $0x120] sm:$0xff]
  %v854 = vld [vmem:[%s12 + $0x128] sm:$0xff]
  %v855 = vld [vmem:[%s12 + $0x130] sm:$0xff]
  %v856 = vld [vmem:[%s12 + $0x138] sm:$0xff]
  %v857 = vld [vmem:[%s12 + $0x140] sm:$0xff]
  %v858 = vld [vmem:[%s12 + $0x148] sm:$0xff]
  %v859 = vld [vmem:[%s12 + $0x150] sm:$0xff]
  %v860 = vld [vmem:[%s12 + $0x158] sm:$0xff]
  %v861 = vld [vmem:[%s12 + $0x160] sm:$0xff]
  %v862 = vld [vmem:[%s12 + $0x168] sm:$0xff]
  %v863 = vld [vmem:[%s12 + $0x170] sm:$0xff]
  %v864 = vld [vmem:[%s12 + $0x178] sm:$0xff]
  %v865 = vld [vmem:[%s12 + $0x180] sm:$0xff]
  %v866 = vld [vmem:[%s12 + $0x188] sm:$0xff]
  %v867 = vld [vmem:[%s12 + $0x190] sm:$0xff]
  %v868 = vld [vmem:[%s12 + $0x198] sm:$0xff]
  %v869 = vld [vmem:[%s12 + $0x1a0] sm:$0xff]
  %v870 = vld [vmem:[%s12 + $0x1a8] sm:$0xff]
  %v871 = vld [vmem:[%s12 + $0x1b0] sm:$0xff]
  %v872 = vld [vmem:[%s12 + $0x1b8] sm:$0xff]
  %v873 = vld [vmem:[%s12 + $0x1c0] sm:$0xff]
  %v874 = vld [vmem:[%s12 + $0x1c8] sm:$0xff]
  %v875 = vld [vmem:[%s12 + $0x1d0] sm:$0xff]
  %v876 = vld [vmem:[%s12 + $0x1d8] sm:$0xff]
  %v877 = vld [vmem:[%s12 + $0x1e0] sm:$0xff]
  %v878 = vld [vmem:[%s12 + $0x1e8] sm:$0xff]
  %v879 = vld [vmem:[%s12 + $0x1f0] sm:$0xff]
  %v880 = vld [vmem:[%s12 + $0x1f8] sm:$0xff]
  %881 = vmatprep.subr.mxu0 0.0
  %882 = vmatpush1.msra.mxu0 %v817
  %883 = vmatprep.subr.mxu0 0.0
  %884 = vmatpush1.msra.mxu0 %v818
  %885 = vmatprep.subr.mxu0 0.0
  %886 = vmatpush1.msra.mxu0 %v819
  %887 = vmatprep.subr.mxu0 0.0
  %888 = vmatpush1.msra.mxu0 %v820
  %889 = vmatprep.subr.mxu0 0.0
  %890 = vmatpush1.msra.mxu0 %v821
  %891 = vmatprep.subr.mxu0 0.0
  %892 = vmatpush1.msra.mxu0 %v822
  %893 = vmatprep.subr.mxu0 0.0
  %894 = vmatpush1.msra.mxu0 %v823
  %895 = vmatprep.subr.mxu0 0.0
  %896 = vmatpush1.msra.mxu0 %v824
  %897 = vmatprep.subr.mxu0 0.0
  %898 = vmatpush1.msra.mxu0 %v825
  %899 = vmatprep.subr.mxu0 0.0
  %900 = vmatpush1.msra.mxu0 %v826
  %901 = vmatprep.subr.mxu0 0.0
  %902 = vmatpush1.msra.mxu0 %v827
  %903 = vmatprep.subr.mxu0 0.0
  %904 = vmatpush1.msra.mxu0 %v828
  %905 = vmatprep.subr.mxu0 0.0
  %906 = vmatpush1.msra.mxu0 %v829
  %907 = vmatprep.subr.mxu0 0.0
  %908 = vmatpush1.msra.mxu0 %v830
  %909 = vmatprep.subr.mxu0 0.0
  %910 = vmatpush1.msra.mxu0 %v831
  %911 = vmatprep.subr.mxu0 0.0
  %912 = vmatpush1.msra.mxu0 %v832
  %913 = vmatprep.subr.mxu0 0.0
  %914 = vmatpush1.msra.mxu0 %v833
  %915 = vmatprep.subr.mxu0 0.0
  %916 = vmatpush1.msra.mxu0 %v834
  %917 = vmatprep.subr.mxu0 0.0
  %918 = vmatpush1.msra.mxu0 %v835
  %919 = vmatprep.subr.mxu0 0.0
  %920 = vmatpush1.msra.mxu0 %v836
  %921 = vmatprep.subr.mxu0 0.0
  %922 = vmatpush1.msra.mxu0 %v837
  %923 = vmatprep.subr.mxu0 0.0
  %924 = vmatpush1.msra.mxu0 %v838
  %925 = vmatprep.subr.mxu0 0.0
  %926 = vmatpush1.msra.mxu0 %v839
  %927 = vmatprep.subr.mxu0 0.0
  %928 = vmatpush1.msra.mxu0 %v840
  %929 = vmatprep.subr.mxu0 0.0
  %930 = vmatpush1.msra.mxu0 %v841
  %931 = vmatprep.subr.mxu0 0.0
  %932 = vmatpush1.msra.mxu0 %v842
  %933 = vmatprep.subr.mxu0 0.0
  %934 = vmatpush1.msra.mxu0 %v843
  %935 = vmatprep.subr.mxu0 0.0
  %936 = vmatpush1.msra.mxu0 %v844
  %937 = vmatprep.subr.mxu0 0.0
  %938 = vmatpush1.msra.mxu0 %v845
  %939 = vmatprep.subr.mxu0 0.0
  %940 = vmatpush1.msra.mxu0 %v846
  %941 = vmatprep.subr.mxu0 0.0
  %942 = vmatpush1.msra.mxu0 %v847
  %943 = vmatprep.subr.mxu0 0.0
  %944 = vmatpush1.msra.mxu0 %v848
  %945 = vmatprep.mubr.f32.mxu0 %v802
  %946 = vmatmul.mubr.f32.gmra.mrb[0].mxu0 %v801
  %v947 = vpop.f32.mrb[0].mxu0
  %v948 = vadd.f32 0.0, %v947
  %v949 = vpop.f32.mrb[0].mxu0
  %950 = vmatprep.mubr.f32.mxu0 %v806
  %951 = vmatmul.mubr.f32.gmra.mrb[0].mxu0 %v805
  %v952 = vpop.f32.mrb[0].mxu0
  %v953 = vadd.f32 0.0, %v952
  %v954 = vpop.f32.mrb[0].mxu0
  %955 = vdwg.mxu0
  %956 = vmatprep.subr.mxu0 0.0
  %957 = vmatpush1.msra.mxu0 %v849
  %958 = vmatprep.subr.mxu0 0.0
  %959 = vmatpush1.msra.mxu0 %v850
  %960 = vmatprep.subr.mxu0 0.0
  %961 = vmatpush1.msra.mxu0 %v851
  %962 = vmatprep.subr.mxu0 0.0
  %963 = vmatpush1.msra.mxu0 %v852
  %964 = vmatprep.subr.mxu0 0.0
  %965 = vmatpush1.msra.mxu0 %v853
  %966 = vmatprep.subr.mxu0 0.0
  %967 = vmatpush1.msra.mxu0 %v854
  %968 = vmatprep.subr.mxu0 0.0
  %969 = vmatpush1.msra.mxu0 %v855
  %970 = vmatprep.subr.mxu0 0.0
  %971 = vmatpush1.msra.mxu0 %v856
  %972 = vmatprep.subr.mxu0 0.0
  %973 = vmatpush1.msra.mxu0 %v857
  %974 = vmatprep.subr.mxu0 0.0
  %975 = vmatpush1.msra.mxu0 %v858
  %976 = vmatprep.subr.mxu0 0.0
  %977 = vmatpush1.msra.mxu0 %v859
  %978 = vmatprep.subr.mxu0 0.0
  %979 = vmatpush1.msra.mxu0 %v860
  %980 = vmatprep.subr.mxu0 0.0
  %981 = vmatpush1.msra.mxu0 %v861
  %982 = vmatprep.subr.mxu0 0.0
  %983 = vmatpush1.msra.mxu0 %v862
  %984 = vmatprep.subr.mxu0 0.0
  %985 = vmatpush1.msra.mxu0 %v863
  %986 = vmatprep.subr.mxu0 0.0
  %987 = vmatpush1.msra.mxu0 %v864
  %988 = vmatprep.subr.mxu0 0.0
  %989 = vmatpush1.msra.mxu0 %v865
  %990 = vmatprep.subr.mxu0 0.0
  %991 = vmatpush1.msra.mxu0 %v866
  %992 = vmatprep.subr.mxu0 0.0
  %993 = vmatpush1.msra.mxu0 %v867
  %994 = vmatprep.subr.mxu0 0.0
  %995 = vmatpush1.msra.mxu0 %v868
  %996 = vmatprep.subr.mxu0 0.0
  %997 = vmatpush1.msra.mxu0 %v869
  %998 = vmatprep.subr.mxu0 0.0
  %999 = vmatpush1.msra.mxu0 %v870
  %1000 = vmatprep.subr.mxu0 0.0
  %1001 = vmatpush1.msra.mxu0 %v871
  %1002 = vmatprep.subr.mxu0 0.0
  %1003 = vmatpush1.msra.mxu0 %v872
  %1004 = vmatprep.subr.mxu0 0.0
  %1005 = vmatpush1.msra.mxu0 %v873
  %1006 = vmatprep.subr.mxu0 0.0
  %1007 = vmatpush1.msra.mxu0 %v874
  %1008 = vmatprep.subr.mxu0 0.0
  %1009 = vmatpush1.msra.mxu0 %v875
  %1010 = vmatprep.subr.mxu0 0.0
  %1011 = vmatpush1.msra.mxu0 %v876
  %1012 = vmatprep.subr.mxu0 0.0
  %1013 = vmatpush1.msra.mxu0 %v877
  %1014 = vmatprep.subr.mxu0 0.0
  %1015 = vmatpush1.msra.mxu0 %v878
  %1016 = vmatprep.subr.mxu0 0.0
  %1017 = vmatpush1.msra.mxu0 %v879
  %1018 = vmatprep.subr.mxu0 0.0
  %1019 = vmatpush1.msra.mxu0 %v880
  %1020 = vmatprep.mubr.f32.mxu0 %v804
  %1021 = vmatmul.mubr.f32.gmra.mrb[0].mxu0 %v803
  %v1022 = vpop.f32.mrb[0].mxu0
  %v1023 = vadd.f32 %v948, %v1022
  %v1024 = vpop.f32.mrb[0].mxu0
  %1025 = vmatprep.mubr.f32.mxu0 %v808
  %1026 = vmatmul.mubr.f32.gmra.mrb[0].mxu0 %v807
  %v1027 = vpop.f32.mrb[0].mxu0
  %v1028 = vadd.f32 %v953, %v1027
  %v1029 = vpop.f32.mrb[0].mxu0
  %1030 = vdwg.mxu0
  %v1031 = vtanh.pop %v1023
  %v1032 = vtanh.pop %v1028
  %vm1033 = vcmask 7168
  %1034 = vst.msk [vmem:[%s14] sm:$0xff] %vm1033, %v1031
  %vm1035 = vcmask 3072
  %1036 = vst.msk [vmem:[%s14 + $0x8] sm:$0xf] %vm1035, %v1032
  // Predicated region
  $region54: #{forward.3} parent=0 // pred_check
    _
  $region55: #{forward.3} parent=0 // pred_check_branch
    %1038 = sbr.rel (0) target = $region57
  $region56: #{forward.3} parent=0 // pred_region
    _
  $region57: #{forward.3} parent=0 // pred_fallthru
    _
  // Predicated region
  $region58: #{forward.3} parent=0 // pred_check
    _
  $region59: #{forward.3} parent=0 // pred_check_branch
    %1040 = sbr.rel (0) target = $region61
  $region60: #{forward.3} parent=0 // pred_region
    _
  $region61: #{forward.3} parent=0 // pred_fallthru
    _
  // Predicated region
  $region62: #{forward.3} parent=0 // pred_check
    _
  $region63: #{forward.3} parent=0 // pred_check_branch
    %1042 = sbr.rel (0) target = $region65
  $region64: #{forward.3} parent=0 // pred_region
    _
  $region65: #{forward.3} parent=0 // pred_fallthru
    _
  // Predicated region
  $region66: #{forward.3} parent=0 // pred_check
    _
  $region67: #{forward.3} parent=0 // pred_check_branch
    %1044 = sbr.rel (0) target = $region69
  $region68: #{forward.3} parent=0 // pred_region
    _
  $region69: #{forward.3} parent=0 // pred_fallthru
    _

// kernel: forward.5
$region0: #{forward.5}
  #allocation0 [shape = 'u32[]', space=smem, size = 0x4, offset = 0x4, fixed_abs, tag = 'smem constant byte address 0x4 - core index']
  #allocation1 [shape = 'u32[144,128]{1,0:T(1,128)}', space=vmem, size = 0x12000, scoped, tag = 'internal scratch']
  #allocation2 [shape = 'f32[8,512]{1,0:T(8,128)}', space=vmem, size = 0x4000, scoped, tag = 'scratch operand']
  %s0 = inlined_call_operand.vmem [shape: f32[10,512], index: 0, kind: input, shape index: {}]
  %s1 = inlined_call_operand.vmem [shape: s32[8], index: 1, kind: input, shape index: {}]
  %s2 = inlined_call_operand.vmem [shape: f32[8,1], index: 2, kind: input, shape index: {}]
  %s3 = inlined_call_operand.vmem [shape: f32[2,1024], index: 3, kind: input, shape index: {}]
  %s4 = inlined_call_operand.vmem [shape: f32[1024,128], index: 4, kind: input, shape index: {}]
  %s5 = inlined_call_operand.vmem [shape: f32[1,128], index: 5, kind: input, shape index: {}]
  %s6 = inlined_call_operand.vmem [shape: f32[128,64], index: 6, kind: input, shape index: {}]
  %s7 = inlined_call_operand.vmem [shape: f32[1,64], index: 7, kind: input, shape index: {}]
  %s8 = inlined_call_operand.vmem [shape: f32[64,8], index: 8, kind: input, shape index: {}]
  %s9 = inlined_call_operand.vmem [shape: f32[1,8], index: 9, kind: input, shape index: {}]
  %s10 = inlined_call_operand.hbm [shape: f32[2,8], index: 10, kind: output, shape index: {}]
  %s11 = sld [smem:[#allocation0]]
  $region61: #{forward.5} parent=0
    _
  %s13 = ssub.s32 1, %s11
  %s14 = scalar_select 0, %s13, %s11
  $region1: #{forward.5} parent=0
    #allocation3 [shape = 'u8[512]{0}', space=smem, size = 0x200, scoped, tag = 'input window, operand 1, single buffered']
    #allocation4 [shape = 's32[1]{0}', space=sflag, size = 0x4, scoped, tag = 'scoped memory for forward.5']
    #allocation5 [shape = 's32[1]{0}', space=sflag, size = 0x4, scoped, tag = 'scoped memory for forward.5']
    #allocation6 [shape = 'u8[1024]{0}', space=vmem, size = 0x400, scoped, tag = 'output window, operand 0, single buffered']
    %15 = vsyncpa [#allocation5], 0
    %16 = vsyncpa [#allocation4], 0
    // Predicated region
    $region2: #{forward.5} parent=1 // pred_check
      _
    $region3: #{forward.5} parent=1 // pred_check_branch
      %18 = sbr.rel (0) target = $region5
    $region4: #{forward.5} parent=1 // pred_region
      _
    $region5: #{forward.5} parent=1 // pred_fallthru
      _
    // Predicated region
    $region6: #{forward.5} parent=1 // pred_check
      _
    $region7: #{forward.5} parent=1 // pred_check_branch
      %20 = sbr.rel (0) target = $region9
    $region8: #{forward.5} parent=1 // pred_region
      %s22 = ssub.s32 16, 16
      %23 = vsyncadd [#allocation5], %s22
      %s25 = sshll.u32 %s1, 4
      %s26 = int_to_ptr.vmem [resolvable:$true] %s25
      %28 = dma.vmem_to_smem %s26, 16, [#allocation3], [#allocation5]
    $region9: #{forward.5} parent=1 // pred_fallthru
      _
    // Predicated region
    $region10: #{forward.5} parent=1 // pred_check
      _
    $region11: #{forward.5} parent=1 // pred_check_branch
      %30 = sbr.rel (0) target = $region13
    $region12: #{forward.5} parent=1 // pred_region
      _
    $region13: #{forward.5} parent=1 // pred_fallthru
      _
    // Predicated region
    $region14: #{forward.5} parent=1 // pred_check
      _
    $region15: #{forward.5} parent=1 // pred_check_branch
      %32 = sbr.rel (0) target = $region17
    $region16: #{forward.5} parent=1 // pred_region
      _
    $region17: #{forward.5} parent=1 // pred_fallthru
      _
    // Predicated region
    $region18: #{forward.5} parent=1 // pred_check
      _
    $region19: #{forward.5} parent=1 // pred_check_branch
      %34 = sbr.rel (0) target = $region21
    $region20: #{forward.5} parent=1 // pred_region
      _
    $region21: #{forward.5} parent=1 // pred_fallthru
      _
    // Predicated region
    $region22: #{forward.5} parent=1 // pred_check
      _
    $region23: #{forward.5} parent=1 // pred_check_branch
      %36 = sbr.rel (0) target = $region25
    $region24: #{forward.5} parent=1 // pred_region
      _
    $region25: #{forward.5} parent=1 // pred_fallthru
      _
    // Predicated region
    $region26: #{forward.5} parent=1 // pred_check
      _
    $region27: #{forward.5} parent=1 // pred_check_branch
      %38 = sbr.rel (0) target = $region29
    $region28: #{forward.5} parent=1 // pred_region
      _
    $region29: #{forward.5} parent=1 // pred_fallthru
      _
    // Predicated region
    $region30: #{forward.5} parent=1 // pred_check
      _
    $region31: #{forward.5} parent=1 // pred_check_branch
      %40 = sbr.rel (0) target = $region33
    $region32: #{forward.5} parent=1 // pred_region
      _
    $region33: #{forward.5} parent=1 // pred_fallthru
      _
    // Predicated region
    $region34: #{forward.5} parent=1 // pred_check
      _
    $region35: #{forward.5} parent=1 // pred_check_branch
      %42 = sbr.rel (0) target = $region37
    $region36: #{forward.5} parent=1 // pred_region
      _
    $region37: #{forward.5} parent=1 // pred_fallthru
      _
    // Predicated region
    $region38: #{forward.5} parent=1 // pred_check
      _
    $region39: #{forward.5} parent=1 // pred_check_branch
      %44 = sbr.rel (0) target = $region41
    $region40: #{forward.5} parent=1 // pred_region
      _
    $region41: #{forward.5} parent=1 // pred_fallthru
      _
    // Predicated region
    $region42: #{forward.5} parent=1 // pred_check
      _
    $region43: #{forward.5} parent=1 // pred_check_branch
      %46 = sbr.rel (0) target = $region45
    $region44: #{forward.5} parent=1 // pred_region
      %47 = dma.done [#allocation5], 16
    $region45: #{forward.5} parent=1 // pred_fallthru
      _
    %48 = sfence
    loop: start=0, step=1, limit=8
    $region46: #{forward.5} parent=1 // loop_pre_header
      _
    $region47: #{forward.5} parent=1 // loop_header
      %s50 = sphi 0, %s54
      %p51 = scmp.ge.s32.totalorder %s50, 8
    $region48: #{forward.5} parent=1 // loop_header_branch
      %53 = sbr.rel (%p51) target = $region52
    $region49: #{forward.5} parent=1 // loop_body
      %s55 = sld [smem:[#allocation3 + %s50]]
      %s56 = sshra.s32 %s55, 3
      %s57 = sand.u32 %s55, 7
      %s58 = sshra.s32 %s55, 3
      %s59 = sand.u32 %s55, 7
      %s60 = smul.u32 %s56, 4
      %s61 = smul.u32 %s60, 8
      %s62 = sadd.s32 %s61, %s59
      %s63 = scalar_lea.vmem %s0, %s62
      %v64 = vld [vmem:[%s63] ss:$8 sm:$0xf]
      %v65 = vlaneseq
      %vm66 = vcmp.ge.s32.totalorder %v65, 0
      %vm67 = vcmp.lt.s32.totalorder %v65, 512
      %vm68 = vmand %vm66, %vm67
      %s69 = sshra.s32 %s50, 3
      %s70 = sand.u32 %s50, 7
      %s71 = sshra.s32 %s50, 3
      %s72 = sand.u32 %s50, 7
      %s73 = smul.u32 %s69, 4
      %s74 = smul.u32 %s73, 8
      %s75 = sadd.s32 %s74, %s72
      %s76 = scalar_lea.vmem [#allocation2], %s75
      %77 = vst.msk [vmem:[%s76] ss:$8 sm:$0xf] %vm68, %v64
      %78 = vst.msk [vmem:[%s76] ss:$8 sm:$0x0] %vm68, %v64
    $region50: #{forward.5} parent=1 // loop_footer
      %s54 = sadd.s32 1, %s50
    $region51: #{forward.5} parent=1 // loop_footer_branch
      %49 = sbr.rel target = $region47
    $region52: #{forward.5} parent=1 // loop_exit
      _
    %v79 = vld [vmem:[#allocation2] sm:$0xff]
    %v80 = vld [vmem:[#allocation2 + $0x8] sm:$0xff]
    %v81 = vld [vmem:[#allocation2 + $0x10] sm:$0xff]
    %v82 = vld [vmem:[#allocation2 + $0x18] sm:$0xff]
    %v83 = vld [vmem:[%s2] sm:$0xff]
    %85 = vset.pattern.permute.xlu0 0
    %86 = vperm.xlu0 %85, %v83
    %v87 = vpop.permute.xlu0 %86
    %v89 = vmul.f32 %v79, %v87
    %v90 = vmul.f32 %v80, %v87
    %v91 = vmul.f32 %v81, %v87
    %v92 = vmul.f32 %v82, %v87
    %vm93 = vcmask 1043456
    %v94 = vsel %vm93, %v89, -inf
    %v95 = vrot.slane %v94, 4
    %v96 = vmax.f32 %v94, %v95
    %v97 = vrot.slane %v96, 2
    %v98 = vmax.f32 %v96, %v97
    %v99 = vrot.slane %v98, 1
    %v100 = vmax.f32 %v98, %v99
    %v101 = vsel %vm93, %v90, -inf
    %v102 = vrot.slane %v101, 4
    %v103 = vmax.f32 %v101, %v102
    %v104 = vrot.slane %v103, 2
    %v105 = vmax.f32 %v103, %v104
    %v106 = vrot.slane %v105, 1
    %v107 = vmax.f32 %v105, %v106
    %v108 = vsel %vm93, %v91, -inf
    %v109 = vrot.slane %v108, 4
    %v110 = vmax.f32 %v108, %v109
    %v111 = vrot.slane %v110, 2
    %v112 = vmax.f32 %v110, %v111
    %v113 = vrot.slane %v112, 1
    %v114 = vmax.f32 %v112, %v113
    %v115 = vsel %vm93, %v92, -inf
    %v116 = vrot.slane %v115, 4
    %v117 = vmax.f32 %v115, %v116
    %v118 = vrot.slane %v117, 2
    %v119 = vmax.f32 %v117, %v118
    %v120 = vrot.slane %v119, 1
    %v121 = vmax.f32 %v119, %v120
    %v122 = vsel %vm93, %v89, 0.0
    %v123 = vrot.slane %v122, 4
    %v124 = vadd.f32 %v122, %v123
    %v125 = vrot.slane %v124, 2
    %v126 = vadd.f32 %v124, %v125
    %v127 = vrot.slane %v126, 1
    %v128 = vadd.f32 %v126, %v127
    %v129 = vsel %vm93, %v90, 0.0
    %v130 = vrot.slane %v129, 4
    %v131 = vadd.f32 %v129, %v130
    %v132 = vrot.slane %v131, 2
    %v133 = vadd.f32 %v131, %v132
    %v134 = vrot.slane %v133, 1
    %v135 = vadd.f32 %v133, %v134
    %v136 = vsel %vm93, %v91, 0.0
    %v137 = vrot.slane %v136, 4
    %v138 = vadd.f32 %v136, %v137
    %v139 = vrot.slane %v138, 2
    %v140 = vadd.f32 %v138, %v139
    %v141 = vrot.slane %v140, 1
    %v142 = vadd.f32 %v140, %v141
    %v143 = vsel %vm93, %v92, 0.0
    %v144 = vrot.slane %v143, 4
    %v145 = vadd.f32 %v143, %v144
    %v146 = vrot.slane %v145, 2
    %v147 = vadd.f32 %v145, %v146
    %v148 = vrot.slane %v147, 1
    %v149 = vadd.f32 %v147, %v148
    %v150 = vmul.f32 %v128, 0.25
    %v151 = vmul.f32 %v135, 0.25
    %v152 = vmul.f32 %v142, 0.25
    %v153 = vmul.f32 %v149, 0.25
    %vm154 = vcmask 1047556
    %v155 = vsel %vm154, %v89, -inf
    %v156 = vrot.slane %v155, 4
    %v157 = vmax.f32 %v155, %v156
    %v158 = vrot.slane %v157, 2
    %v159 = vmax.f32 %v157, %v158
    %v160 = vrot.slane %v159, 1
    %v161 = vmax.f32 %v159, %v160
    %v162 = vsel %vm154, %v90, -inf
    %v163 = vrot.slane %v162, 4
    %v164 = vmax.f32 %v162, %v163
    %v165 = vrot.slane %v164, 2
    %v166 = vmax.f32 %v164, %v165
    %v167 = vrot.slane %v166, 1
    %v168 = vmax.f32 %v166, %v167
    %v169 = vsel %vm154, %v91, -inf
    %v170 = vrot.slane %v169, 4
    %v171 = vmax.f32 %v169, %v170
    %v172 = vrot.slane %v171, 2
    %v173 = vmax.f32 %v171, %v172
    %v174 = vrot.slane %v173, 1
    %v175 = vmax.f32 %v173, %v174
    %v176 = vsel %vm154, %v92, -inf
    %v177 = vrot.slane %v176, 4
    %v178 = vmax.f32 %v176, %v177
    %v179 = vrot.slane %v178, 2
    %v180 = vmax.f32 %v178, %v179
    %v181 = vrot.slane %v180, 1
    %v182 = vmax.f32 %v180, %v181
    %v187 = vrot.slane %v89, 4
    %v188 = vrot.slane %v90, 4
    %v189 = vrot.slane %v91, 4
    %v190 = vrot.slane %v92, 4
    %v195 = vsel %vm93, %v187, 0.0
    %v196 = vrot.slane %v195, 4
    %v197 = vadd.f32 %v195, %v196
    %v198 = vrot.slane %v197, 2
    %v199 = vadd.f32 %v197, %v198
    %v200 = vrot.slane %v199, 1
    %v201 = vadd.f32 %v199, %v200
    %v202 = vsel %vm93, %v188, 0.0
    %v203 = vrot.slane %v202, 4
    %v204 = vadd.f32 %v202, %v203
    %v205 = vrot.slane %v204, 2
    %v206 = vadd.f32 %v204, %v205
    %v207 = vrot.slane %v206, 1
    %v208 = vadd.f32 %v206, %v207
    %v209 = vsel %vm93, %v189, 0.0
    %v210 = vrot.slane %v209, 4
    %v211 = vadd.f32 %v209, %v210
    %v212 = vrot.slane %v211, 2
    %v213 = vadd.f32 %v211, %v212
    %v214 = vrot.slane %v213, 1
    %v215 = vadd.f32 %v213, %v214
    %v216 = vsel %vm93, %v190, 0.0
    %v217 = vrot.slane %v216, 4
    %v218 = vadd.f32 %v216, %v217
    %v219 = vrot.slane %v218, 2
    %v220 = vadd.f32 %v218, %v219
    %v221 = vrot.slane %v220, 1
    %v222 = vadd.f32 %v220, %v221
    %v223 = vmul.f32 %v201, 0.25
    %v224 = vmul.f32 %v208, 0.25
    %v225 = vmul.f32 %v215, 0.25
    %v226 = vmul.f32 %v222, 0.25
    %vm227 = vcmask 1040384
    %v228 = vsel %vm227, %v100, %v161
    %v229 = vsel %vm227, %v107, %v168
    %v230 = vsel %vm227, %v114, %v175
    %v231 = vsel %vm227, %v121, %v182
    %v232 = vsel %vm227, %v150, %v223
    %v233 = vsel %vm227, %v151, %v224
    %v234 = vsel %vm227, %v152, %v225
    %v235 = vsel %vm227, %v153, %v226
    %v236 = vld [vmem:[%s3] sm:$0xff]
    %v237 = vld [vmem:[%s3 + $0x8] sm:$0xff]
    %v246 = vcombine.low %v228, %v229
    %v247 = vcombine.low %v230, %v231
    %v249 = vunpack.c.l.s4 1983009808
    %v250 = vunpack.c.0.s8 %v249
    %v251 = vlaneseq
    %v252 = vshrl.u32 %v251, 7
    %v253 = vsub.s32 %v250, %v252
    %v254 = vrot.slane %v246, %v253
    %v256 = vunpack.c.l.s4 1983009808
    %v257 = vunpack.c.0.s8 %v256
    %v258 = vlaneseq
    %v259 = vshrl.u32 %v258, 7
    %v260 = vsub.s32 %v257, %v259
    %v261 = vrot.slane %v247, %v260
    %v262 = vcombine.low %v254, %v261
    %v263 = vcombine.low %v232, %v233
    %v264 = vcombine.low %v234, %v235
    %v266 = vunpack.c.l.s4 1983009808
    %v267 = vunpack.c.0.s8 %v266
    %v268 = vlaneseq
    %v269 = vshrl.u32 %v268, 7
    %v270 = vsub.s32 %v267, %v269
    %v271 = vrot.slane %v263, %v270
    %v273 = vunpack.c.l.s4 1983009808
    %v274 = vunpack.c.0.s8 %v273
    %v275 = vlaneseq
    %v276 = vshrl.u32 %v275, 7
    %v277 = vsub.s32 %v274, %v276
    %v278 = vrot.slane %v264, %v277
    %v279 = vcombine.low %v271, %v278
    %v282 = vadd.f32 %v236, %v262
    %v283 = vadd.f32 %v237, %v279
    %v284 = vld [vmem:[%s4] sm:$0xff]
    %v285 = vld [vmem:[%s4 + $0x8] sm:$0xff]
    %v286 = vld [vmem:[%s4 + $0x10] sm:$0xff]
    %v287 = vld [vmem:[%s4 + $0x18] sm:$0xff]
    %v288 = vld [vmem:[%s4 + $0x20] sm:$0xff]
    %v289 = vld [vmem:[%s4 + $0x28] sm:$0xff]
    %v290 = vld [vmem:[%s4 + $0x30] sm:$0xff]
    %v291 = vld [vmem:[%s4 + $0x38] sm:$0xff]
    %v292 = vld [vmem:[%s4 + $0x40] sm:$0xff]
    %v293 = vld [vmem:[%s4 + $0x48] sm:$0xff]
    %v294 = vld [vmem:[%s4 + $0x50] sm:$0xff]
    %v295 = vld [vmem:[%s4 + $0x58] sm:$0xff]
    %v296 = vld [vmem:[%s4 + $0x60] sm:$0xff]
    %v297 = vld [vmem:[%s4 + $0x68] sm:$0xff]
    %v298 = vld [vmem:[%s4 + $0x70] sm:$0xff]
    %v299 = vld [vmem:[%s4 + $0x78] sm:$0xff]
    %v300 = vld [vmem:[%s4 + $0x80] sm:$0xff]
    %v301 = vld [vmem:[%s4 + $0x88] sm:$0xff]
    %v302 = vld [vmem:[%s4 + $0x90] sm:$0xff]
    %v303 = vld [vmem:[%s4 + $0x98] sm:$0xff]
    %v304 = vld [vmem:[%s4 + $0xa0] sm:$0xff]
    %v305 = vld [vmem:[%s4 + $0xa8] sm:$0xff]
    %v306 = vld [vmem:[%s4 + $0xb0] sm:$0xff]
    %v307 = vld [vmem:[%s4 + $0xb8] sm:$0xff]
    %v308 = vld [vmem:[%s4 + $0xc0] sm:$0xff]
    %v309 = vld [vmem:[%s4 + $0xc8] sm:$0xff]
    %v310 = vld [vmem:[%s4 + $0xd0] sm:$0xff]
    %v311 = vld [vmem:[%s4 + $0xd8] sm:$0xff]
    %v312 = vld [vmem:[%s4 + $0xe0] sm:$0xff]
    %v313 = vld [vmem:[%s4 + $0xe8] sm:$0xff]
    %v314 = vld [vmem:[%s4 + $0xf0] sm:$0xff]
    %v315 = vld [vmem:[%s4 + $0xf8] sm:$0xff]
    %v316 = vld [vmem:[%s4 + $0x100] sm:$0xff]
    %v317 = vld [vmem:[%s4 + $0x108] sm:$0xff]
    %v318 = vld [vmem:[%s4 + $0x110] sm:$0xff]
    %v319 = vld [vmem:[%s4 + $0x118] sm:$0xff]
    %v320 = vld [vmem:[%s4 + $0x120] sm:$0xff]
    %v321 = vld [vmem:[%s4 + $0x128] sm:$0xff]
    %v322 = vld [vmem:[%s4 + $0x130] sm:$0xff]
    %v323 = vld [vmem:[%s4 + $0x138] sm:$0xff]
    %v324 = vld [vmem:[%s4 + $0x140] sm:$0xff]
    %v325 = vld [vmem:[%s4 + $0x148] sm:$0xff]
    %v326 = vld [vmem:[%s4 + $0x150] sm:$0xff]
    %v327 = vld [vmem:[%s4 + $0x158] sm:$0xff]
    %v328 = vld [vmem:[%s4 + $0x160] sm:$0xff]
    %v329 = vld [vmem:[%s4 + $0x168] sm:$0xff]
    %v330 = vld [vmem:[%s4 + $0x170] sm:$0xff]
    %v331 = vld [vmem:[%s4 + $0x178] sm:$0xff]
    %v332 = vld [vmem:[%s4 + $0x180] sm:$0xff]
    %v333 = vld [vmem:[%s4 + $0x188] sm:$0xff]
    %v334 = vld [vmem:[%s4 + $0x190] sm:$0xff]
    %v335 = vld [vmem:[%s4 + $0x198] sm:$0xff]
    %v336 = vld [vmem:[%s4 + $0x1a0] sm:$0xff]
    %v337 = vld [vmem:[%s4 + $0x1a8] sm:$0xff]
    %v338 = vld [vmem:[%s4 + $0x1b0] sm:$0xff]
    %v339 = vld [vmem:[%s4 + $0x1b8] sm:$0xff]
    %v340 = vld [vmem:[%s4 + $0x1c0] sm:$0xff]
    %v341 = vld [vmem:[%s4 + $0x1c8] sm:$0xff]
    %v342 = vld [vmem:[%s4 + $0x1d0] sm:$0xff]
    %v343 = vld [vmem:[%s4 + $0x1d8] sm:$0xff]
    %v344 = vld [vmem:[%s4 + $0x1e0] sm:$0xff]
    %v345 = vld [vmem:[%s4 + $0x1e8] sm:$0xff]
    %v346 = vld [vmem:[%s4 + $0x1f0] sm:$0xff]
    %v347 = vld [vmem:[%s4 + $0x1f8] sm:$0xff]
    %v348 = vld [vmem:[%s4 + $0x200] sm:$0xff]
    %v349 = vld [vmem:[%s4 + $0x208] sm:$0xff]
    %v350 = vld [vmem:[%s4 + $0x210] sm:$0xff]
    %v351 = vld [vmem:[%s4 + $0x218] sm:$0xff]
    %v352 = vld [vmem:[%s4 + $0x220] sm:$0xff]
    %v353 = vld [vmem:[%s4 + $0x228] sm:$0xff]
    %v354 = vld [vmem:[%s4 + $0x230] sm:$0xff]
    %v355 = vld [vmem:[%s4 + $0x238] sm:$0xff]
    %v356 = vld [vmem:[%s4 + $0x240] sm:$0xff]
    %v357 = vld [vmem:[%s4 + $0x248] sm:$0xff]
    %v358 = vld [vmem:[%s4 + $0x250] sm:$0xff]
    %v359 = vld [vmem:[%s4 + $0x258] sm:$0xff]
    %v360 = vld [vmem:[%s4 + $0x260] sm:$0xff]
    %v361 = vld [vmem:[%s4 + $0x268] sm:$0xff]
    %v362 = vld [vmem:[%s4 + $0x270] sm:$0xff]
    %v363 = vld [vmem:[%s4 + $0x278] sm:$0xff]
    %v364 = vld [vmem:[%s4 + $0x280] sm:$0xff]
    %v365 = vld [vmem:[%s4 + $0x288] sm:$0xff]
    %v366 = vld [vmem:[%s4 + $0x290] sm:$0xff]
    %v367 = vld [vmem:[%s4 + $0x298] sm:$0xff]
    %v368 = vld [vmem:[%s4 + $0x2a0] sm:$0xff]
    %v369 = vld [vmem:[%s4 + $0x2a8] sm:$0xff]
    %v370 = vld [vmem:[%s4 + $0x2b0] sm:$0xff]
    %v371 = vld [vmem:[%s4 + $0x2b8] sm:$0xff]
    %v372 = vld [vmem:[%s4 + $0x2c0] sm:$0xff]
    %v373 = vld [vmem:[%s4 + $0x2c8] sm:$0xff]
    %v374 = vld [vmem:[%s4 + $0x2d0] sm:$0xff]
    %v375 = vld [vmem:[%s4 + $0x2d8] sm:$0xff]
    %v376 = vld [vmem:[%s4 + $0x2e0] sm:$0xff]
    %v377 = vld [vmem:[%s4 + $0x2e8] sm:$0xff]
    %v378 = vld [vmem:[%s4 + $0x2f0] sm:$0xff]
    %v379 = vld [vmem:[%s4 + $0x2f8] sm:$0xff]
    %v380 = vld [vmem:[%s4 + $0x300] sm:$0xff]
    %v381 = vld [vmem:[%s4 + $0x308] sm:$0xff]
    %v382 = vld [vmem:[%s4 + $0x310] sm:$0xff]
    %v383 = vld [vmem:[%s4 + $0x318] sm:$0xff]
    %v384 = vld [vmem:[%s4 + $0x320] sm:$0xff]
    %v385 = vld [vmem:[%s4 + $0x328] sm:$0xff]
    %v386 = vld [vmem:[%s4 + $0x330] sm:$0xff]
    %v387 = vld [vmem:[%s4 + $0x338] sm:$0xff]
    %v388 = vld [vmem:[%s4 + $0x340] sm:$0xff]
    %v389 = vld [vmem:[%s4 + $0x348] sm:$0xff]
    %v390 = vld [vmem:[%s4 + $0x350] sm:$0xff]
    %v391 = vld [vmem:[%s4 + $0x358] sm:$0xff]
    %v392 = vld [vmem:[%s4 + $0x360] sm:$0xff]
    %v393 = vld [vmem:[%s4 + $0x368] sm:$0xff]
    %v394 = vld [vmem:[%s4 + $0x370] sm:$0xff]
    %v395 = vld [vmem:[%s4 + $0x378] sm:$0xff]
    %v396 = vld [vmem:[%s4 + $0x380] sm:$0xff]
    %v397 = vld [vmem:[%s4 + $0x388] sm:$0xff]
    %v398 = vld [vmem:[%s4 + $0x390] sm:$0xff]
    %v399 = vld [vmem:[%s4 + $0x398] sm:$0xff]
    %v400 = vld [vmem:[%s4 + $0x3a0] sm:$0xff]
    %v401 = vld [vmem:[%s4 + $0x3a8] sm:$0xff]
    %v402 = vld [vmem:[%s4 + $0x3b0] sm:$0xff]
    %v403 = vld [vmem:[%s4 + $0x3b8] sm:$0xff]
    %v404 = vld [vmem:[%s4 + $0x3c0] sm:$0xff]
    %v405 = vld [vmem:[%s4 + $0x3c8] sm:$0xff]
    %v406 = vld [vmem:[%s4 + $0x3d0] sm:$0xff]
    %v407 = vld [vmem:[%s4 + $0x3d8] sm:$0xff]
    %v408 = vld [vmem:[%s4 + $0x3e0] sm:$0xff]
    %v409 = vld [vmem:[%s4 + $0x3e8] sm:$0xff]
    %v410 = vld [vmem:[%s4 + $0x3f0] sm:$0xff]
    %v411 = vld [vmem:[%s4 + $0x3f8] sm:$0xff]
    %v412 = vld [vmem:[%s5] sm:$0x1]
    %v414 = vlaneseq
    %v415 = vshrl.u32 %v414, 7
    %v416 = vsub.s32 0, %v415
    %v417 = vrot.slane %v412, %v416
    %v421 = vcombine.high %v282, %v282
    %v423 = vunpack.c.l.s4 1983009808
    %v424 = vunpack.c.0.s8 %v423
    %v425 = vlaneseq
    %v426 = vshrl.u32 %v425, 7
    %v427 = vsub.s32 %v424, %v426
    %v428 = vrot.slane %v282, %v427
    %v430 = vunpack.c.l.s4 1983009808
    %v431 = vunpack.c.0.s8 %v430
    %v432 = vlaneseq
    %v433 = vshrl.u32 %v432, 7
    %v434 = vsub.s32 %v431, %v433
    %v435 = vrot.slane %v421, %v434
    %v436 = vcombine.high %v428, %v428
    %v437 = vcombine.high %v435, %v435
    %v438 = vcombine.high %v283, %v283
    %v440 = vunpack.c.l.s4 1983009808
    %v441 = vunpack.c.0.s8 %v440
    %v442 = vlaneseq
    %v443 = vshrl.u32 %v442, 7
    %v444 = vsub.s32 %v441, %v443
    %v445 = vrot.slane %v283, %v444
    %v447 = vunpack.c.l.s4 1983009808
    %v448 = vunpack.c.0.s8 %v447
    %v449 = vlaneseq
    %v450 = vshrl.u32 %v449, 7
    %v451 = vsub.s32 %v448, %v450
    %v452 = vrot.slane %v438, %v451
    %v453 = vcombine.high %v445, %v445
    %v454 = vcombine.high %v452, %v452
    %463 = vmatprep.subr.mxu0 0.0
    %464 = vmatpush1.msra.mxu0 %v284
    %465 = vmatprep.subr.mxu0 0.0
    %466 = vmatpush1.msra.mxu0 %v285
    %467 = vmatprep.subr.mxu0 0.0
    %468 = vmatpush1.msra.mxu0 %v286
    %469 = vmatprep.subr.mxu0 0.0
    %470 = vmatpush1.msra.mxu0 %v287
    %471 = vmatprep.subr.mxu0 0.0
    %472 = vmatpush1.msra.mxu0 %v288
    %473 = vmatprep.subr.mxu0 0.0
    %474 = vmatpush1.msra.mxu0 %v289
    %475 = vmatprep.subr.mxu0 0.0
    %476 = vmatpush1.msra.mxu0 %v290
    %477 = vmatprep.subr.mxu0 0.0
    %478 = vmatpush1.msra.mxu0 %v291
    %479 = vmatprep.subr.mxu0 0.0
    %480 = vmatpush1.msra.mxu0 %v292
    %481 = vmatprep.subr.mxu0 0.0
    %482 = vmatpush1.msra.mxu0 %v293
    %483 = vmatprep.subr.mxu0 0.0
    %484 = vmatpush1.msra.mxu0 %v294
    %485 = vmatprep.subr.mxu0 0.0
    %486 = vmatpush1.msra.mxu0 %v295
    %487 = vmatprep.subr.mxu0 0.0
    %488 = vmatpush1.msra.mxu0 %v296
    %489 = vmatprep.subr.mxu0 0.0
    %490 = vmatpush1.msra.mxu0 %v297
    %491 = vmatprep.subr.mxu0 0.0
    %492 = vmatpush1.msra.mxu0 %v298
    %493 = vmatprep.subr.mxu0 0.0
    %494 = vmatpush1.msra.mxu0 %v299
    %495 = vmatprep.subr.mxu0 0.0
    %496 = vmatpush1.msra.mxu0 %v300
    %497 = vmatprep.subr.mxu0 0.0
    %498 = vmatpush1.msra.mxu0 %v301
    %499 = vmatprep.subr.mxu0 0.0
    %500 = vmatpush1.msra.mxu0 %v302
    %501 = vmatprep.subr.mxu0 0.0
    %502 = vmatpush1.msra.mxu0 %v303
    %503 = vmatprep.subr.mxu0 0.0
    %504 = vmatpush1.msra.mxu0 %v304
    %505 = vmatprep.subr.mxu0 0.0
    %506 = vmatpush1.msra.mxu0 %v305
    %507 = vmatprep.subr.mxu0 0.0
    %508 = vmatpush1.msra.mxu0 %v306
    %509 = vmatprep.subr.mxu0 0.0
    %510 = vmatpush1.msra.mxu0 %v307
    %511 = vmatprep.subr.mxu0 0.0
    %512 = vmatpush1.msra.mxu0 %v308
    %513 = vmatprep.subr.mxu0 0.0
    %514 = vmatpush1.msra.mxu0 %v309
    %515 = vmatprep.subr.mxu0 0.0
    %516 = vmatpush1.msra.mxu0 %v310
    %517 = vmatprep.subr.mxu0 0.0
    %518 = vmatpush1.msra.mxu0 %v311
    %519 = vmatprep.subr.mxu0 0.0
    %520 = vmatpush1.msra.mxu0 %v312
    %521 = vmatprep.subr.mxu0 0.0
    %522 = vmatpush1.msra.mxu0 %v313
    %523 = vmatprep.subr.mxu0 0.0
    %524 = vmatpush1.msra.mxu0 %v314
    %525 = vmatprep.subr.mxu0 0.0
    %526 = vmatpush1.msra.mxu0 %v315
    %527 = vmatprep.mubr.f32.mxu0 %v436
    %528 = vmatmul.mubr.f32.gmra.mrb[0].mxu0 %v428
    %v529 = vpop.f32.mrb[0].mxu0
    %v530 = vadd.f32 %v417, %v529
    %v531 = vpop.f32.mrb[0].mxu0
    %532 = vdwg.mxu0
    %533 = vmatprep.subr.mxu0 0.0
    %534 = vmatpush1.msra.mxu0 %v316
    %535 = vmatprep.subr.mxu0 0.0
    %536 = vmatpush1.msra.mxu0 %v317
    %537 = vmatprep.subr.mxu0 0.0
    %538 = vmatpush1.msra.mxu0 %v318
    %539 = vmatprep.subr.mxu0 0.0
    %540 = vmatpush1.msra.mxu0 %v319
    %541 = vmatprep.subr.mxu0 0.0
    %542 = vmatpush1.msra.mxu0 %v320
    %543 = vmatprep.subr.mxu0 0.0
    %544 = vmatpush1.msra.mxu0 %v321
    %545 = vmatprep.subr.mxu0 0.0
    %546 = vmatpush1.msra.mxu0 %v322
    %547 = vmatprep.subr.mxu0 0.0
    %548 = vmatpush1.msra.mxu0 %v323
    %549 = vmatprep.subr.mxu0 0.0
    %550 = vmatpush1.msra.mxu0 %v324
    %551 = vmatprep.subr.mxu0 0.0
    %552 = vmatpush1.msra.mxu0 %v325
    %553 = vmatprep.subr.mxu0 0.0
    %554 = vmatpush1.msra.mxu0 %v326
    %555 = vmatprep.subr.mxu0 0.0
    %556 = vmatpush1.msra.mxu0 %v327
    %557 = vmatprep.subr.mxu0 0.0
    %558 = vmatpush1.msra.mxu0 %v328
    %559 = vmatprep.subr.mxu0 0.0
    %560 = vmatpush1.msra.mxu0 %v329
    %561 = vmatprep.subr.mxu0 0.0
    %562 = vmatpush1.msra.mxu0 %v330
    %563 = vmatprep.subr.mxu0 0.0
    %564 = vmatpush1.msra.mxu0 %v331
    %565 = vmatprep.subr.mxu0 0.0
    %566 = vmatpush1.msra.mxu0 %v332
    %567 = vmatprep.subr.mxu0 0.0
    %568 = vmatpush1.msra.mxu0 %v333
    %569 = vmatprep.subr.mxu0 0.0
    %570 = vmatpush1.msra.mxu0 %v334
    %571 = vmatprep.subr.mxu0 0.0
    %572 = vmatpush1.msra.mxu0 %v335
    %573 = vmatprep.subr.mxu0 0.0
    %574 = vmatpush1.msra.mxu0 %v336
    %575 = vmatprep.subr.mxu0 0.0
    %576 = vmatpush1.msra.mxu0 %v337
    %577 = vmatprep.subr.mxu0 0.0
    %578 = vmatpush1.msra.mxu0 %v338
    %579 = vmatprep.subr.mxu0 0.0
    %580 = vmatpush1.msra.mxu0 %v339
    %581 = vmatprep.subr.mxu0 0.0
    %582 = vmatpush1.msra.mxu0 %v340
    %583 = vmatprep.subr.mxu0 0.0
    %584 = vmatpush1.msra.mxu0 %v341
    %585 = vmatprep.subr.mxu0 0.0
    %586 = vmatpush1.msra.mxu0 %v342
    %587 = vmatprep.subr.mxu0 0.0
    %588 = vmatpush1.msra.mxu0 %v343
    %589 = vmatprep.subr.mxu0 0.0
    %590 = vmatpush1.msra.mxu0 %v344
    %591 = vmatprep.subr.mxu0 0.0
    %592 = vmatpush1.msra.mxu0 %v345
    %593 = vmatprep.subr.mxu0 0.0
    %594 = vmatpush1.msra.mxu0 %v346
    %595 = vmatprep.subr.mxu0 0.0
    %596 = vmatpush1.msra.mxu0 %v347
    %597 = vmatprep.mubr.f32.mxu0 %v437
    %598 = vmatmul.mubr.f32.gmra.mrb[0].mxu0 %v435
    %v599 = vpop.f32.mrb[0].mxu0
    %v600 = vadd.f32 %v530, %v599
    %v601 = vpop.f32.mrb[0].mxu0
    %602 = vdwg.mxu0
    %603 = vmatprep.subr.mxu0 0.0
    %604 = vmatpush1.msra.mxu0 %v348
    %605 = vmatprep.subr.mxu0 0.0
    %606 = vmatpush1.msra.mxu0 %v349
    %607 = vmatprep.subr.mxu0 0.0
    %608 = vmatpush1.msra.mxu0 %v350
    %609 = vmatprep.subr.mxu0 0.0
    %610 = vmatpush1.msra.mxu0 %v351
    %611 = vmatprep.subr.mxu0 0.0
    %612 = vmatpush1.msra.mxu0 %v352
    %613 = vmatprep.subr.mxu0 0.0
    %614 = vmatpush1.msra.mxu0 %v353
    %615 = vmatprep.subr.mxu0 0.0
    %616 = vmatpush1.msra.mxu0 %v354
    %617 = vmatprep.subr.mxu0 0.0
    %618 = vmatpush1.msra.mxu0 %v355
    %619 = vmatprep.subr.mxu0 0.0
    %620 = vmatpush1.msra.mxu0 %v356
    %621 = vmatprep.subr.mxu0 0.0
    %622 = vmatpush1.msra.mxu0 %v357
    %623 = vmatprep.subr.mxu0 0.0
    %624 = vmatpush1.msra.mxu0 %v358
    %625 = vmatprep.subr.mxu0 0.0
    %626 = vmatpush1.msra.mxu0 %v359
    %627 = vmatprep.subr.mxu0 0.0
    %628 = vmatpush1.msra.mxu0 %v360
    %629 = vmatprep.subr.mxu0 0.0
    %630 = vmatpush1.msra.mxu0 %v361
    %631 = vmatprep.subr.mxu0 0.0
    %632 = vmatpush1.msra.mxu0 %v362
    %633 = vmatprep.subr.mxu0 0.0
    %634 = vmatpush1.msra.mxu0 %v363
    %635 = vmatprep.subr.mxu0 0.0
    %636 = vmatpush1.msra.mxu0 %v364
    %637 = vmatprep.subr.mxu0 0.0
    %638 = vmatpush1.msra.mxu0 %v365
    %639 = vmatprep.subr.mxu0 0.0
    %640 = vmatpush1.msra.mxu0 %v366
    %641 = vmatprep.subr.mxu0 0.0
    %642 = vmatpush1.msra.mxu0 %v367
    %643 = vmatprep.subr.mxu0 0.0
    %644 = vmatpush1.msra.mxu0 %v368
    %645 = vmatprep.subr.mxu0 0.0
    %646 = vmatpush1.msra.mxu0 %v369
    %647 = vmatprep.subr.mxu0 0.0
    %648 = vmatpush1.msra.mxu0 %v370
    %649 = vmatprep.subr.mxu0 0.0
    %650 = vmatpush1.msra.mxu0 %v371
    %651 = vmatprep.subr.mxu0 0.0
    %652 = vmatpush1.msra.mxu0 %v372
    %653 = vmatprep.subr.mxu0 0.0
    %654 = vmatpush1.msra.mxu0 %v373
    %655 = vmatprep.subr.mxu0 0.0
    %656 = vmatpush1.msra.mxu0 %v374
    %657 = vmatprep.subr.mxu0 0.0
    %658 = vmatpush1.msra.mxu0 %v375
    %659 = vmatprep.subr.mxu0 0.0
    %660 = vmatpush1.msra.mxu0 %v376
    %661 = vmatprep.subr.mxu0 0.0
    %662 = vmatpush1.msra.mxu0 %v377
    %663 = vmatprep.subr.mxu0 0.0
    %664 = vmatpush1.msra.mxu0 %v378
    %665 = vmatprep.subr.mxu0 0.0
    %666 = vmatpush1.msra.mxu0 %v379
    %667 = vmatprep.mubr.f32.mxu0 %v453
    %668 = vmatmul.mubr.f32.gmra.mrb[0].mxu0 %v445
    %v669 = vpop.f32.mrb[0].mxu0
    %v670 = vadd.f32 %v600, %v669
    %v671 = vpop.f32.mrb[0].mxu0
    %672 = vdwg.mxu0
    %673 = vmatprep.subr.mxu0 0.0
    %674 = vmatpush1.msra.mxu0 %v380
    %675 = vmatprep.subr.mxu0 0.0
    %676 = vmatpush1.msra.mxu0 %v381
    %677 = vmatprep.subr.mxu0 0.0
    %678 = vmatpush1.msra.mxu0 %v382
    %679 = vmatprep.subr.mxu0 0.0
    %680 = vmatpush1.msra.mxu0 %v383
    %681 = vmatprep.subr.mxu0 0.0
    %682 = vmatpush1.msra.mxu0 %v384
    %683 = vmatprep.subr.mxu0 0.0
    %684 = vmatpush1.msra.mxu0 %v385
    %685 = vmatprep.subr.mxu0 0.0
    %686 = vmatpush1.msra.mxu0 %v386
    %687 = vmatprep.subr.mxu0 0.0
    %688 = vmatpush1.msra.mxu0 %v387
    %689 = vmatprep.subr.mxu0 0.0
    %690 = vmatpush1.msra.mxu0 %v388
    %691 = vmatprep.subr.mxu0 0.0
    %692 = vmatpush1.msra.mxu0 %v389
    %693 = vmatprep.subr.mxu0 0.0
    %694 = vmatpush1.msra.mxu0 %v390
    %695 = vmatprep.subr.mxu0 0.0
    %696 = vmatpush1.msra.mxu0 %v391
    %697 = vmatprep.subr.mxu0 0.0
    %698 = vmatpush1.msra.mxu0 %v392
    %699 = vmatprep.subr.mxu0 0.0
    %700 = vmatpush1.msra.mxu0 %v393
    %701 = vmatprep.subr.mxu0 0.0
    %702 = vmatpush1.msra.mxu0 %v394
    %703 = vmatprep.subr.mxu0 0.0
    %704 = vmatpush1.msra.mxu0 %v395
    %705 = vmatprep.subr.mxu0 0.0
    %706 = vmatpush1.msra.mxu0 %v396
    %707 = vmatprep.subr.mxu0 0.0
    %708 = vmatpush1.msra.mxu0 %v397
    %709 = vmatprep.subr.mxu0 0.0
    %710 = vmatpush1.msra.mxu0 %v398
    %711 = vmatprep.subr.mxu0 0.0
    %712 = vmatpush1.msra.mxu0 %v399
    %713 = vmatprep.subr.mxu0 0.0
    %714 = vmatpush1.msra.mxu0 %v400
    %715 = vmatprep.subr.mxu0 0.0
    %716 = vmatpush1.msra.mxu0 %v401
    %717 = vmatprep.subr.mxu0 0.0
    %718 = vmatpush1.msra.mxu0 %v402
    %719 = vmatprep.subr.mxu0 0.0
    %720 = vmatpush1.msra.mxu0 %v403
    %721 = vmatprep.subr.mxu0 0.0
    %722 = vmatpush1.msra.mxu0 %v404
    %723 = vmatprep.subr.mxu0 0.0
    %724 = vmatpush1.msra.mxu0 %v405
    %725 = vmatprep.subr.mxu0 0.0
    %726 = vmatpush1.msra.mxu0 %v406
    %727 = vmatprep.subr.mxu0 0.0
    %728 = vmatpush1.msra.mxu0 %v407
    %729 = vmatprep.subr.mxu0 0.0
    %730 = vmatpush1.msra.mxu0 %v408
    %731 = vmatprep.subr.mxu0 0.0
    %732 = vmatpush1.msra.mxu0 %v409
    %733 = vmatprep.subr.mxu0 0.0
    %734 = vmatpush1.msra.mxu0 %v410
    %735 = vmatprep.subr.mxu0 0.0
    %736 = vmatpush1.msra.mxu0 %v411
    %737 = vmatprep.mubr.f32.mxu0 %v454
    %738 = vmatmul.mubr.f32.gmra.mrb[0].mxu0 %v452
    %v739 = vpop.f32.mrb[0].mxu0
    %v740 = vadd.f32 %v670, %v739
    %v741 = vpop.f32.mrb[0].mxu0
    %742 = vdwg.mxu0
    %v743 = vmax.f32 %v740, 0.0
    %v744 = vld [vmem:[%s6] sm:$0xff]
    %v745 = vld [vmem:[%s6 + $0x8] sm:$0xff]
    %v746 = vld [vmem:[%s6 + $0x10] sm:$0xff]
    %v747 = vld [vmem:[%s6 + $0x18] sm:$0xff]
    %v748 = vld [vmem:[%s6 + $0x20] sm:$0xff]
    %v749 = vld [vmem:[%s6 + $0x28] sm:$0xff]
    %v750 = vld [vmem:[%s6 + $0x30] sm:$0xff]
    %v751 = vld [vmem:[%s6 + $0x38] sm:$0xff]
    %v752 = vld [vmem:[%s6 + $0x40] sm:$0xff]
    %v753 = vld [vmem:[%s6 + $0x48] sm:$0xff]
    %v754 = vld [vmem:[%s6 + $0x50] sm:$0xff]
    %v755 = vld [vmem:[%s6 + $0x58] sm:$0xff]
    %v756 = vld [vmem:[%s6 + $0x60] sm:$0xff]
    %v757 = vld [vmem:[%s6 + $0x68] sm:$0xff]
    %v758 = vld [vmem:[%s6 + $0x70] sm:$0xff]
    %v759 = vld [vmem:[%s6 + $0x78] sm:$0xff]
    %v760 = vld [vmem:[%s7] sm:$0x1]
    %v762 = vlaneseq
    %v763 = vshrl.u32 %v762, 7
    %v764 = vsub.s32 0, %v763
    %v765 = vrot.slane %v760, %v764
    %767 = vmatprep.subr.mxu0 0.0
    %768 = vmatpush1.msra.mxu0 %v744
    %769 = vmatprep.subr.mxu0 0.0
    %770 = vmatpush1.msra.mxu0 %v745
    %771 = vmatprep.subr.mxu0 0.0
    %772 = vmatpush1.msra.mxu0 %v746
    %773 = vmatprep.subr.mxu0 0.0
    %774 = vmatpush1.msra.mxu0 %v747
    %775 = vmatprep.subr.mxu0 0.0
    %776 = vmatpush1.msra.mxu0 %v748
    %777 = vmatprep.subr.mxu0 0.0
    %778 = vmatpush1.msra.mxu0 %v749
    %779 = vmatprep.subr.mxu0 0.0
    %780 = vmatpush1.msra.mxu0 %v750
    %781 = vmatprep.subr.mxu0 0.0
    %782 = vmatpush1.msra.mxu0 %v751
    %783 = vmatprep.subr.mxu0 0.0
    %784 = vmatpush1.msra.mxu0 %v752
    %785 = vmatprep.subr.mxu0 0.0
    %786 = vmatpush1.msra.mxu0 %v753
    %787 = vmatprep.subr.mxu0 0.0
    %788 = vmatpush1.msra.mxu0 %v754
    %789 = vmatprep.subr.mxu0 0.0
    %790 = vmatpush1.msra.mxu0 %v755
    %791 = vmatprep.subr.mxu0 0.0
    %792 = vmatpush1.msra.mxu0 %v756
    %793 = vmatprep.subr.mxu0 0.0
    %794 = vmatpush1.msra.mxu0 %v757
    %795 = vmatprep.subr.mxu0 0.0
    %796 = vmatpush1.msra.mxu0 %v758
    %797 = vmatprep.subr.mxu0 0.0
    %798 = vmatpush1.msra.mxu0 %v759
    %799 = vmatprep.subr.mxu0 0.0
    %800 = vmatpush1.msra.mxu0 0.0
    %801 = vmatprep.subr.mxu0 0.0
    %802 = vmatpush1.msra.mxu0 0.0
    %803 = vmatprep.subr.mxu0 0.0
    %804 = vmatpush1.msra.mxu0 0.0
    %805 = vmatprep.subr.mxu0 0.0
    %806 = vmatpush1.msra.mxu0 0.0
    %807 = vmatprep.subr.mxu0 0.0
    %808 = vmatpush1.msra.mxu0 0.0
    %809 = vmatprep.subr.mxu0 0.0
    %810 = vmatpush1.msra.mxu0 0.0
    %811 = vmatprep.subr.mxu0 0.0
    %812 = vmatpush1.msra.mxu0 0.0
    %813 = vmatprep.subr.mxu0 0.0
    %814 = vmatpush1.msra.mxu0 0.0
    %815 = vmatprep.subr.mxu0 0.0
    %816 = vmatpush1.msra.mxu0 0.0
    %817 = vmatprep.subr.mxu0 0.0
    %818 = vmatpush1.msra.mxu0 0.0
    %819 = vmatprep.subr.mxu0 0.0
    %820 = vmatpush1.msra.mxu0 0.0
    %821 = vmatprep.subr.mxu0 0.0
    %822 = vmatpush1.msra.mxu0 0.0
    %823 = vmatprep.subr.mxu0 0.0
    %824 = vmatpush1.msra.mxu0 0.0
    %825 = vmatprep.subr.mxu0 0.0
    %826 = vmatpush1.msra.mxu0 0.0
    %827 = vmatprep.subr.mxu0 0.0
    %828 = vmatpush1.msra.mxu0 0.0
    %829 = vmatprep.subr.mxu0 0.0
    %830 = vmatpush1.msra.mxu0 0.0
    %831 = vmatprep.mubr.f32.mxu0 0.0
    %832 = vmatmul.mubr.f32.gmra.mrb[0].mxu0 %v743
    %v833 = vpop.f32.mrb[0].mxu0
    %v834 = vadd.f32 %v765, %v833
    %v835 = vpop.f32.mrb[0].mxu0
    %836 = vdwg.mxu0
    %v837 = vmax.f32 %v834, 0.0
    %v838 = vld [vmem:[%s8] sm:$0xff]
    %v839 = vld [vmem:[%s8 + $0x8] sm:$0xff]
    %v840 = vld [vmem:[%s8 + $0x10] sm:$0xff]
    %v841 = vld [vmem:[%s8 + $0x18] sm:$0xff]
    %v842 = vld [vmem:[%s8 + $0x20] sm:$0xff]
    %v843 = vld [vmem:[%s8 + $0x28] sm:$0xff]
    %v844 = vld [vmem:[%s8 + $0x30] sm:$0xff]
    %v845 = vld [vmem:[%s8 + $0x38] sm:$0xff]
    %v846 = vld [vmem:[%s9] sm:$0x1]
    %v848 = vlaneseq
    %v849 = vshrl.u32 %v848, 7
    %v850 = vsub.s32 0, %v849
    %v851 = vrot.slane %v846, %v850
    %vm853 = vcmask 523264
    %v855 = vsel %vm853, %v837, 0
    %857 = vmatprep.subr.mxu0 0.0
    %858 = vmatpush1.msra.mxu0 %v838
    %859 = vmatprep.subr.mxu0 0.0
    %860 = vmatpush1.msra.mxu0 %v839
    %861 = vmatprep.subr.mxu0 0.0
    %862 = vmatpush1.msra.mxu0 %v840
    %863 = vmatprep.subr.mxu0 0.0
    %864 = vmatpush1.msra.mxu0 %v841
    %865 = vmatprep.subr.mxu0 0.0
    %866 = vmatpush1.msra.mxu0 %v842
    %867 = vmatprep.subr.mxu0 0.0
    %868 = vmatpush1.msra.mxu0 %v843
    %869 = vmatprep.subr.mxu0 0.0
    %870 = vmatpush1.msra.mxu0 %v844
    %871 = vmatprep.subr.mxu0 0.0
    %872 = vmatpush1.msra.mxu0 %v845
    %873 = vmatprep.subr.mxu0 0.0
    %874 = vmatpush1.msra.mxu0 0.0
    %875 = vmatprep.subr.mxu0 0.0
    %876 = vmatpush1.msra.mxu0 0.0
    %877 = vmatprep.subr.mxu0 0.0
    %878 = vmatpush1.msra.mxu0 0.0
    %879 = vmatprep.subr.mxu0 0.0
    %880 = vmatpush1.msra.mxu0 0.0
    %881 = vmatprep.subr.mxu0 0.0
    %882 = vmatpush1.msra.mxu0 0.0
    %883 = vmatprep.subr.mxu0 0.0
    %884 = vmatpush1.msra.mxu0 0.0
    %885 = vmatprep.subr.mxu0 0.0
    %886 = vmatpush1.msra.mxu0 0.0
    %887 = vmatprep.subr.mxu0 0.0
    %888 = vmatpush1.msra.mxu0 0.0
    %889 = vmatprep.subr.mxu0 0.0
    %890 = vmatpush1.msra.mxu0 0.0
    %891 = vmatprep.subr.mxu0 0.0
    %892 = vmatpush1.msra.mxu0 0.0
    %893 = vmatprep.subr.mxu0 0.0
    %894 = vmatpush1.msra.mxu0 0.0
    %895 = vmatprep.subr.mxu0 0.0
    %896 = vmatpush1.msra.mxu0 0.0
    %897 = vmatprep.subr.mxu0 0.0
    %898 = vmatpush1.msra.mxu0 0.0
    %899 = vmatprep.subr.mxu0 0.0
    %900 = vmatpush1.msra.mxu0 0.0
    %901 = vmatprep.subr.mxu0 0.0
    %902 = vmatpush1.msra.mxu0 0.0
    %903 = vmatprep.subr.mxu0 0.0
    %904 = vmatpush1.msra.mxu0 0.0
    %905 = vmatprep.subr.mxu0 0.0
    %906 = vmatpush1.msra.mxu0 0.0
    %907 = vmatprep.subr.mxu0 0.0
    %908 = vmatpush1.msra.mxu0 0.0
    %909 = vmatprep.subr.mxu0 0.0
    %910 = vmatpush1.msra.mxu0 0.0
    %911 = vmatprep.subr.mxu0 0.0
    %912 = vmatpush1.msra.mxu0 0.0
    %913 = vmatprep.subr.mxu0 0.0
    %914 = vmatpush1.msra.mxu0 0.0
    %915 = vmatprep.subr.mxu0 0.0
    %916 = vmatpush1.msra.mxu0 0.0
    %917 = vmatprep.subr.mxu0 0.0
    %918 = vmatpush1.msra.mxu0 0.0
    %919 = vmatprep.subr.mxu0 0.0
    %920 = vmatpush1.msra.mxu0 0.0
    %921 = vmatprep.mubr.f32.mxu0 0.0
    %922 = vmatmul.mubr.f32.gmra.mrb[0].mxu0 %v855
    %v923 = vpop.f32.mrb[0].mxu0
    %v924 = vadd.f32 %v851, %v923
    %v925 = vpop.f32.mrb[0].mxu0
    %926 = vdwg.mxu0
    %vm927 = vcmask 58368
    %v928 = vsel %vm927, %v924, -inf
    %929 = vmax.xlane.f32.xlu0 %v928
    %v930 = vpop.xlane.xlu0 %929
    %v931 = vsub.f32 %v924, %v930
    %v932 = vmul.f32 %v931, 1.442695
    %v933 = vpow.pop %v932
    %v934 = vsel %vm927, %v933, 0.0
    %935 = vadd.xlane.f32.xlu0 %v934
    %v936 = vpop.xlane.xlu0 %935
    %v937 = vlog2.pop %v936
    %v938 = vmul.f32 %v937, 0.6931472
    %v939 = vsub.f32 %v931, %v938
    %940 = vst.msk [vmem:[#allocation6] sm:$0x3] %vm927, %v939
    // Predicated region
    $region53: #{forward.5} parent=1 // pred_check
      _
    $region54: #{forward.5} parent=1 // pred_check_branch
      %942 = sbr.rel (0) target = $region56
    $region55: #{forward.5} parent=1 // pred_region
      %s944 = ssub.s32 32, 32
      %945 = vsyncadd [#allocation4], %s944
      %s947 = sshll.u32 [#allocation6], 4
      %s948 = int_to_ptr.vmem [resolvable:$true] %s947
      %950 = dma.vmem_to_hbm [thread:$0]  %s948, 32, %s10, [#allocation4]
    $region56: #{forward.5} parent=1 // pred_fallthru
      _
    // Predicated region
    $region57: #{forward.5} parent=1 // pred_check
      _
    $region58: #{forward.5} parent=1 // pred_check_branch
      %952 = sbr.rel (0) target = $region60
    $region59: #{forward.5} parent=1 // pred_region
      %953 = dma.done [#allocation4], 32
    $region60: #{forward.5} parent=1 // pred_fallthru
      _
    %954 = vsyncpa [#allocation4], 1
    %955 = vsyncpa [#allocation5], 1

// kernel: forward.4
$region0: #{forward.4}
  #allocation0 [shape = 'u32[]', space=smem, size = 0x4, offset = 0x4, fixed_abs, tag = 'smem constant byte address 0x4 - core index']
  #allocation1 [shape = 'u32[144,128]{1,0:T(1,128)}', space=vmem, size = 0x12000, scoped, tag = 'internal scratch']
  #allocation2 [shape = 'f32[10,512]{1,0:T(8,128)}', space=vmem, size = 0x8000, scoped, tag = 'scratch operand']
  %s0 = inlined_call_operand.vmem [shape: f32[12,512], index: 0, kind: input, shape index: {}]
  %s1 = inlined_call_operand.vmem [shape: s32[10], index: 1, kind: input, shape index: {}]
  %s2 = inlined_call_operand.vmem [shape: f32[10,1], index: 2, kind: input, shape index: {}]
  %s3 = inlined_call_operand.vmem [shape: s32[34,1], index: 3, kind: input, shape index: {}]
  %s4 = inlined_call_operand.vmem [shape: s32[34,1], index: 4, kind: input, shape index: {}]
  %s5 = inlined_call_operand.vmem [shape: s32[1,34], index: 5, kind: input, shape index: {}]
  %s6 = inlined_call_operand.vmem [shape: f32[34,1], index: 6, kind: input, shape index: {}]
  %s7 = inlined_call_operand.vmem [shape: bf16[4,512], index: 7, kind: input, shape index: {}]
  %s8 = inlined_call_operand.vmem [shape: bf16[512,512], index: 8, kind: input, shape index: {}]
  %s9 = inlined_call_operand.vmem [shape: bf16[512,4], index: 9, kind: input, shape index: {}]
  %s10 = inlined_call_operand.vmem [shape: bf16[512,4], index: 10, kind: input, shape index: {}]
  %s11 = inlined_call_operand.vmem [shape: f32[1,512], index: 11, kind: input, shape index: {}]
  %s12 = inlined_call_operand.vmem [shape: f32[512,1], index: 12, kind: input, shape index: {}]
  %s13 = inlined_call_operand.vmem [shape: f32[10,512], index: 13, kind: output, shape index: {0}]
  %s14 = inlined_call_operand.vmem [shape: f32[10,1], index: 14, kind: output, shape index: {1}]
  %s15 = inlined_call_operand.vmem [shape: f32[2,1024], index: 15, kind: output, shape index: {2}]
  %16 = xla_tuple %s13, %s14, %s15
  %s17 = sld [smem:[#allocation0]]
  $region89: #{forward.4} parent=0
    _
  %s19 = ssub.s32 1, %s17
  %s20 = scalar_select 0, %s19, %s17
  $region1: #{forward.4} parent=0
    #allocation3 [shape = 'u8[512]{0}', space=smem, size = 0x200, scoped, tag = 'input window, operand 1, single buffered']
    #allocation4 [shape = 's32[1]{0}', space=sflag, size = 0x4, scoped, tag = 'scoped memory for forward.4']
    %21 = vsyncpa [#allocation4], 0
    // Predicated region
    $region2: #{forward.4} parent=1 // pred_check
      _
    $region3: #{forward.4} parent=1 // pred_check_branch
      %23 = sbr.rel (0) target = $region5
    $region4: #{forward.4} parent=1 // pred_region
      _
    $region5: #{forward.4} parent=1 // pred_fallthru
      _
    // Predicated region
    $region6: #{forward.4} parent=1 // pred_check
      _
    $region7: #{forward.4} parent=1 // pred_check_branch
      %25 = sbr.rel (0) target = $region9
    $region8: #{forward.4} parent=1 // pred_region
      %s27 = ssub.s32 16, 16
      %28 = vsyncadd [#allocation4], %s27
      %s30 = sshll.u32 %s1, 4
      %s31 = int_to_ptr.vmem [resolvable:$true] %s30
      %33 = dma.vmem_to_smem %s31, 16, [#allocation3], [#allocation4]
    $region9: #{forward.4} parent=1 // pred_fallthru
      _
    // Predicated region
    $region10: #{forward.4} parent=1 // pred_check
      _
    $region11: #{forward.4} parent=1 // pred_check_branch
      %35 = sbr.rel (0) target = $region13
    $region12: #{forward.4} parent=1 // pred_region
      _
    $region13: #{forward.4} parent=1 // pred_fallthru
      _
    // Predicated region
    $region14: #{forward.4} parent=1 // pred_check
      _
    $region15: #{forward.4} parent=1 // pred_check_branch
      %37 = sbr.rel (0) target = $region17
    $region16: #{forward.4} parent=1 // pred_region
      _
    $region17: #{forward.4} parent=1 // pred_fallthru
      _
    // Predicated region
    $region18: #{forward.4} parent=1 // pred_check
      _
    $region19: #{forward.4} parent=1 // pred_check_branch
      %39 = sbr.rel (0) target = $region21
    $region20: #{forward.4} parent=1 // pred_region
      _
    $region21: #{forward.4} parent=1 // pred_fallthru
      _
    // Predicated region
    $region22: #{forward.4} parent=1 // pred_check
      _
    $region23: #{forward.4} parent=1 // pred_check_branch
      %41 = sbr.rel (0) target = $region25
    $region24: #{forward.4} parent=1 // pred_region
      _
    $region25: #{forward.4} parent=1 // pred_fallthru
      _
    // Predicated region
    $region26: #{forward.4} parent=1 // pred_check
      _
    $region27: #{forward.4} parent=1 // pred_check_branch
      %43 = sbr.rel (0) target = $region29
    $region28: #{forward.4} parent=1 // pred_region
      _
    $region29: #{forward.4} parent=1 // pred_fallthru
      _
    // Predicated region
    $region30: #{forward.4} parent=1 // pred_check
      _
    $region31: #{forward.4} parent=1 // pred_check_branch
      %45 = sbr.rel (0) target = $region33
    $region32: #{forward.4} parent=1 // pred_region
      _
    $region33: #{forward.4} parent=1 // pred_fallthru
      _
    // Predicated region
    $region34: #{forward.4} parent=1 // pred_check
      _
    $region35: #{forward.4} parent=1 // pred_check_branch
      %47 = sbr.rel (0) target = $region37
    $region36: #{forward.4} parent=1 // pred_region
      _
    $region37: #{forward.4} parent=1 // pred_fallthru
      _
    // Predicated region
    $region38: #{forward.4} parent=1 // pred_check
      _
    $region39: #{forward.4} parent=1 // pred_check_branch
      %49 = sbr.rel (0) target = $region41
    $region40: #{forward.4} parent=1 // pred_region
      _
    $region41: #{forward.4} parent=1 // pred_fallthru
      _
    // Predicated region
    $region42: #{forward.4} parent=1 // pred_check
      _
    $region43: #{forward.4} parent=1 // pred_check_branch
      %51 = sbr.rel (0) target = $region45
    $region44: #{forward.4} parent=1 // pred_region
      _
    $region45: #{forward.4} parent=1 // pred_fallthru
      _
    // Predicated region
    $region46: #{forward.4} parent=1 // pred_check
      _
    $region47: #{forward.4} parent=1 // pred_check_branch
      %53 = sbr.rel (0) target = $region49
    $region48: #{forward.4} parent=1 // pred_region
      _
    $region49: #{forward.4} parent=1 // pred_fallthru
      _
    // Predicated region
    $region50: #{forward.4} parent=1 // pred_check
      _
    $region51: #{forward.4} parent=1 // pred_check_branch
      %55 = sbr.rel (0) target = $region53
    $region52: #{forward.4} parent=1 // pred_region
      _
    $region53: #{forward.4} parent=1 // pred_fallthru
      _
    // Predicated region
    $region54: #{forward.4} parent=1 // pred_check
      _
    $region55: #{forward.4} parent=1 // pred_check_branch
      %57 = sbr.rel (0) target = $region57
    $region56: #{forward.4} parent=1 // pred_region
      %58 = dma.done [#allocation4], 16
    $region57: #{forward.4} parent=1 // pred_fallthru
      _
    %59 = sfence
    loop: start=0, step=1, limit=10
    $region58: #{forward.4} parent=1 // loop_pre_header
      _
    $region59: #{forward.4} parent=1 // loop_header
      %s62 = sphi 0, %s66
      %p63 = scmp.ge.s32.totalorder %s62, 10
    $region60: #{forward.4} parent=1 // loop_header_branch
      %65 = sbr.rel (%p63) target = $region64
    $region61: #{forward.4} parent=1 // loop_body
      %s67 = sld [smem:[#allocation3 + %s62]]
      %s68 = sshra.s32 %s67, 3
      %s69 = sand.u32 %s67, 7
      %s70 = sshra.s32 %s67, 3
      %s71 = sand.u32 %s67, 7
      %s72 = smul.u32 %s68, 4
      %s73 = smul.u32 %s72, 8
      %s74 = sadd.s32 %s73, %s71
      %s75 = scalar_lea.vmem %s0, %s74
      %v76 = vld [vmem:[%s75] ss:$8 sm:$0xf]
      %v77 = vlaneseq
      %vm78 = vcmp.ge.s32.totalorder %v77, 0
      %vm79 = vcmp.lt.s32.totalorder %v77, 512
      %vm80 = vmand %vm78, %vm79
      %s81 = sshra.s32 %s62, 3
      %s82 = sand.u32 %s62, 7
      %s83 = sshra.s32 %s62, 3
      %s84 = sand.u32 %s62, 7
      %s85 = smul.u32 %s81, 4
      %s86 = smul.u32 %s85, 8
      %s87 = sadd.s32 %s86, %s84
      %s88 = scalar_lea.vmem [#allocation2], %s87
      %89 = vst.msk [vmem:[%s88] ss:$8 sm:$0xf] %vm80, %v76
      %90 = vst.msk [vmem:[%s88] ss:$8 sm:$0x0] %vm80, %v76
    $region62: #{forward.4} parent=1 // loop_footer
      %s66 = sadd.s32 1, %s62
    $region63: #{forward.4} parent=1 // loop_footer_branch
      %61 = sbr.rel target = $region59
    $region64: #{forward.4} parent=1 // loop_exit
      _
    %v91 = vld [vmem:[#allocation2] sm:$0xff]
    %v92 = vld [vmem:[#allocation2 + $0x8] sm:$0xff]
    %v93 = vld [vmem:[#allocation2 + $0x10] sm:$0xff]
    %v94 = vld [vmem:[#allocation2 + $0x18] sm:$0xff]
    %v95 = vld [vmem:[#allocation2 + $0x20] sm:$0x3]
    %v96 = vld [vmem:[#allocation2 + $0x28] sm:$0x3]
    %v97 = vld [vmem:[#allocation2 + $0x30] sm:$0x3]
    %v98 = vld [vmem:[#allocation2 + $0x38] sm:$0x3]
    %v99 = vld [vmem:[%s2] sm:$0xff]
    %v100 = vld [vmem:[%s2 + $0x8] sm:$0x3]
    %102 = vset.pattern.permute.xlu0 0
    %103 = vperm.xlu0 %102, %v99
    %v104 = vpop.permute.xlu0 %103
    %107 = vset.pattern.permute.xlu0 0
    %108 = vperm.xlu0 %107, %v100
    %v109 = vpop.permute.xlu0 %108
    %v111 = vmul.f32 %v91, %v104
    %v112 = vmul.f32 %v92, %v104
    %v113 = vmul.f32 %v93, %v104
    %v114 = vmul.f32 %v94, %v104
    %v115 = vmul.f32 %v95, %v109
    %v116 = vmul.f32 %v96, %v109
    %v117 = vmul.f32 %v97, %v109
    %v118 = vmul.f32 %v98, %v109
    %vm119 = vcmask 1044480
    %v120 = vsel %vm119, %v111, -inf
    %v121 = vrot.slane %v120, 4
    %v122 = vmax.f32 %v120, %v121
    %v123 = vrot.slane %v122, 2
    %v124 = vmax.f32 %v122, %v123
    %v125 = vrot.slane %v124, 1
    %v126 = vmax.f32 %v124, %v125
    %v127 = vsel %vm119, %v112, -inf
    %v128 = vrot.slane %v127, 4
    %v129 = vmax.f32 %v127, %v128
    %v130 = vrot.slane %v129, 2
    %v131 = vmax.f32 %v129, %v130
    %v132 = vrot.slane %v131, 1
    %v133 = vmax.f32 %v131, %v132
    %v134 = vsel %vm119, %v113, -inf
    %v135 = vrot.slane %v134, 4
    %v136 = vmax.f32 %v134, %v135
    %v137 = vrot.slane %v136, 2
    %v138 = vmax.f32 %v136, %v137
    %v139 = vrot.slane %v138, 1
    %v140 = vmax.f32 %v138, %v139
    %v141 = vsel %vm119, %v114, -inf
    %v142 = vrot.slane %v141, 4
    %v143 = vmax.f32 %v141, %v142
    %v144 = vrot.slane %v143, 2
    %v145 = vmax.f32 %v143, %v144
    %v146 = vrot.slane %v145, 1
    %v147 = vmax.f32 %v145, %v146
    %v148 = vsel %vm119, %v111, 0.0
    %v149 = vrot.slane %v148, 4
    %v150 = vadd.f32 %v148, %v149
    %v151 = vrot.slane %v150, 2
    %v152 = vadd.f32 %v150, %v151
    %v153 = vrot.slane %v152, 1
    %v154 = vadd.f32 %v152, %v153
    %v155 = vsel %vm119, %v112, 0.0
    %v156 = vrot.slane %v155, 4
    %v157 = vadd.f32 %v155, %v156
    %v158 = vrot.slane %v157, 2
    %v159 = vadd.f32 %v157, %v158
    %v160 = vrot.slane %v159, 1
    %v161 = vadd.f32 %v159, %v160
    %v162 = vsel %vm119, %v113, 0.0
    %v163 = vrot.slane %v162, 4
    %v164 = vadd.f32 %v162, %v163
    %v165 = vrot.slane %v164, 2
    %v166 = vadd.f32 %v164, %v165
    %v167 = vrot.slane %v166, 1
    %v168 = vadd.f32 %v166, %v167
    %v169 = vsel %vm119, %v114, 0.0
    %v170 = vrot.slane %v169, 4
    %v171 = vadd.f32 %v169, %v170
    %v172 = vrot.slane %v171, 2
    %v173 = vadd.f32 %v171, %v172
    %v174 = vrot.slane %v173, 1
    %v175 = vadd.f32 %v173, %v174
    %v176 = vmul.f32 %v154, 0.2
    %v177 = vmul.f32 %v161, 0.2
    %v178 = vmul.f32 %v168, 0.2
    %v179 = vmul.f32 %v175, 0.2
    %vm180 = vcmask 1047557
    %v181 = vsel %vm180, %v111, -inf
    %vm182 = vcmask 1041408
    %v183 = vsel %vm182, %v115, -inf
    %v184 = vmax.f32 %v181, %v183
    %v185 = vrot.slane %v184, 4
    %v186 = vmax.f32 %v184, %v185
    %v187 = vrot.slane %v186, 2
    %v188 = vmax.f32 %v186, %v187
    %v189 = vrot.slane %v188, 1
    %v190 = vmax.f32 %v188, %v189
    %v191 = vsel %vm180, %v112, -inf
    %v192 = vsel %vm182, %v116, -inf
    %v193 = vmax.f32 %v191, %v192
    %v194 = vrot.slane %v193, 4
    %v195 = vmax.f32 %v193, %v194
    %v196 = vrot.slane %v195, 2
    %v197 = vmax.f32 %v195, %v196
    %v198 = vrot.slane %v197, 1
    %v199 = vmax.f32 %v197, %v198
    %v200 = vsel %vm180, %v113, -inf
    %v201 = vsel %vm182, %v117, -inf
    %v202 = vmax.f32 %v200, %v201
    %v203 = vrot.slane %v202, 4
    %v204 = vmax.f32 %v202, %v203
    %v205 = vrot.slane %v204, 2
    %v206 = vmax.f32 %v204, %v205
    %v207 = vrot.slane %v206, 1
    %v208 = vmax.f32 %v206, %v207
    %v209 = vsel %vm180, %v114, -inf
    %v210 = vsel %vm182, %v118, -inf
    %v211 = vmax.f32 %v209, %v210
    %v212 = vrot.slane %v211, 4
    %v213 = vmax.f32 %v211, %v212
    %v214 = vrot.slane %v213, 2
    %v215 = vmax.f32 %v213, %v214
    %v216 = vrot.slane %v215, 1
    %v217 = vmax.f32 %v215, %v216
    %vm226 = vcmask 1042432
    %v227 = vrot.slane %v111, 5
    %v228 = vrot.slane %v115, 5
    %v229 = vsel %vm226, %v227, %v228
    %v230 = vrot.slane %v112, 5
    %v231 = vrot.slane %v116, 5
    %v232 = vsel %vm226, %v230, %v231
    %v233 = vrot.slane %v113, 5
    %v234 = vrot.slane %v117, 5
    %v235 = vsel %vm226, %v233, %v234
    %v236 = vrot.slane %v114, 5
    %v237 = vrot.slane %v118, 5
    %v238 = vsel %vm226, %v236, %v237
    %v243 = vsel %vm119, %v229, 0.0
    %v244 = vrot.slane %v243, 4
    %v245 = vadd.f32 %v243, %v244
    %v246 = vrot.slane %v245, 2
    %v247 = vadd.f32 %v245, %v246
    %v248 = vrot.slane %v247, 1
    %v249 = vadd.f32 %v247, %v248
    %v250 = vsel %vm119, %v232, 0.0
    %v251 = vrot.slane %v250, 4
    %v252 = vadd.f32 %v250, %v251
    %v253 = vrot.slane %v252, 2
    %v254 = vadd.f32 %v252, %v253
    %v255 = vrot.slane %v254, 1
    %v256 = vadd.f32 %v254, %v255
    %v257 = vsel %vm119, %v235, 0.0
    %v258 = vrot.slane %v257, 4
    %v259 = vadd.f32 %v257, %v258
    %v260 = vrot.slane %v259, 2
    %v261 = vadd.f32 %v259, %v260
    %v262 = vrot.slane %v261, 1
    %v263 = vadd.f32 %v261, %v262
    %v264 = vsel %vm119, %v238, 0.0
    %v265 = vrot.slane %v264, 4
    %v266 = vadd.f32 %v264, %v265
    %v267 = vrot.slane %v266, 2
    %v268 = vadd.f32 %v266, %v267
    %v269 = vrot.slane %v268, 1
    %v270 = vadd.f32 %v268, %v269
    %v271 = vmul.f32 %v249, 0.2
    %v272 = vmul.f32 %v256, 0.2
    %v273 = vmul.f32 %v263, 0.2
    %v274 = vmul.f32 %v270, 0.2
    %vm275 = vcmask 1040384
    %v276 = vsel %vm275, %v126, %v190
    %v277 = vsel %vm275, %v133, %v199
    %v278 = vsel %vm275, %v140, %v208
    %v279 = vsel %vm275, %v147, %v217
    %v280 = vsel %vm275, %v176, %v271
    %v281 = vsel %vm275, %v177, %v272
    %v282 = vsel %vm275, %v178, %v273
    %v283 = vsel %vm275, %v179, %v274
    %v292 = vcombine.low %v276, %v277
    %v293 = vcombine.low %v278, %v279
    %v295 = vunpack.c.l.s4 1983009808
    %v296 = vunpack.c.0.s8 %v295
    %v297 = vlaneseq
    %v298 = vshrl.u32 %v297, 7
    %v299 = vsub.s32 %v296, %v298
    %v300 = vrot.slane %v292, %v299
    %v302 = vunpack.c.l.s4 1983009808
    %v303 = vunpack.c.0.s8 %v302
    %v304 = vlaneseq
    %v305 = vshrl.u32 %v304, 7
    %v306 = vsub.s32 %v303, %v305
    %v307 = vrot.slane %v293, %v306
    %v308 = vcombine.low %v300, %v307
    %v309 = vcombine.low %v280, %v281
    %v310 = vcombine.low %v282, %v283
    %v312 = vunpack.c.l.s4 1983009808
    %v313 = vunpack.c.0.s8 %v312
    %v314 = vlaneseq
    %v315 = vshrl.u32 %v314, 7
    %v316 = vsub.s32 %v313, %v315
    %v317 = vrot.slane %v309, %v316
    %v319 = vunpack.c.l.s4 1983009808
    %v320 = vunpack.c.0.s8 %v319
    %v321 = vlaneseq
    %v322 = vshrl.u32 %v321, 7
    %v323 = vsub.s32 %v320, %v322
    %v324 = vrot.slane %v310, %v323
    %v325 = vcombine.low %v317, %v324
    %328 = vst [vmem:[%s15] sm:$0xff] %v308
    %329 = vst [vmem:[%s15 + $0x8] sm:$0xff] %v325
    %v330 = vpack.c.bf16 %v115, %v111
    %v331 = vpack.c.bf16 %v116, %v112
    %v332 = vpack.c.bf16 %v117, %v113
    %v333 = vpack.c.bf16 %v118, %v114
    %v334 = vld [vmem:[%s8] sm:$0xff]
    %v335 = vld [vmem:[%s8 + $0x8] sm:$0xff]
    %v336 = vld [vmem:[%s8 + $0x10] sm:$0xff]
    %v337 = vld [vmem:[%s8 + $0x18] sm:$0xff]
    %v338 = vld [vmem:[%s8 + $0x20] sm:$0xff]
    %v339 = vld [vmem:[%s8 + $0x28] sm:$0xff]
    %v340 = vld [vmem:[%s8 + $0x30] sm:$0xff]
    %v341 = vld [vmem:[%s8 + $0x38] sm:$0xff]
    %v342 = vld [vmem:[%s8 + $0x40] sm:$0xff]
    %v343 = vld [vmem:[%s8 + $0x48] sm:$0xff]
    %v344 = vld [vmem:[%s8 + $0x50] sm:$0xff]
    %v345 = vld [vmem:[%s8 + $0x58] sm:$0xff]
    %v346 = vld [vmem:[%s8 + $0x60] sm:$0xff]
    %v347 = vld [vmem:[%s8 + $0x68] sm:$0xff]
    %v348 = vld [vmem:[%s8 + $0x70] sm:$0xff]
    %v349 = vld [vmem:[%s8 + $0x78] sm:$0xff]
    %v350 = vld [vmem:[%s8 + $0x80] sm:$0xff]
    %v351 = vld [vmem:[%s8 + $0x88] sm:$0xff]
    %v352 = vld [vmem:[%s8 + $0x90] sm:$0xff]
    %v353 = vld [vmem:[%s8 + $0x98] sm:$0xff]
    %v354 = vld [vmem:[%s8 + $0xa0] sm:$0xff]
    %v355 = vld [vmem:[%s8 + $0xa8] sm:$0xff]
    %v356 = vld [vmem:[%s8 + $0xb0] sm:$0xff]
    %v357 = vld [vmem:[%s8 + $0xb8] sm:$0xff]
    %v358 = vld [vmem:[%s8 + $0xc0] sm:$0xff]
    %v359 = vld [vmem:[%s8 + $0xc8] sm:$0xff]
    %v360 = vld [vmem:[%s8 + $0xd0] sm:$0xff]
    %v361 = vld [vmem:[%s8 + $0xd8] sm:$0xff]
    %v362 = vld [vmem:[%s8 + $0xe0] sm:$0xff]
    %v363 = vld [vmem:[%s8 + $0xe8] sm:$0xff]
    %v364 = vld [vmem:[%s8 + $0xf0] sm:$0xff]
    %v365 = vld [vmem:[%s8 + $0xf8] sm:$0xff]
    %v366 = vld [vmem:[%s8 + $0x100] sm:$0xff]
    %v367 = vld [vmem:[%s8 + $0x108] sm:$0xff]
    %v368 = vld [vmem:[%s8 + $0x110] sm:$0xff]
    %v369 = vld [vmem:[%s8 + $0x118] sm:$0xff]
    %v370 = vld [vmem:[%s8 + $0x120] sm:$0xff]
    %v371 = vld [vmem:[%s8 + $0x128] sm:$0xff]
    %v372 = vld [vmem:[%s8 + $0x130] sm:$0xff]
    %v373 = vld [vmem:[%s8 + $0x138] sm:$0xff]
    %v374 = vld [vmem:[%s8 + $0x140] sm:$0xff]
    %v375 = vld [vmem:[%s8 + $0x148] sm:$0xff]
    %v376 = vld [vmem:[%s8 + $0x150] sm:$0xff]
    %v377 = vld [vmem:[%s8 + $0x158] sm:$0xff]
    %v378 = vld [vmem:[%s8 + $0x160] sm:$0xff]
    %v379 = vld [vmem:[%s8 + $0x168] sm:$0xff]
    %v380 = vld [vmem:[%s8 + $0x170] sm:$0xff]
    %v381 = vld [vmem:[%s8 + $0x178] sm:$0xff]
    %v382 = vld [vmem:[%s8 + $0x180] sm:$0xff]
    %v383 = vld [vmem:[%s8 + $0x188] sm:$0xff]
    %v384 = vld [vmem:[%s8 + $0x190] sm:$0xff]
    %v385 = vld [vmem:[%s8 + $0x198] sm:$0xff]
    %v386 = vld [vmem:[%s8 + $0x1a0] sm:$0xff]
    %v387 = vld [vmem:[%s8 + $0x1a8] sm:$0xff]
    %v388 = vld [vmem:[%s8 + $0x1b0] sm:$0xff]
    %v389 = vld [vmem:[%s8 + $0x1b8] sm:$0xff]
    %v390 = vld [vmem:[%s8 + $0x1c0] sm:$0xff]
    %v391 = vld [vmem:[%s8 + $0x1c8] sm:$0xff]
    %v392 = vld [vmem:[%s8 + $0x1d0] sm:$0xff]
    %v393 = vld [vmem:[%s8 + $0x1d8] sm:$0xff]
    %v394 = vld [vmem:[%s8 + $0x1e0] sm:$0xff]
    %v395 = vld [vmem:[%s8 + $0x1e8] sm:$0xff]
    %v396 = vld [vmem:[%s8 + $0x1f0] sm:$0xff]
    %v397 = vld [vmem:[%s8 + $0x1f8] sm:$0xff]
    %v398 = vld [vmem:[%s8 + $0x200] sm:$0xff]
    %v399 = vld [vmem:[%s8 + $0x208] sm:$0xff]
    %v400 = vld [vmem:[%s8 + $0x210] sm:$0xff]
    %v401 = vld [vmem:[%s8 + $0x218] sm:$0xff]
    %v402 = vld [vmem:[%s8 + $0x220] sm:$0xff]
    %v403 = vld [vmem:[%s8 + $0x228] sm:$0xff]
    %v404 = vld [vmem:[%s8 + $0x230] sm:$0xff]
    %v405 = vld [vmem:[%s8 + $0x238] sm:$0xff]
    %v406 = vld [vmem:[%s8 + $0x240] sm:$0xff]
    %v407 = vld [vmem:[%s8 + $0x248] sm:$0xff]
    %v408 = vld [vmem:[%s8 + $0x250] sm:$0xff]
    %v409 = vld [vmem:[%s8 + $0x258] sm:$0xff]
    %v410 = vld [vmem:[%s8 + $0x260] sm:$0xff]
    %v411 = vld [vmem:[%s8 + $0x268] sm:$0xff]
    %v412 = vld [vmem:[%s8 + $0x270] sm:$0xff]
    %v413 = vld [vmem:[%s8 + $0x278] sm:$0xff]
    %v414 = vld [vmem:[%s8 + $0x280] sm:$0xff]
    %v415 = vld [vmem:[%s8 + $0x288] sm:$0xff]
    %v416 = vld [vmem:[%s8 + $0x290] sm:$0xff]
    %v417 = vld [vmem:[%s8 + $0x298] sm:$0xff]
    %v418 = vld [vmem:[%s8 + $0x2a0] sm:$0xff]
    %v419 = vld [vmem:[%s8 + $0x2a8] sm:$0xff]
    %v420 = vld [vmem:[%s8 + $0x2b0] sm:$0xff]
    %v421 = vld [vmem:[%s8 + $0x2b8] sm:$0xff]
    %v422 = vld [vmem:[%s8 + $0x2c0] sm:$0xff]
    %v423 = vld [vmem:[%s8 + $0x2c8] sm:$0xff]
    %v424 = vld [vmem:[%s8 + $0x2d0] sm:$0xff]
    %v425 = vld [vmem:[%s8 + $0x2d8] sm:$0xff]
    %v426 = vld [vmem:[%s8 + $0x2e0] sm:$0xff]
    %v427 = vld [vmem:[%s8 + $0x2e8] sm:$0xff]
    %v428 = vld [vmem:[%s8 + $0x2f0] sm:$0xff]
    %v429 = vld [vmem:[%s8 + $0x2f8] sm:$0xff]
    %v430 = vld [vmem:[%s8 + $0x300] sm:$0xff]
    %v431 = vld [vmem:[%s8 + $0x308] sm:$0xff]
    %v432 = vld [vmem:[%s8 + $0x310] sm:$0xff]
    %v433 = vld [vmem:[%s8 + $0x318] sm:$0xff]
    %v434 = vld [vmem:[%s8 + $0x320] sm:$0xff]
    %v435 = vld [vmem:[%s8 + $0x328] sm:$0xff]
    %v436 = vld [vmem:[%s8 + $0x330] sm:$0xff]
    %v437 = vld [vmem:[%s8 + $0x338] sm:$0xff]
    %v438 = vld [vmem:[%s8 + $0x340] sm:$0xff]
    %v439 = vld [vmem:[%s8 + $0x348] sm:$0xff]
    %v440 = vld [vmem:[%s8 + $0x350] sm:$0xff]
    %v441 = vld [vmem:[%s8 + $0x358] sm:$0xff]
    %v442 = vld [vmem:[%s8 + $0x360] sm:$0xff]
    %v443 = vld [vmem:[%s8 + $0x368] sm:$0xff]
    %v444 = vld [vmem:[%s8 + $0x370] sm:$0xff]
    %v445 = vld [vmem:[%s8 + $0x378] sm:$0xff]
    %v446 = vld [vmem:[%s8 + $0x380] sm:$0xff]
    %v447 = vld [vmem:[%s8 + $0x388] sm:$0xff]
    %v448 = vld [vmem:[%s8 + $0x390] sm:$0xff]
    %v449 = vld [vmem:[%s8 + $0x398] sm:$0xff]
    %v450 = vld [vmem:[%s8 + $0x3a0] sm:$0xff]
    %v451 = vld [vmem:[%s8 + $0x3a8] sm:$0xff]
    %v452 = vld [vmem:[%s8 + $0x3b0] sm:$0xff]
    %v453 = vld [vmem:[%s8 + $0x3b8] sm:$0xff]
    %v454 = vld [vmem:[%s8 + $0x3c0] sm:$0xff]
    %v455 = vld [vmem:[%s8 + $0x3c8] sm:$0xff]
    %v456 = vld [vmem:[%s8 + $0x3d0] sm:$0xff]
    %v457 = vld [vmem:[%s8 + $0x3d8] sm:$0xff]
    %v458 = vld [vmem:[%s8 + $0x3e0] sm:$0xff]
    %v459 = vld [vmem:[%s8 + $0x3e8] sm:$0xff]
    %v460 = vld [vmem:[%s8 + $0x3f0] sm:$0xff]
    %v461 = vld [vmem:[%s8 + $0x3f8] sm:$0xff]
    %v590 = vunpack.c.l.b16 %v334
    %v591 = vunpack.c.h.b16 %v334
    %v592 = vunpack.c.l.b16 %v335
    %v593 = vunpack.c.h.b16 %v335
    %v594 = vunpack.c.l.b16 %v336
    %v595 = vunpack.c.h.b16 %v336
    %v596 = vunpack.c.l.b16 %v337
    %v597 = vunpack.c.h.b16 %v337
    %v598 = vunpack.c.l.b16 %v338
    %v599 = vunpack.c.h.b16 %v338
    %v600 = vunpack.c.l.b16 %v339
    %v601 = vunpack.c.h.b16 %v339
    %v602 = vunpack.c.l.b16 %v340
    %v603 = vunpack.c.h.b16 %v340
    %v604 = vunpack.c.l.b16 %v341
    %v605 = vunpack.c.h.b16 %v341
    %v606 = vunpack.c.l.b16 %v342
    %v607 = vunpack.c.h.b16 %v342
    %v608 = vunpack.c.l.b16 %v343
    %v609 = vunpack.c.h.b16 %v343
    %v610 = vunpack.c.l.b16 %v344
    %v611 = vunpack.c.h.b16 %v344
    %v612 = vunpack.c.l.b16 %v345
    %v613 = vunpack.c.h.b16 %v345
    %v614 = vunpack.c.l.b16 %v346
    %v615 = vunpack.c.h.b16 %v346
    %v616 = vunpack.c.l.b16 %v347
    %v617 = vunpack.c.h.b16 %v347
    %v618 = vunpack.c.l.b16 %v348
    %v619 = vunpack.c.h.b16 %v348
    %v620 = vunpack.c.l.b16 %v349
    %v621 = vunpack.c.h.b16 %v349
    %v622 = vunpack.c.l.b16 %v350
    %v623 = vunpack.c.h.b16 %v350
    %v624 = vunpack.c.l.b16 %v351
    %v625 = vunpack.c.h.b16 %v351
    %v626 = vunpack.c.l.b16 %v352
    %v627 = vunpack.c.h.b16 %v352
    %v628 = vunpack.c.l.b16 %v353
    %v629 = vunpack.c.h.b16 %v353
    %v630 = vunpack.c.l.b16 %v354
    %v631 = vunpack.c.h.b16 %v354
    %v632 = vunpack.c.l.b16 %v355
    %v633 = vunpack.c.h.b16 %v355
    %v634 = vunpack.c.l.b16 %v356
    %v635 = vunpack.c.h.b16 %v356
    %v636 = vunpack.c.l.b16 %v357
    %v637 = vunpack.c.h.b16 %v357
    %v638 = vunpack.c.l.b16 %v358
    %v639 = vunpack.c.h.b16 %v358
    %v640 = vunpack.c.l.b16 %v359
    %v641 = vunpack.c.h.b16 %v359
    %v642 = vunpack.c.l.b16 %v360
    %v643 = vunpack.c.h.b16 %v360
    %v644 = vunpack.c.l.b16 %v361
    %v645 = vunpack.c.h.b16 %v361
    %v646 = vunpack.c.l.b16 %v362
    %v647 = vunpack.c.h.b16 %v362
    %v648 = vunpack.c.l.b16 %v363
    %v649 = vunpack.c.h.b16 %v363
    %v650 = vunpack.c.l.b16 %v364
    %v651 = vunpack.c.h.b16 %v364
    %v652 = vunpack.c.l.b16 %v365
    %v653 = vunpack.c.h.b16 %v365
    %v654 = vunpack.c.l.b16 %v366
    %v655 = vunpack.c.h.b16 %v366
    %v656 = vunpack.c.l.b16 %v367
    %v657 = vunpack.c.h.b16 %v367
    %v658 = vunpack.c.l.b16 %v368
    %v659 = vunpack.c.h.b16 %v368
    %v660 = vunpack.c.l.b16 %v369
    %v661 = vunpack.c.h.b16 %v369
    %v662 = vunpack.c.l.b16 %v370
    %v663 = vunpack.c.h.b16 %v370
    %v664 = vunpack.c.l.b16 %v371
    %v665 = vunpack.c.h.b16 %v371
    %v666 = vunpack.c.l.b16 %v372
    %v667 = vunpack.c.h.b16 %v372
    %v668 = vunpack.c.l.b16 %v373
    %v669 = vunpack.c.h.b16 %v373
    %v670 = vunpack.c.l.b16 %v374
    %v671 = vunpack.c.h.b16 %v374
    %v672 = vunpack.c.l.b16 %v375
    %v673 = vunpack.c.h.b16 %v375
    %v674 = vunpack.c.l.b16 %v376
    %v675 = vunpack.c.h.b16 %v376
    %v676 = vunpack.c.l.b16 %v377
    %v677 = vunpack.c.h.b16 %v377
    %v678 = vunpack.c.l.b16 %v378
    %v679 = vunpack.c.h.b16 %v378
    %v680 = vunpack.c.l.b16 %v379
    %v681 = vunpack.c.h.b16 %v379
    %v682 = vunpack.c.l.b16 %v380
    %v683 = vunpack.c.h.b16 %v380
    %v684 = vunpack.c.l.b16 %v381
    %v685 = vunpack.c.h.b16 %v381
    %v686 = vunpack.c.l.b16 %v382
    %v687 = vunpack.c.h.b16 %v382
    %v688 = vunpack.c.l.b16 %v383
    %v689 = vunpack.c.h.b16 %v383
    %v690 = vunpack.c.l.b16 %v384
    %v691 = vunpack.c.h.b16 %v384
    %v692 = vunpack.c.l.b16 %v385
    %v693 = vunpack.c.h.b16 %v385
    %v694 = vunpack.c.l.b16 %v386
    %v695 = vunpack.c.h.b16 %v386
    %v696 = vunpack.c.l.b16 %v387
    %v697 = vunpack.c.h.b16 %v387
    %v698 = vunpack.c.l.b16 %v388
    %v699 = vunpack.c.h.b16 %v388
    %v700 = vunpack.c.l.b16 %v389
    %v701 = vunpack.c.h.b16 %v389
    %v702 = vunpack.c.l.b16 %v390
    %v703 = vunpack.c.h.b16 %v390
    %v704 = vunpack.c.l.b16 %v391
    %v705 = vunpack.c.h.b16 %v391
    %v706 = vunpack.c.l.b16 %v392
    %v707 = vunpack.c.h.b16 %v392
    %v708 = vunpack.c.l.b16 %v393
    %v709 = vunpack.c.h.b16 %v393
    %v710 = vunpack.c.l.b16 %v394
    %v711 = vunpack.c.h.b16 %v394
    %v712 = vunpack.c.l.b16 %v395
    %v713 = vunpack.c.h.b16 %v395
    %v714 = vunpack.c.l.b16 %v396
    %v715 = vunpack.c.h.b16 %v396
    %v716 = vunpack.c.l.b16 %v397
    %v717 = vunpack.c.h.b16 %v397
    %v718 = vunpack.c.l.b16 %v398
    %v719 = vunpack.c.h.b16 %v398
    %v720 = vunpack.c.l.b16 %v399
    %v721 = vunpack.c.h.b16 %v399
    %v722 = vunpack.c.l.b16 %v400
    %v723 = vunpack.c.h.b16 %v400
    %v724 = vunpack.c.l.b16 %v401
    %v725 = vunpack.c.h.b16 %v401
    %v726 = vunpack.c.l.b16 %v402
    %v727 = vunpack.c.h.b16 %v402
    %v728 = vunpack.c.l.b16 %v403
    %v729 = vunpack.c.h.b16 %v403
    %v730 = vunpack.c.l.b16 %v404
    %v731 = vunpack.c.h.b16 %v404
    %v732 = vunpack.c.l.b16 %v405
    %v733 = vunpack.c.h.b16 %v405
    %v734 = vunpack.c.l.b16 %v406
    %v735 = vunpack.c.h.b16 %v406
    %v736 = vunpack.c.l.b16 %v407
    %v737 = vunpack.c.h.b16 %v407
    %v738 = vunpack.c.l.b16 %v408
    %v739 = vunpack.c.h.b16 %v408
    %v740 = vunpack.c.l.b16 %v409
    %v741 = vunpack.c.h.b16 %v409
    %v742 = vunpack.c.l.b16 %v410
    %v743 = vunpack.c.h.b16 %v410
    %v744 = vunpack.c.l.b16 %v411
    %v745 = vunpack.c.h.b16 %v411
    %v746 = vunpack.c.l.b16 %v412
    %v747 = vunpack.c.h.b16 %v412
    %v748 = vunpack.c.l.b16 %v413
    %v749 = vunpack.c.h.b16 %v413
    %v750 = vunpack.c.l.b16 %v414
    %v751 = vunpack.c.h.b16 %v414
    %v752 = vunpack.c.l.b16 %v415
    %v753 = vunpack.c.h.b16 %v415
    %v754 = vunpack.c.l.b16 %v416
    %v755 = vunpack.c.h.b16 %v416
    %v756 = vunpack.c.l.b16 %v417
    %v757 = vunpack.c.h.b16 %v417
    %v758 = vunpack.c.l.b16 %v418
    %v759 = vunpack.c.h.b16 %v418
    %v760 = vunpack.c.l.b16 %v419
    %v761 = vunpack.c.h.b16 %v419
    %v762 = vunpack.c.l.b16 %v420
    %v763 = vunpack.c.h.b16 %v420
    %v764 = vunpack.c.l.b16 %v421
    %v765 = vunpack.c.h.b16 %v421
    %v766 = vunpack.c.l.b16 %v422
    %v767 = vunpack.c.h.b16 %v422
    %v768 = vunpack.c.l.b16 %v423
    %v769 = vunpack.c.h.b16 %v423
    %v770 = vunpack.c.l.b16 %v424
    %v771 = vunpack.c.h.b16 %v424
    %v772 = vunpack.c.l.b16 %v425
    %v773 = vunpack.c.h.b16 %v425
    %v774 = vunpack.c.l.b16 %v426
    %v775 = vunpack.c.h.b16 %v426
    %v776 = vunpack.c.l.b16 %v427
    %v777 = vunpack.c.h.b16 %v427
    %v778 = vunpack.c.l.b16 %v428
    %v779 = vunpack.c.h.b16 %v428
    %v780 = vunpack.c.l.b16 %v429
    %v781 = vunpack.c.h.b16 %v429
    %v782 = vunpack.c.l.b16 %v430
    %v783 = vunpack.c.h.b16 %v430
    %v784 = vunpack.c.l.b16 %v431
    %v785 = vunpack.c.h.b16 %v431
    %v786 = vunpack.c.l.b16 %v432
    %v787 = vunpack.c.h.b16 %v432
    %v788 = vunpack.c.l.b16 %v433
    %v789 = vunpack.c.h.b16 %v433
    %v790 = vunpack.c.l.b16 %v434
    %v791 = vunpack.c.h.b16 %v434
    %v792 = vunpack.c.l.b16 %v435
    %v793 = vunpack.c.h.b16 %v435
    %v794 = vunpack.c.l.b16 %v436
    %v795 = vunpack.c.h.b16 %v436
    %v796 = vunpack.c.l.b16 %v437
    %v797 = vunpack.c.h.b16 %v437
    %v798 = vunpack.c.l.b16 %v438
    %v799 = vunpack.c.h.b16 %v438
    %v800 = vunpack.c.l.b16 %v439
    %v801 = vunpack.c.h.b16 %v439
    %v802 = vunpack.c.l.b16 %v440
    %v803 = vunpack.c.h.b16 %v440
    %v804 = vunpack.c.l.b16 %v441
    %v805 = vunpack.c.h.b16 %v441
    %v806 = vunpack.c.l.b16 %v442
    %v807 = vunpack.c.h.b16 %v442
    %v808 = vunpack.c.l.b16 %v443
    %v809 = vunpack.c.h.b16 %v443
    %v810 = vunpack.c.l.b16 %v444
    %v811 = vunpack.c.h.b16 %v444
    %v812 = vunpack.c.l.b16 %v445
    %v813 = vunpack.c.h.b16 %v445
    %v814 = vunpack.c.l.b16 %v446
    %v815 = vunpack.c.h.b16 %v446
    %v816 = vunpack.c.l.b16 %v447
    %v817 = vunpack.c.h.b16 %v447
    %v818 = vunpack.c.l.b16 %v448
    %v819 = vunpack.c.h.b16 %v448
    %v820 = vunpack.c.l.b16 %v449
    %v821 = vunpack.c.h.b16 %v449
    %v822 = vunpack.c.l.b16 %v450
    %v823 = vunpack.c.h.b16 %v450
    %v824 = vunpack.c.l.b16 %v451
    %v825 = vunpack.c.h.b16 %v451
    %v826 = vunpack.c.l.b16 %v452
    %v827 = vunpack.c.h.b16 %v452
    %v828 = vunpack.c.l.b16 %v453
    %v829 = vunpack.c.h.b16 %v453
    %v830 = vunpack.c.l.b16 %v454
    %v831 = vunpack.c.h.b16 %v454
    %v832 = vunpack.c.l.b16 %v455
    %v833 = vunpack.c.h.b16 %v455
    %v834 = vunpack.c.l.b16 %v456
    %v835 = vunpack.c.h.b16 %v456
    %v836 = vunpack.c.l.b16 %v457
    %v837 = vunpack.c.h.b16 %v457
    %v838 = vunpack.c.l.b16 %v458
    %v839 = vunpack.c.h.b16 %v458
    %v840 = vunpack.c.l.b16 %v459
    %v841 = vunpack.c.h.b16 %v459
    %v842 = vunpack.c.l.b16 %v460
    %v843 = vunpack.c.h.b16 %v460
    %v844 = vunpack.c.l.b16 %v461
    %v845 = vunpack.c.h.b16 %v461
    %v846 = vpack.c.b16 %v594, %v590
    %v847 = vpack.c.b16 %v595, %v591
    %v848 = vpack.c.b16 %v596, %v592
    %v849 = vpack.c.b16 %v597, %v593
    %v850 = vpack.c.b16 %v602, %v598
    %v851 = vpack.c.b16 %v603, %v599
    %v852 = vpack.c.b16 %v604, %v600
    %v853 = vpack.c.b16 %v605, %v601
    %v854 = vpack.c.b16 %v610, %v606
    %v855 = vpack.c.b16 %v611, %v607
    %v856 = vpack.c.b16 %v612, %v608
    %v857 = vpack.c.b16 %v613, %v609
    %v858 = vpack.c.b16 %v618, %v614
    %v859 = vpack.c.b16 %v619, %v615
    %v860 = vpack.c.b16 %v620, %v616
    %v861 = vpack.c.b16 %v621, %v617
    %v862 = vpack.c.b16 %v626, %v622
    %v863 = vpack.c.b16 %v627, %v623
    %v864 = vpack.c.b16 %v628, %v624
    %v865 = vpack.c.b16 %v629, %v625
    %v866 = vpack.c.b16 %v634, %v630
    %v867 = vpack.c.b16 %v635, %v631
    %v868 = vpack.c.b16 %v636, %v632
    %v869 = vpack.c.b16 %v637, %v633
    %v870 = vpack.c.b16 %v642, %v638
    %v871 = vpack.c.b16 %v643, %v639
    %v872 = vpack.c.b16 %v644, %v640
    %v873 = vpack.c.b16 %v645, %v641
    %v874 = vpack.c.b16 %v650, %v646
    %v875 = vpack.c.b16 %v651, %v647
    %v876 = vpack.c.b16 %v652, %v648
    %v877 = vpack.c.b16 %v653, %v649
    %v878 = vpack.c.b16 %v658, %v654
    %v879 = vpack.c.b16 %v659, %v655
    %v880 = vpack.c.b16 %v660, %v656
    %v881 = vpack.c.b16 %v661, %v657
    %v882 = vpack.c.b16 %v666, %v662
    %v883 = vpack.c.b16 %v667, %v663
    %v884 = vpack.c.b16 %v668, %v664
    %v885 = vpack.c.b16 %v669, %v665
    %v886 = vpack.c.b16 %v674, %v670
    %v887 = vpack.c.b16 %v675, %v671
    %v888 = vpack.c.b16 %v676, %v672
    %v889 = vpack.c.b16 %v677, %v673
    %v890 = vpack.c.b16 %v682, %v678
    %v891 = vpack.c.b16 %v683, %v679
    %v892 = vpack.c.b16 %v684, %v680
    %v893 = vpack.c.b16 %v685, %v681
    %v894 = vpack.c.b16 %v690, %v686
    %v895 = vpack.c.b16 %v691, %v687
    %v896 = vpack.c.b16 %v692, %v688
    %v897 = vpack.c.b16 %v693, %v689
    %v898 = vpack.c.b16 %v698, %v694
    %v899 = vpack.c.b16 %v699, %v695
    %v900 = vpack.c.b16 %v700, %v696
    %v901 = vpack.c.b16 %v701, %v697
    %v902 = vpack.c.b16 %v706, %v702
    %v903 = vpack.c.b16 %v707, %v703
    %v904 = vpack.c.b16 %v708, %v704
    %v905 = vpack.c.b16 %v709, %v705
    %v906 = vpack.c.b16 %v714, %v710
    %v907 = vpack.c.b16 %v715, %v711
    %v908 = vpack.c.b16 %v716, %v712
    %v909 = vpack.c.b16 %v717, %v713
    %v910 = vpack.c.b16 %v722, %v718
    %v911 = vpack.c.b16 %v723, %v719
    %v912 = vpack.c.b16 %v724, %v720
    %v913 = vpack.c.b16 %v725, %v721
    %v914 = vpack.c.b16 %v730, %v726
    %v915 = vpack.c.b16 %v731, %v727
    %v916 = vpack.c.b16 %v732, %v728
    %v917 = vpack.c.b16 %v733, %v729
    %v918 = vpack.c.b16 %v738, %v734
    %v919 = vpack.c.b16 %v739, %v735
    %v920 = vpack.c.b16 %v740, %v736
    %v921 = vpack.c.b16 %v741, %v737
    %v922 = vpack.c.b16 %v746, %v742
    %v923 = vpack.c.b16 %v747, %v743
    %v924 = vpack.c.b16 %v748, %v744
    %v925 = vpack.c.b16 %v749, %v745
    %v926 = vpack.c.b16 %v754, %v750
    %v927 = vpack.c.b16 %v755, %v751
    %v928 = vpack.c.b16 %v756, %v752
    %v929 = vpack.c.b16 %v757, %v753
    %v930 = vpack.c.b16 %v762, %v758
    %v931 = vpack.c.b16 %v763, %v759
    %v932 = vpack.c.b16 %v764, %v760
    %v933 = vpack.c.b16 %v765, %v761
    %v934 = vpack.c.b16 %v770, %v766
    %v935 = vpack.c.b16 %v771, %v767
    %v936 = vpack.c.b16 %v772, %v768
    %v937 = vpack.c.b16 %v773, %v769
    %v938 = vpack.c.b16 %v778, %v774
    %v939 = vpack.c.b16 %v779, %v775
    %v940 = vpack.c.b16 %v780, %v776
    %v941 = vpack.c.b16 %v781, %v777
    %v942 = vpack.c.b16 %v786, %v782
    %v943 = vpack.c.b16 %v787, %v783
    %v944 = vpack.c.b16 %v788, %v784
    %v945 = vpack.c.b16 %v789, %v785
    %v946 = vpack.c.b16 %v794, %v790
    %v947 = vpack.c.b16 %v795, %v791
    %v948 = vpack.c.b16 %v796, %v792
    %v949 = vpack.c.b16 %v797, %v793
    %v950 = vpack.c.b16 %v802, %v798
    %v951 = vpack.c.b16 %v803, %v799
    %v952 = vpack.c.b16 %v804, %v800
    %v953 = vpack.c.b16 %v805, %v801
    %v954 = vpack.c.b16 %v810, %v806
    %v955 = vpack.c.b16 %v811, %v807
    %v956 = vpack.c.b16 %v812, %v808
    %v957 = vpack.c.b16 %v813, %v809
    %v958 = vpack.c.b16 %v818, %v814
    %v959 = vpack.c.b16 %v819, %v815
    %v960 = vpack.c.b16 %v820, %v816
    %v961 = vpack.c.b16 %v821, %v817
    %v962 = vpack.c.b16 %v826, %v822
    %v963 = vpack.c.b16 %v827, %v823
    %v964 = vpack.c.b16 %v828, %v824
    %v965 = vpack.c.b16 %v829, %v825
    %v966 = vpack.c.b16 %v834, %v830
    %v967 = vpack.c.b16 %v835, %v831
    %v968 = vpack.c.b16 %v836, %v832
    %v969 = vpack.c.b16 %v837, %v833
    %v970 = vpack.c.b16 %v842, %v838
    %v971 = vpack.c.b16 %v843, %v839
    %v972 = vpack.c.b16 %v844, %v840
    %v973 = vpack.c.b16 %v845, %v841
    %1102 = vmatprep.subr.bf16.mxu0 %v847
    %1103 = vmatpush1.bf16.msra.mxu0 %v846
    %1104 = vmatprep.subr.bf16.mxu0 %v851
    %1105 = vmatpush1.bf16.msra.mxu0 %v850
    %1106 = vmatprep.subr.bf16.mxu0 %v855
    %1107 = vmatpush1.bf16.msra.mxu0 %v854
    %1108 = vmatprep.subr.bf16.mxu0 %v859
    %1109 = vmatpush1.bf16.msra.mxu0 %v858
    %1110 = vmatprep.subr.bf16.mxu0 %v863
    %1111 = vmatpush1.bf16.msra.mxu0 %v862
    %1112 = vmatprep.subr.bf16.mxu0 %v867
    %1113 = vmatpush1.bf16.msra.mxu0 %v866
    %1114 = vmatprep.subr.bf16.mxu0 %v871
    %1115 = vmatpush1.bf16.msra.mxu0 %v870
    %1116 = vmatprep.subr.bf16.mxu0 %v875
    %1117 = vmatpush1.bf16.msra.mxu0 %v874
    %1118 = vmatprep.subr.bf16.mxu0 %v879
    %1119 = vmatpush1.bf16.msra.mxu0 %v878
    %1120 = vmatprep.subr.bf16.mxu0 %v883
    %1121 = vmatpush1.bf16.msra.mxu0 %v882
    %1122 = vmatprep.subr.bf16.mxu0 %v887
    %1123 = vmatpush1.bf16.msra.mxu0 %v886
    %1124 = vmatprep.subr.bf16.mxu0 %v891
    %1125 = vmatpush1.bf16.msra.mxu0 %v890
    %1126 = vmatprep.subr.bf16.mxu0 %v895
    %1127 = vmatpush1.bf16.msra.mxu0 %v894
    %1128 = vmatprep.subr.bf16.mxu0 %v899
    %1129 = vmatpush1.bf16.msra.mxu0 %v898
    %1130 = vmatprep.subr.bf16.mxu0 %v903
    %1131 = vmatpush1.bf16.msra.mxu0 %v902
    %1132 = vmatprep.subr.bf16.mxu0 %v907
    %1133 = vmatpush1.bf16.msra.mxu0 %v906
    %1134 = vmatprep.mubr.bf16.mxu0 %v331
    %1135 = vmatmul.mubr.bf16.gmra.mrb[0].mxu0 %v330
    %v1136 = vpop.f32.mrb[0].mxu0
    %v1137 = vadd.f32 0.0, %v1136
    %v1138 = vpop.f32.mrb[0].mxu0
    %v1139 = vadd.f32 0.0, %v1138
    %v1140 = vpop.f32.mrb[0].mxu0
    %v1141 = vadd.f32 0.0, %v1140
    %v1142 = vpop.f32.mrb[0].mxu0
    %v1143 = vadd.f32 0.0, %v1142
    %1144 = vdwg.mxu0
    %1145 = vmatprep.subr.bf16.mxu0 %v911
    %1146 = vmatpush1.bf16.msra.mxu0 %v910
    %1147 = vmatprep.subr.bf16.mxu0 %v915
    %1148 = vmatpush1.bf16.msra.mxu0 %v914
    %1149 = vmatprep.subr.bf16.mxu0 %v919
    %1150 = vmatpush1.bf16.msra.mxu0 %v918
    %1151 = vmatprep.subr.bf16.mxu0 %v923
    %1152 = vmatpush1.bf16.msra.mxu0 %v922
    %1153 = vmatprep.subr.bf16.mxu0 %v927
    %1154 = vmatpush1.bf16.msra.mxu0 %v926
    %1155 = vmatprep.subr.bf16.mxu0 %v931
    %1156 = vmatpush1.bf16.msra.mxu0 %v930
    %1157 = vmatprep.subr.bf16.mxu0 %v935
    %1158 = vmatpush1.bf16.msra.mxu0 %v934
    %1159 = vmatprep.subr.bf16.mxu0 %v939
    %1160 = vmatpush1.bf16.msra.mxu0 %v938
    %1161 = vmatprep.subr.bf16.mxu0 %v943
    %1162 = vmatpush1.bf16.msra.mxu0 %v942
    %1163 = vmatprep.subr.bf16.mxu0 %v947
    %1164 = vmatpush1.bf16.msra.mxu0 %v946
    %1165 = vmatprep.subr.bf16.mxu0 %v951
    %1166 = vmatpush1.bf16.msra.mxu0 %v950
    %1167 = vmatprep.subr.bf16.mxu0 %v955
    %1168 = vmatpush1.bf16.msra.mxu0 %v954
    %1169 = vmatprep.subr.bf16.mxu0 %v959
    %1170 = vmatpush1.bf16.msra.mxu0 %v958
    %1171 = vmatprep.subr.bf16.mxu0 %v963
    %1172 = vmatpush1.bf16.msra.mxu0 %v962
    %1173 = vmatprep.subr.bf16.mxu0 %v967
    %1174 = vmatpush1.bf16.msra.mxu0 %v966
    %1175 = vmatprep.subr.bf16.mxu0 %v971
    %1176 = vmatpush1.bf16.msra.mxu0 %v970
    %1177 = vmatprep.mubr.bf16.mxu0 %v333
    %1178 = vmatmul.mubr.bf16.gmra.mrb[0].mxu0 %v332
    %v1179 = vpop.f32.mrb[0].mxu0
    %v1180 = vadd.f32 %v1137, %v1179
    %v1181 = vpop.f32.mrb[0].mxu0
    %v1182 = vadd.f32 %v1139, %v1181
    %v1183 = vpop.f32.mrb[0].mxu0
    %v1184 = vadd.f32 %v1141, %v1183
    %v1185 = vpop.f32.mrb[0].mxu0
    %v1186 = vadd.f32 %v1143, %v1185
    %1187 = vdwg.mxu0
    %1188 = vmatprep.subr.bf16.mxu0 %v849
    %1189 = vmatpush1.bf16.msra.mxu0 %v848
    %1190 = vmatprep.subr.bf16.mxu0 %v853
    %1191 = vmatpush1.bf16.msra.mxu0 %v852
    %1192 = vmatprep.subr.bf16.mxu0 %v857
    %1193 = vmatpush1.bf16.msra.mxu0 %v856
    %1194 = vmatprep.subr.bf16.mxu0 %v861
    %1195 = vmatpush1.bf16.msra.mxu0 %v860
    %1196 = vmatprep.subr.bf16.mxu0 %v865
    %1197 = vmatpush1.bf16.msra.mxu0 %v864
    %1198 = vmatprep.subr.bf16.mxu0 %v869
    %1199 = vmatpush1.bf16.msra.mxu0 %v868
    %1200 = vmatprep.subr.bf16.mxu0 %v873
    %1201 = vmatpush1.bf16.msra.mxu0 %v872
    %1202 = vmatprep.subr.bf16.mxu0 %v877
    %1203 = vmatpush1.bf16.msra.mxu0 %v876
    %1204 = vmatprep.subr.bf16.mxu0 %v881
    %1205 = vmatpush1.bf16.msra.mxu0 %v880
    %1206 = vmatprep.subr.bf16.mxu0 %v885
    %1207 = vmatpush1.bf16.msra.mxu0 %v884
    %1208 = vmatprep.subr.bf16.mxu0 %v889
    %1209 = vmatpush1.bf16.msra.mxu0 %v888
    %1210 = vmatprep.subr.bf16.mxu0 %v893
    %1211 = vmatpush1.bf16.msra.mxu0 %v892
    %1212 = vmatprep.subr.bf16.mxu0 %v897
    %1213 = vmatpush1.bf16.msra.mxu0 %v896
    %1214 = vmatprep.subr.bf16.mxu0 %v901
    %1215 = vmatpush1.bf16.msra.mxu0 %v900
    %1216 = vmatprep.subr.bf16.mxu0 %v905
    %1217 = vmatpush1.bf16.msra.mxu0 %v904
    %1218 = vmatprep.subr.bf16.mxu0 %v909
    %1219 = vmatpush1.bf16.msra.mxu0 %v908
    %1220 = vmatprep.mubr.bf16.mxu0 %v331
    %1221 = vmatmul.mubr.bf16.gmra.mrb[0].mxu0 %v330
    %v1222 = vpop.f32.mrb[0].mxu0
    %v1223 = vadd.f32 0.0, %v1222
    %v1224 = vpop.f32.mrb[0].mxu0
    %v1225 = vadd.f32 0.0, %v1224
    %v1226 = vpop.f32.mrb[0].mxu0
    %v1227 = vadd.f32 0.0, %v1226
    %v1228 = vpop.f32.mrb[0].mxu0
    %v1229 = vadd.f32 0.0, %v1228
    %1230 = vdwg.mxu0
    %1231 = vmatprep.subr.bf16.mxu0 %v913
    %1232 = vmatpush1.bf16.msra.mxu0 %v912
    %1233 = vmatprep.subr.bf16.mxu0 %v917
    %1234 = vmatpush1.bf16.msra.mxu0 %v916
    %1235 = vmatprep.subr.bf16.mxu0 %v921
    %1236 = vmatpush1.bf16.msra.mxu0 %v920
    %1237 = vmatprep.subr.bf16.mxu0 %v925
    %1238 = vmatpush1.bf16.msra.mxu0 %v924
    %1239 = vmatprep.subr.bf16.mxu0 %v929
    %1240 = vmatpush1.bf16.msra.mxu0 %v928
    %1241 = vmatprep.subr.bf16.mxu0 %v933
    %1242 = vmatpush1.bf16.msra.mxu0 %v932
    %1243 = vmatprep.subr.bf16.mxu0 %v937
    %1244 = vmatpush1.bf16.msra.mxu0 %v936
    %1245 = vmatprep.subr.bf16.mxu0 %v941
    %1246 = vmatpush1.bf16.msra.mxu0 %v940
    %1247 = vmatprep.subr.bf16.mxu0 %v945
    %1248 = vmatpush1.bf16.msra.mxu0 %v944
    %1249 = vmatprep.subr.bf16.mxu0 %v949
    %1250 = vmatpush1.bf16.msra.mxu0 %v948
    %1251 = vmatprep.subr.bf16.mxu0 %v953
    %1252 = vmatpush1.bf16.msra.mxu0 %v952
    %1253 = vmatprep.subr.bf16.mxu0 %v957
    %1254 = vmatpush1.bf16.msra.mxu0 %v956
    %1255 = vmatprep.subr.bf16.mxu0 %v961
    %1256 = vmatpush1.bf16.msra.mxu0 %v960
    %1257 = vmatprep.subr.bf16.mxu0 %v965
    %1258 = vmatpush1.bf16.msra.mxu0 %v964
    %1259 = vmatprep.subr.bf16.mxu0 %v969
    %1260 = vmatpush1.bf16.msra.mxu0 %v968
    %1261 = vmatprep.subr.bf16.mxu0 %v973
    %1262 = vmatpush1.bf16.msra.mxu0 %v972
    %1263 = vmatprep.mubr.bf16.mxu0 %v333
    %1264 = vmatmul.mubr.bf16.gmra.mrb[0].mxu0 %v332
    %v1265 = vpop.f32.mrb[0].mxu0
    %v1266 = vadd.f32 %v1223, %v1265
    %v1267 = vpop.f32.mrb[0].mxu0
    %v1268 = vadd.f32 %v1225, %v1267
    %v1269 = vpop.f32.mrb[0].mxu0
    %v1270 = vadd.f32 %v1227, %v1269
    %v1271 = vpop.f32.mrb[0].mxu0
    %v1272 = vadd.f32 %v1229, %v1271
    %1273 = vdwg.mxu0
    %v1274 = vpack.c.bf16 %v1184, %v1180
    %v1275 = vpack.c.bf16 %v1186, %v1182
    %v1276 = vpack.c.bf16 %v1270, %v1266
    %v1277 = vpack.c.bf16 %v1272, %v1268
    %v1278 = vld [vmem:[%s9] sm:$0xf]
    %v1279 = vld [vmem:[%s9 + $0x4] sm:$0xf]
    %v1280 = vld [vmem:[%s9 + $0x8] sm:$0xf]
    %v1281 = vld [vmem:[%s9 + $0xc] sm:$0xf]
    %v1282 = vld [vmem:[%s9 + $0x10] sm:$0xf]
    %v1283 = vld [vmem:[%s9 + $0x14] sm:$0xf]
    %v1284 = vld [vmem:[%s9 + $0x18] sm:$0xf]
    %v1285 = vld [vmem:[%s9 + $0x1c] sm:$0xf]
    %v1286 = vld [vmem:[%s9 + $0x20] sm:$0xf]
    %v1287 = vld [vmem:[%s9 + $0x24] sm:$0xf]
    %v1288 = vld [vmem:[%s9 + $0x28] sm:$0xf]
    %v1289 = vld [vmem:[%s9 + $0x2c] sm:$0xf]
    %v1290 = vld [vmem:[%s9 + $0x30] sm:$0xf]
    %v1291 = vld [vmem:[%s9 + $0x34] sm:$0xf]
    %v1292 = vld [vmem:[%s9 + $0x38] sm:$0xf]
    %v1293 = vld [vmem:[%s9 + $0x3c] sm:$0xf]
    %v1294 = vld [vmem:[%s9 + $0x40] sm:$0xf]
    %v1295 = vld [vmem:[%s9 + $0x44] sm:$0xf]
    %v1296 = vld [vmem:[%s9 + $0x48] sm:$0xf]
    %v1297 = vld [vmem:[%s9 + $0x4c] sm:$0xf]
    %v1298 = vld [vmem:[%s9 + $0x50] sm:$0xf]
    %v1299 = vld [vmem:[%s9 + $0x54] sm:$0xf]
    %v1300 = vld [vmem:[%s9 + $0x58] sm:$0xf]
    %v1301 = vld [vmem:[%s9 + $0x5c] sm:$0xf]
    %v1302 = vld [vmem:[%s9 + $0x60] sm:$0xf]
    %v1303 = vld [vmem:[%s9 + $0x64] sm:$0xf]
    %v1304 = vld [vmem:[%s9 + $0x68] sm:$0xf]
    %v1305 = vld [vmem:[%s9 + $0x6c] sm:$0xf]
    %v1306 = vld [vmem:[%s9 + $0x70] sm:$0xf]
    %v1307 = vld [vmem:[%s9 + $0x74] sm:$0xf]
    %v1308 = vld [vmem:[%s9 + $0x78] sm:$0xf]
    %v1309 = vld [vmem:[%s9 + $0x7c] sm:$0xf]
    %v1310 = vld [vmem:[%s9 + $0x80] sm:$0xf]
    %v1311 = vld [vmem:[%s9 + $0x84] sm:$0xf]
    %v1312 = vld [vmem:[%s9 + $0x88] sm:$0xf]
    %v1313 = vld [vmem:[%s9 + $0x8c] sm:$0xf]
    %v1314 = vld [vmem:[%s9 + $0x90] sm:$0xf]
    %v1315 = vld [vmem:[%s9 + $0x94] sm:$0xf]
    %v1316 = vld [vmem:[%s9 + $0x98] sm:$0xf]
    %v1317 = vld [vmem:[%s9 + $0x9c] sm:$0xf]
    %v1318 = vld [vmem:[%s9 + $0xa0] sm:$0xf]
    %v1319 = vld [vmem:[%s9 + $0xa4] sm:$0xf]
    %v1320 = vld [vmem:[%s9 + $0xa8] sm:$0xf]
    %v1321 = vld [vmem:[%s9 + $0xac] sm:$0xf]
    %v1322 = vld [vmem:[%s9 + $0xb0] sm:$0xf]
    %v1323 = vld [vmem:[%s9 + $0xb4] sm:$0xf]
    %v1324 = vld [vmem:[%s9 + $0xb8] sm:$0xf]
    %v1325 = vld [vmem:[%s9 + $0xbc] sm:$0xf]
    %v1326 = vld [vmem:[%s9 + $0xc0] sm:$0xf]
    %v1327 = vld [vmem:[%s9 + $0xc4] sm:$0xf]
    %v1328 = vld [vmem:[%s9 + $0xc8] sm:$0xf]
    %v1329 = vld [vmem:[%s9 + $0xcc] sm:$0xf]
    %v1330 = vld [vmem:[%s9 + $0xd0] sm:$0xf]
    %v1331 = vld [vmem:[%s9 + $0xd4] sm:$0xf]
    %v1332 = vld [vmem:[%s9 + $0xd8] sm:$0xf]
    %v1333 = vld [vmem:[%s9 + $0xdc] sm:$0xf]
    %v1334 = vld [vmem:[%s9 + $0xe0] sm:$0xf]
    %v1335 = vld [vmem:[%s9 + $0xe4] sm:$0xf]
    %v1336 = vld [vmem:[%s9 + $0xe8] sm:$0xf]
    %v1337 = vld [vmem:[%s9 + $0xec] sm:$0xf]
    %v1338 = vld [vmem:[%s9 + $0xf0] sm:$0xf]
    %v1339 = vld [vmem:[%s9 + $0xf4] sm:$0xf]
    %v1340 = vld [vmem:[%s9 + $0xf8] sm:$0xf]
    %v1341 = vld [vmem:[%s9 + $0xfc] sm:$0xf]
    %v1406 = vunpack.c.l.b16 %v1278
    %v1407 = vunpack.c.l.b16 %v1279
    %v1408 = vunpack.c.l.b16 %v1280
    %v1409 = vunpack.c.l.b16 %v1281
    %v1410 = vunpack.c.l.b16 %v1282
    %v1411 = vunpack.c.l.b16 %v1283
    %v1412 = vunpack.c.l.b16 %v1284
    %v1413 = vunpack.c.l.b16 %v1285
    %v1414 = vunpack.c.l.b16 %v1286
    %v1415 = vunpack.c.l.b16 %v1287
    %v1416 = vunpack.c.l.b16 %v1288
    %v1417 = vunpack.c.l.b16 %v1289
    %v1418 = vunpack.c.l.b16 %v1290
    %v1419 = vunpack.c.l.b16 %v1291
    %v1420 = vunpack.c.l.b16 %v1292
    %v1421 = vunpack.c.l.b16 %v1293
    %v1422 = vunpack.c.l.b16 %v1294
    %v1423 = vunpack.c.l.b16 %v1295
    %v1424 = vunpack.c.l.b16 %v1296
    %v1425 = vunpack.c.l.b16 %v1297
    %v1426 = vunpack.c.l.b16 %v1298
    %v1427 = vunpack.c.l.b16 %v1299
    %v1428 = vunpack.c.l.b16 %v1300
    %v1429 = vunpack.c.l.b16 %v1301
    %v1430 = vunpack.c.l.b16 %v1302
    %v1431 = vunpack.c.l.b16 %v1303
    %v1432 = vunpack.c.l.b16 %v1304
    %v1433 = vunpack.c.l.b16 %v1305
    %v1434 = vunpack.c.l.b16 %v1306
    %v1435 = vunpack.c.l.b16 %v1307
    %v1436 = vunpack.c.l.b16 %v1308
    %v1437 = vunpack.c.l.b16 %v1309
    %v1438 = vunpack.c.l.b16 %v1310
    %v1439 = vunpack.c.l.b16 %v1311
    %v1440 = vunpack.c.l.b16 %v1312
    %v1441 = vunpack.c.l.b16 %v1313
    %v1442 = vunpack.c.l.b16 %v1314
    %v1443 = vunpack.c.l.b16 %v1315
    %v1444 = vunpack.c.l.b16 %v1316
    %v1445 = vunpack.c.l.b16 %v1317
    %v1446 = vunpack.c.l.b16 %v1318
    %v1447 = vunpack.c.l.b16 %v1319
    %v1448 = vunpack.c.l.b16 %v1320
    %v1449 = vunpack.c.l.b16 %v1321
    %v1450 = vunpack.c.l.b16 %v1322
    %v1451 = vunpack.c.l.b16 %v1323
    %v1452 = vunpack.c.l.b16 %v1324
    %v1453 = vunpack.c.l.b16 %v1325
    %v1454 = vunpack.c.l.b16 %v1326
    %v1455 = vunpack.c.l.b16 %v1327
    %v1456 = vunpack.c.l.b16 %v1328
    %v1457 = vunpack.c.l.b16 %v1329
    %v1458 = vunpack.c.l.b16 %v1330
    %v1459 = vunpack.c.l.b16 %v1331
    %v1460 = vunpack.c.l.b16 %v1332
    %v1461 = vunpack.c.l.b16 %v1333
    %v1462 = vunpack.c.l.b16 %v1334
    %v1463 = vunpack.c.l.b16 %v1335
    %v1464 = vunpack.c.l.b16 %v1336
    %v1465 = vunpack.c.l.b16 %v1337
    %v1466 = vunpack.c.l.b16 %v1338
    %v1467 = vunpack.c.l.b16 %v1339
    %v1468 = vunpack.c.l.b16 %v1340
    %v1469 = vunpack.c.l.b16 %v1341
    %v1470 = vpack.c.b16 %v1407, %v1406
    %v1471 = vpack.c.b16 %v1409, %v1408
    %v1472 = vpack.c.b16 %v1411, %v1410
    %v1473 = vpack.c.b16 %v1413, %v1412
    %v1474 = vpack.c.b16 %v1415, %v1414
    %v1475 = vpack.c.b16 %v1417, %v1416
    %v1476 = vpack.c.b16 %v1419, %v1418
    %v1477 = vpack.c.b16 %v1421, %v1420
    %v1478 = vpack.c.b16 %v1423, %v1422
    %v1479 = vpack.c.b16 %v1425, %v1424
    %v1480 = vpack.c.b16 %v1427, %v1426
    %v1481 = vpack.c.b16 %v1429, %v1428
    %v1482 = vpack.c.b16 %v1431, %v1430
    %v1483 = vpack.c.b16 %v1433, %v1432
    %v1484 = vpack.c.b16 %v1435, %v1434
    %v1485 = vpack.c.b16 %v1437, %v1436
    %v1486 = vpack.c.b16 %v1439, %v1438
    %v1487 = vpack.c.b16 %v1441, %v1440
    %v1488 = vpack.c.b16 %v1443, %v1442
    %v1489 = vpack.c.b16 %v1445, %v1444
    %v1490 = vpack.c.b16 %v1447, %v1446
    %v1491 = vpack.c.b16 %v1449, %v1448
    %v1492 = vpack.c.b16 %v1451, %v1450
    %v1493 = vpack.c.b16 %v1453, %v1452
    %v1494 = vpack.c.b16 %v1455, %v1454
    %v1495 = vpack.c.b16 %v1457, %v1456
    %v1496 = vpack.c.b16 %v1459, %v1458
    %v1497 = vpack.c.b16 %v1461, %v1460
    %v1498 = vpack.c.b16 %v1463, %v1462
    %v1499 = vpack.c.b16 %v1465, %v1464
    %v1500 = vpack.c.b16 %v1467, %v1466
    %v1501 = vpack.c.b16 %v1469, %v1468
    %1534 = vmatprep.subr.bf16.mxu0 0
    %1535 = vmatpush1.bf16.msra.mxu0 %v1470
    %1536 = vmatprep.subr.bf16.mxu0 0
    %1537 = vmatpush1.bf16.msra.mxu0 %v1471
    %1538 = vmatprep.subr.bf16.mxu0 0
    %1539 = vmatpush1.bf16.msra.mxu0 %v1472
    %1540 = vmatprep.subr.bf16.mxu0 0
    %1541 = vmatpush1.bf16.msra.mxu0 %v1473
    %1542 = vmatprep.subr.bf16.mxu0 0
    %1543 = vmatpush1.bf16.msra.mxu0 %v1474
    %1544 = vmatprep.subr.bf16.mxu0 0
    %1545 = vmatpush1.bf16.msra.mxu0 %v1475
    %1546 = vmatprep.subr.bf16.mxu0 0
    %1547 = vmatpush1.bf16.msra.mxu0 %v1476
    %1548 = vmatprep.subr.bf16.mxu0 0
    %1549 = vmatpush1.bf16.msra.mxu0 %v1477
    %1550 = vmatprep.subr.bf16.mxu0 0
    %1551 = vmatpush1.bf16.msra.mxu0 %v1478
    %1552 = vmatprep.subr.bf16.mxu0 0
    %1553 = vmatpush1.bf16.msra.mxu0 %v1479
    %1554 = vmatprep.subr.bf16.mxu0 0
    %1555 = vmatpush1.bf16.msra.mxu0 %v1480
    %1556 = vmatprep.subr.bf16.mxu0 0
    %1557 = vmatpush1.bf16.msra.mxu0 %v1481
    %1558 = vmatprep.subr.bf16.mxu0 0
    %1559 = vmatpush1.bf16.msra.mxu0 %v1482
    %1560 = vmatprep.subr.bf16.mxu0 0
    %1561 = vmatpush1.bf16.msra.mxu0 %v1483
    %1562 = vmatprep.subr.bf16.mxu0 0
    %1563 = vmatpush1.bf16.msra.mxu0 %v1484
    %1564 = vmatprep.subr.bf16.mxu0 0
    %1565 = vmatpush1.bf16.msra.mxu0 %v1485
    %1566 = vmatprep.mubr.bf16.mxu0 %v1275
    %1567 = vmatmul.mubr.bf16.gmra.mrb[0].mxu0 %v1274
    %v1568 = vpop.f32.mrb[0].mxu0
    %v1569 = vadd.f32 0.0, %v1568
    %v1570 = vpop.f32.mrb[0].mxu0
    %v1571 = vpop.f32.mrb[0].mxu0
    %v1572 = vadd.f32 0.0, %v1571
    %v1573 = vpop.f32.mrb[0].mxu0
    %1574 = vdwg.mxu0
    %1575 = vmatprep.subr.bf16.mxu0 0
    %1576 = vmatpush1.bf16.msra.mxu0 %v1486
    %1577 = vmatprep.subr.bf16.mxu0 0
    %1578 = vmatpush1.bf16.msra.mxu0 %v1487
    %1579 = vmatprep.subr.bf16.mxu0 0
    %1580 = vmatpush1.bf16.msra.mxu0 %v1488
    %1581 = vmatprep.subr.bf16.mxu0 0
    %1582 = vmatpush1.bf16.msra.mxu0 %v1489
    %1583 = vmatprep.subr.bf16.mxu0 0
    %1584 = vmatpush1.bf16.msra.mxu0 %v1490
    %1585 = vmatprep.subr.bf16.mxu0 0
    %1586 = vmatpush1.bf16.msra.mxu0 %v1491
    %1587 = vmatprep.subr.bf16.mxu0 0
    %1588 = vmatpush1.bf16.msra.mxu0 %v1492
    %1589 = vmatprep.subr.bf16.mxu0 0
    %1590 = vmatpush1.bf16.msra.mxu0 %v1493
    %1591 = vmatprep.subr.bf16.mxu0 0
    %1592 = vmatpush1.bf16.msra.mxu0 %v1494
    %1593 = vmatprep.subr.bf16.mxu0 0
    %1594 = vmatpush1.bf16.msra.mxu0 %v1495
    %1595 = vmatprep.subr.bf16.mxu0 0
    %1596 = vmatpush1.bf16.msra.mxu0 %v1496
    %1597 = vmatprep.subr.bf16.mxu0 0
    %1598 = vmatpush1.bf16.msra.mxu0 %v1497
    %1599 = vmatprep.subr.bf16.mxu0 0
    %1600 = vmatpush1.bf16.msra.mxu0 %v1498
    %1601 = vmatprep.subr.bf16.mxu0 0
    %1602 = vmatpush1.bf16.msra.mxu0 %v1499
    %1603 = vmatprep.subr.bf16.mxu0 0
    %1604 = vmatpush1.bf16.msra.mxu0 %v1500
    %1605 = vmatprep.subr.bf16.mxu0 0
    %1606 = vmatpush1.bf16.msra.mxu0 %v1501
    %1607 = vmatprep.mubr.bf16.mxu0 %v1277
    %1608 = vmatmul.mubr.bf16.gmra.mrb[0].mxu0 %v1276
    %v1609 = vpop.f32.mrb[0].mxu0
    %v1610 = vadd.f32 %v1569, %v1609
    %v1611 = vpop.f32.mrb[0].mxu0
    %v1612 = vpop.f32.mrb[0].mxu0
    %v1613 = vadd.f32 %v1572, %v1612
    %v1614 = vpop.f32.mrb[0].mxu0
    %1615 = vdwg.mxu0
    %v1616 = vld [vmem:[%s10] sm:$0xf]
    %v1617 = vld [vmem:[%s10 + $0x4] sm:$0xf]
    %v1618 = vld [vmem:[%s10 + $0x8] sm:$0xf]
    %v1619 = vld [vmem:[%s10 + $0xc] sm:$0xf]
    %v1620 = vld [vmem:[%s10 + $0x10] sm:$0xf]
    %v1621 = vld [vmem:[%s10 + $0x14] sm:$0xf]
    %v1622 = vld [vmem:[%s10 + $0x18] sm:$0xf]
    %v1623 = vld [vmem:[%s10 + $0x1c] sm:$0xf]
    %v1624 = vld [vmem:[%s10 + $0x20] sm:$0xf]
    %v1625 = vld [vmem:[%s10 + $0x24] sm:$0xf]
    %v1626 = vld [vmem:[%s10 + $0x28] sm:$0xf]
    %v1627 = vld [vmem:[%s10 + $0x2c] sm:$0xf]
    %v1628 = vld [vmem:[%s10 + $0x30] sm:$0xf]
    %v1629 = vld [vmem:[%s10 + $0x34] sm:$0xf]
    %v1630 = vld [vmem:[%s10 + $0x38] sm:$0xf]
    %v1631 = vld [vmem:[%s10 + $0x3c] sm:$0xf]
    %v1632 = vld [vmem:[%s10 + $0x40] sm:$0xf]
    %v1633 = vld [vmem:[%s10 + $0x44] sm:$0xf]
    %v1634 = vld [vmem:[%s10 + $0x48] sm:$0xf]
    %v1635 = vld [vmem:[%s10 + $0x4c] sm:$0xf]
    %v1636 = vld [vmem:[%s10 + $0x50] sm:$0xf]
    %v1637 = vld [vmem:[%s10 + $0x54] sm:$0xf]
    %v1638 = vld [vmem:[%s10 + $0x58] sm:$0xf]
    %v1639 = vld [vmem:[%s10 + $0x5c] sm:$0xf]
    %v1640 = vld [vmem:[%s10 + $0x60] sm:$0xf]
    %v1641 = vld [vmem:[%s10 + $0x64] sm:$0xf]
    %v1642 = vld [vmem:[%s10 + $0x68] sm:$0xf]
    %v1643 = vld [vmem:[%s10 + $0x6c] sm:$0xf]
    %v1644 = vld [vmem:[%s10 + $0x70] sm:$0xf]
    %v1645 = vld [vmem:[%s10 + $0x74] sm:$0xf]
    %v1646 = vld [vmem:[%s10 + $0x78] sm:$0xf]
    %v1647 = vld [vmem:[%s10 + $0x7c] sm:$0xf]
    %v1648 = vld [vmem:[%s10 + $0x80] sm:$0xf]
    %v1649 = vld [vmem:[%s10 + $0x84] sm:$0xf]
    %v1650 = vld [vmem:[%s10 + $0x88] sm:$0xf]
    %v1651 = vld [vmem:[%s10 + $0x8c] sm:$0xf]
    %v1652 = vld [vmem:[%s10 + $0x90] sm:$0xf]
    %v1653 = vld [vmem:[%s10 + $0x94] sm:$0xf]
    %v1654 = vld [vmem:[%s10 + $0x98] sm:$0xf]
    %v1655 = vld [vmem:[%s10 + $0x9c] sm:$0xf]
    %v1656 = vld [vmem:[%s10 + $0xa0] sm:$0xf]
    %v1657 = vld [vmem:[%s10 + $0xa4] sm:$0xf]
    %v1658 = vld [vmem:[%s10 + $0xa8] sm:$0xf]
    %v1659 = vld [vmem:[%s10 + $0xac] sm:$0xf]
    %v1660 = vld [vmem:[%s10 + $0xb0] sm:$0xf]
    %v1661 = vld [vmem:[%s10 + $0xb4] sm:$0xf]
    %v1662 = vld [vmem:[%s10 + $0xb8] sm:$0xf]
    %v1663 = vld [vmem:[%s10 + $0xbc] sm:$0xf]
    %v1664 = vld [vmem:[%s10 + $0xc0] sm:$0xf]
    %v1665 = vld [vmem:[%s10 + $0xc4] sm:$0xf]
    %v1666 = vld [vmem:[%s10 + $0xc8] sm:$0xf]
    %v1667 = vld [vmem:[%s10 + $0xcc] sm:$0xf]
    %v1668 = vld [vmem:[%s10 + $0xd0] sm:$0xf]
    %v1669 = vld [vmem:[%s10 + $0xd4] sm:$0xf]
    %v1670 = vld [vmem:[%s10 + $0xd8] sm:$0xf]
    %v1671 = vld [vmem:[%s10 + $0xdc] sm:$0xf]
    %v1672 = vld [vmem:[%s10 + $0xe0] sm:$0xf]
    %v1673 = vld [vmem:[%s10 + $0xe4] sm:$0xf]
    %v1674 = vld [vmem:[%s10 + $0xe8] sm:$0xf]
    %v1675 = vld [vmem:[%s10 + $0xec] sm:$0xf]
    %v1676 = vld [vmem:[%s10 + $0xf0] sm:$0xf]
    %v1677 = vld [vmem:[%s10 + $0xf4] sm:$0xf]
    %v1678 = vld [vmem:[%s10 + $0xf8] sm:$0xf]
    %v1679 = vld [vmem:[%s10 + $0xfc] sm:$0xf]
    %v1744 = vunpack.c.l.b16 %v1616
    %v1745 = vunpack.c.l.b16 %v1617
    %v1746 = vunpack.c.l.b16 %v1618
    %v1747 = vunpack.c.l.b16 %v1619
    %v1748 = vunpack.c.l.b16 %v1620
    %v1749 = vunpack.c.l.b16 %v1621
    %v1750 = vunpack.c.l.b16 %v1622
    %v1751 = vunpack.c.l.b16 %v1623
    %v1752 = vunpack.c.l.b16 %v1624
    %v1753 = vunpack.c.l.b16 %v1625
    %v1754 = vunpack.c.l.b16 %v1626
    %v1755 = vunpack.c.l.b16 %v1627
    %v1756 = vunpack.c.l.b16 %v1628
    %v1757 = vunpack.c.l.b16 %v1629
    %v1758 = vunpack.c.l.b16 %v1630
    %v1759 = vunpack.c.l.b16 %v1631
    %v1760 = vunpack.c.l.b16 %v1632
    %v1761 = vunpack.c.l.b16 %v1633
    %v1762 = vunpack.c.l.b16 %v1634
    %v1763 = vunpack.c.l.b16 %v1635
    %v1764 = vunpack.c.l.b16 %v1636
    %v1765 = vunpack.c.l.b16 %v1637
    %v1766 = vunpack.c.l.b16 %v1638
    %v1767 = vunpack.c.l.b16 %v1639
    %v1768 = vunpack.c.l.b16 %v1640
    %v1769 = vunpack.c.l.b16 %v1641
    %v1770 = vunpack.c.l.b16 %v1642
    %v1771 = vunpack.c.l.b16 %v1643
    %v1772 = vunpack.c.l.b16 %v1644
    %v1773 = vunpack.c.l.b16 %v1645
    %v1774 = vunpack.c.l.b16 %v1646
    %v1775 = vunpack.c.l.b16 %v1647
    %v1776 = vunpack.c.l.b16 %v1648
    %v1777 = vunpack.c.l.b16 %v1649
    %v1778 = vunpack.c.l.b16 %v1650
    %v1779 = vunpack.c.l.b16 %v1651
    %v1780 = vunpack.c.l.b16 %v1652
    %v1781 = vunpack.c.l.b16 %v1653
    %v1782 = vunpack.c.l.b16 %v1654
    %v1783 = vunpack.c.l.b16 %v1655
    %v1784 = vunpack.c.l.b16 %v1656
    %v1785 = vunpack.c.l.b16 %v1657
    %v1786 = vunpack.c.l.b16 %v1658
    %v1787 = vunpack.c.l.b16 %v1659
    %v1788 = vunpack.c.l.b16 %v1660
    %v1789 = vunpack.c.l.b16 %v1661
    %v1790 = vunpack.c.l.b16 %v1662
    %v1791 = vunpack.c.l.b16 %v1663
    %v1792 = vunpack.c.l.b16 %v1664
    %v1793 = vunpack.c.l.b16 %v1665
    %v1794 = vunpack.c.l.b16 %v1666
    %v1795 = vunpack.c.l.b16 %v1667
    %v1796 = vunpack.c.l.b16 %v1668
    %v1797 = vunpack.c.l.b16 %v1669
    %v1798 = vunpack.c.l.b16 %v1670
    %v1799 = vunpack.c.l.b16 %v1671
    %v1800 = vunpack.c.l.b16 %v1672
    %v1801 = vunpack.c.l.b16 %v1673
    %v1802 = vunpack.c.l.b16 %v1674
    %v1803 = vunpack.c.l.b16 %v1675
    %v1804 = vunpack.c.l.b16 %v1676
    %v1805 = vunpack.c.l.b16 %v1677
    %v1806 = vunpack.c.l.b16 %v1678
    %v1807 = vunpack.c.l.b16 %v1679
    %v1808 = vpack.c.b16 %v1745, %v1744
    %v1809 = vpack.c.b16 %v1747, %v1746
    %v1810 = vpack.c.b16 %v1749, %v1748
    %v1811 = vpack.c.b16 %v1751, %v1750
    %v1812 = vpack.c.b16 %v1753, %v1752
    %v1813 = vpack.c.b16 %v1755, %v1754
    %v1814 = vpack.c.b16 %v1757, %v1756
    %v1815 = vpack.c.b16 %v1759, %v1758
    %v1816 = vpack.c.b16 %v1761, %v1760
    %v1817 = vpack.c.b16 %v1763, %v1762
    %v1818 = vpack.c.b16 %v1765, %v1764
    %v1819 = vpack.c.b16 %v1767, %v1766
    %v1820 = vpack.c.b16 %v1769, %v1768
    %v1821 = vpack.c.b16 %v1771, %v1770
    %v1822 = vpack.c.b16 %v1773, %v1772
    %v1823 = vpack.c.b16 %v1775, %v1774
    %v1824 = vpack.c.b16 %v1777, %v1776
    %v1825 = vpack.c.b16 %v1779, %v1778
    %v1826 = vpack.c.b16 %v1781, %v1780
    %v1827 = vpack.c.b16 %v1783, %v1782
    %v1828 = vpack.c.b16 %v1785, %v1784
    %v1829 = vpack.c.b16 %v1787, %v1786
    %v1830 = vpack.c.b16 %v1789, %v1788
    %v1831 = vpack.c.b16 %v1791, %v1790
    %v1832 = vpack.c.b16 %v1793, %v1792
    %v1833 = vpack.c.b16 %v1795, %v1794
    %v1834 = vpack.c.b16 %v1797, %v1796
    %v1835 = vpack.c.b16 %v1799, %v1798
    %v1836 = vpack.c.b16 %v1801, %v1800
    %v1837 = vpack.c.b16 %v1803, %v1802
    %v1838 = vpack.c.b16 %v1805, %v1804
    %v1839 = vpack.c.b16 %v1807, %v1806
    %1872 = vmatprep.subr.bf16.mxu0 0
    %1873 = vmatpush1.bf16.msra.mxu0 %v1808
    %1874 = vmatprep.subr.bf16.mxu0 0
    %1875 = vmatpush1.bf16.msra.mxu0 %v1809
    %1876 = vmatprep.subr.bf16.mxu0 0
    %1877 = vmatpush1.bf16.msra.mxu0 %v1810
    %1878 = vmatprep.subr.bf16.mxu0 0
    %1879 = vmatpush1.bf16.msra.mxu0 %v1811
    %1880 = vmatprep.subr.bf16.mxu0 0
    %1881 = vmatpush1.bf16.msra.mxu0 %v1812
    %1882 = vmatprep.subr.bf16.mxu0 0
    %1883 = vmatpush1.bf16.msra.mxu0 %v1813
    %1884 = vmatprep.subr.bf16.mxu0 0
    %1885 = vmatpush1.bf16.msra.mxu0 %v1814
    %1886 = vmatprep.subr.bf16.mxu0 0
    %1887 = vmatpush1.bf16.msra.mxu0 %v1815
    %1888 = vmatprep.subr.bf16.mxu0 0
    %1889 = vmatpush1.bf16.msra.mxu0 %v1816
    %1890 = vmatprep.subr.bf16.mxu0 0
    %1891 = vmatpush1.bf16.msra.mxu0 %v1817
    %1892 = vmatprep.subr.bf16.mxu0 0
    %1893 = vmatpush1.bf16.msra.mxu0 %v1818
    %1894 = vmatprep.subr.bf16.mxu0 0
    %1895 = vmatpush1.bf16.msra.mxu0 %v1819
    %1896 = vmatprep.subr.bf16.mxu0 0
    %1897 = vmatpush1.bf16.msra.mxu0 %v1820
    %1898 = vmatprep.subr.bf16.mxu0 0
    %1899 = vmatpush1.bf16.msra.mxu0 %v1821
    %1900 = vmatprep.subr.bf16.mxu0 0
    %1901 = vmatpush1.bf16.msra.mxu0 %v1822
    %1902 = vmatprep.subr.bf16.mxu0 0
    %1903 = vmatpush1.bf16.msra.mxu0 %v1823
    %1904 = vmatprep.mubr.bf16.mxu0 %v1275
    %1905 = vmatmul.mubr.bf16.gmra.mrb[0].mxu0 %v1274
    %v1906 = vpop.f32.mrb[0].mxu0
    %v1907 = vadd.f32 0.0, %v1906
    %v1908 = vpop.f32.mrb[0].mxu0
    %v1909 = vpop.f32.mrb[0].mxu0
    %v1910 = vadd.f32 0.0, %v1909
    %v1911 = vpop.f32.mrb[0].mxu0
    %1912 = vdwg.mxu0
    %1913 = vmatprep.subr.bf16.mxu0 0
    %1914 = vmatpush1.bf16.msra.mxu0 %v1824
    %1915 = vmatprep.subr.bf16.mxu0 0
    %1916 = vmatpush1.bf16.msra.mxu0 %v1825
    %1917 = vmatprep.subr.bf16.mxu0 0
    %1918 = vmatpush1.bf16.msra.mxu0 %v1826
    %1919 = vmatprep.subr.bf16.mxu0 0
    %1920 = vmatpush1.bf16.msra.mxu0 %v1827
    %1921 = vmatprep.subr.bf16.mxu0 0
    %1922 = vmatpush1.bf16.msra.mxu0 %v1828
    %1923 = vmatprep.subr.bf16.mxu0 0
    %1924 = vmatpush1.bf16.msra.mxu0 %v1829
    %1925 = vmatprep.subr.bf16.mxu0 0
    %1926 = vmatpush1.bf16.msra.mxu0 %v1830
    %1927 = vmatprep.subr.bf16.mxu0 0
    %1928 = vmatpush1.bf16.msra.mxu0 %v1831
    %1929 = vmatprep.subr.bf16.mxu0 0
    %1930 = vmatpush1.bf16.msra.mxu0 %v1832
    %1931 = vmatprep.subr.bf16.mxu0 0
    %1932 = vmatpush1.bf16.msra.mxu0 %v1833
    %1933 = vmatprep.subr.bf16.mxu0 0
    %1934 = vmatpush1.bf16.msra.mxu0 %v1834
    %1935 = vmatprep.subr.bf16.mxu0 0
    %1936 = vmatpush1.bf16.msra.mxu0 %v1835
    %1937 = vmatprep.subr.bf16.mxu0 0
    %1938 = vmatpush1.bf16.msra.mxu0 %v1836
    %1939 = vmatprep.subr.bf16.mxu0 0
    %1940 = vmatpush1.bf16.msra.mxu0 %v1837
    %1941 = vmatprep.subr.bf16.mxu0 0
    %1942 = vmatpush1.bf16.msra.mxu0 %v1838
    %1943 = vmatprep.subr.bf16.mxu0 0
    %1944 = vmatpush1.bf16.msra.mxu0 %v1839
    %1945 = vmatprep.mubr.bf16.mxu0 %v1277
    %1946 = vmatmul.mubr.bf16.gmra.mrb[0].mxu0 %v1276
    %v1947 = vpop.f32.mrb[0].mxu0
    %v1948 = vadd.f32 %v1907, %v1947
    %v1949 = vpop.f32.mrb[0].mxu0
    %v1950 = vpop.f32.mrb[0].mxu0
    %v1951 = vadd.f32 %v1910, %v1950
    %v1952 = vpop.f32.mrb[0].mxu0
    %1953 = vdwg.mxu0
    %v1954 = vld [vmem:[%s3] sm:$0xff]
    %v1955 = vld [vmem:[%s3 + $0x8] sm:$0xff]
    %v1956 = vld [vmem:[%s3 + $0x10] sm:$0xff]
    %v1957 = vld [vmem:[%s3 + $0x18] sm:$0xff]
    %v1958 = vld [vmem:[%s3 + $0x20] sm:$0x3]
    %v1959 = vlaneseq
    %v1960 = vand.u32 %v1959, 127
    %1961 = vset.pattern.permute.xlu0 0
    %1962 = vperm.xlu0 %1961, %v1954
    %v1963 = vpop.permute.xlu0 %1962
    %1964 = vset.pattern.permute.xlu0 0
    %1965 = vperm.xlu0 %1964, %v1955
    %v1966 = vpop.permute.xlu0 %1965
    %1967 = vset.pattern.permute.xlu0 0
    %1968 = vperm.xlu0 %1967, %v1956
    %v1969 = vpop.permute.xlu0 %1968
    %1970 = vset.pattern.permute.xlu0 0
    %1971 = vperm.xlu0 %1970, %v1957
    %v1972 = vpop.permute.xlu0 %1971
    %1973 = vset.pattern.permute.xlu0 0
    %1974 = vperm.xlu0 %1973, %v1958
    %v1975 = vpop.permute.xlu0 %1974
    %vm1976 = vcmp.eq.s32.totalorder %v1963, %v1960
    %vm1977 = vcmp.eq.s32.totalorder %v1966, %v1960
    %vm1978 = vcmp.eq.s32.totalorder %v1969, %v1960
    %vm1979 = vcmp.eq.s32.totalorder %v1972, %v1960
    %vm1980 = vcmp.eq.s32.totalorder %v1975, %v1960
    %v1981 = vsel %vm1976, 1, 0
    %v1982 = vsel %vm1977, 1, 0
    %v1983 = vsel %vm1978, 1, 0
    %v1984 = vsel %vm1979, 1, 0
    %v1985 = vsel %vm1980, 1, 0
    %v1986 = vcvt.s32.f32 %v1981
    %v1987 = vcvt.s32.f32 %v1982
    %v1988 = vcvt.s32.f32 %v1983
    %v1989 = vcvt.s32.f32 %v1984
    %v1990 = vcvt.s32.f32 %v1985
    %v1991 = vpack.c.bf16 %v1987, %v1986
    %v1992 = vpack.c.bf16 %v1989, %v1988
    %v1993 = vpack.c.bf16 %v1990, %v1990
    %v1994 = vld [vmem:[%s4] sm:$0xff]
    %v1995 = vld [vmem:[%s4 + $0x8] sm:$0xff]
    %v1996 = vld [vmem:[%s4 + $0x10] sm:$0xff]
    %v1997 = vld [vmem:[%s4 + $0x18] sm:$0xff]
    %v1998 = vld [vmem:[%s4 + $0x20] sm:$0x3]
    %1999 = vset.pattern.permute.xlu0 0
    %2000 = vperm.xlu0 %1999, %v1994
    %v2001 = vpop.permute.xlu0 %2000
    %2002 = vset.pattern.permute.xlu0 0
    %2003 = vperm.xlu0 %2002, %v1995
    %v2004 = vpop.permute.xlu0 %2003
    %2005 = vset.pattern.permute.xlu0 0
    %2006 = vperm.xlu0 %2005, %v1996
    %v2007 = vpop.permute.xlu0 %2006
    %2008 = vset.pattern.permute.xlu0 0
    %2009 = vperm.xlu0 %2008, %v1997
    %v2010 = vpop.permute.xlu0 %2009
    %2011 = vset.pattern.permute.xlu0 0
    %2012 = vperm.xlu0 %2011, %v1998
    %v2013 = vpop.permute.xlu0 %2012
    %vm2014 = vcmp.eq.s32.totalorder %v2001, %v1960
    %vm2015 = vcmp.eq.s32.totalorder %v2004, %v1960
    %vm2016 = vcmp.eq.s32.totalorder %v2007, %v1960
    %vm2017 = vcmp.eq.s32.totalorder %v2010, %v1960
    %vm2018 = vcmp.eq.s32.totalorder %v2013, %v1960
    %v2019 = vsel %vm2014, 1, 0
    %v2020 = vsel %vm2015, 1, 0
    %v2021 = vsel %vm2016, 1, 0
    %v2022 = vsel %vm2017, 1, 0
    %v2023 = vsel %vm2018, 1, 0
    %v2024 = vcvt.s32.f32 %v2019
    %v2025 = vcvt.s32.f32 %v2020
    %v2026 = vcvt.s32.f32 %v2021
    %v2027 = vcvt.s32.f32 %v2022
    %v2028 = vcvt.s32.f32 %v2023
    %v2029 = vpack.c.bf16 %v2025, %v2024
    %v2030 = vpack.c.bf16 %v2027, %v2026
    %v2031 = vpack.c.bf16 %v2028, %v2028
    %v2032 = vlaneseq
    %v2033 = vshrl.u32 %v2032, 7
    %v2034 = vadd.s32 %v2033, 8
    %v2035 = vld [vmem:[%s5] sm:$0x1]
    %v2036 = vlaneseq
    %v2037 = vshrl.u32 %v2036, 7
    %v2038 = vsub.s32 0, %v2037
    %v2039 = vrot.slane %v2035, %v2038
    %vm2040 = vcmp.eq.s32.totalorder %v2033, %v2039
    %vm2041 = vcmp.eq.s32.totalorder %v2034, %v2039
    %v2042 = vsel %vm2040, 1, 0
    %v2043 = vsel %vm2041, 1, 0
    %v2044 = vcvt.s32.f32 %v2042
    %v2045 = vcvt.s32.f32 %v2043
    %v2046 = vpack.c.bf16 %v2045, %v2044
    %v2047 = vld [vmem:[%s6] sm:$0xff]
    %v2048 = vld [vmem:[%s6 + $0x8] sm:$0xff]
    %v2049 = vld [vmem:[%s6 + $0x10] sm:$0xff]
    %v2050 = vld [vmem:[%s6 + $0x18] sm:$0xff]
    %v2051 = vld [vmem:[%s6 + $0x20] sm:$0x3]
    %vm2052 = vcmp.gt.f32.partialorder %v2047, 0.0
    %vm2053 = vcmp.gt.f32.partialorder %v2048, 0.0
    %vm2054 = vcmp.gt.f32.partialorder %v2049, 0.0
    %vm2055 = vcmp.gt.f32.partialorder %v2050, 0.0
    %vm2056 = vcmp.gt.f32.partialorder %v2051, 0.0
    %v2057 = vpack.c.bf16 %v1613, %v1610
    %v2058 = vpack.c.bf16 %v1951, %v1948
    %vm2059 = vcmask 80896
    %v2061 = vsel %vm2059, %v2029, 0
    %v2064 = vsel %vm2059, %v2030, 0
    %v2067 = vsel %vm2059, %v2031, 0
    %v2070 = vsel %vm119, %v2058, 0
    %2072 = vmatprep.subr.bf16.mxu0 0
    %2073 = vmatpush1.bf16.msra.mxu0 %v2070
    %2074 = vmatprep.subr.bf16.mxu0 0
    %2075 = vmatpush1.bf16.msra.mxu0 0
    %2076 = vmatprep.subr.bf16.mxu0 0
    %2077 = vmatpush1.bf16.msra.mxu0 0
    %2078 = vmatprep.subr.bf16.mxu0 0
    %2079 = vmatpush1.bf16.msra.mxu0 0
    %2080 = vmatprep.subr.bf16.mxu0 0
    %2081 = vmatpush1.bf16.msra.mxu0 0
    %2082 = vmatprep.subr.bf16.mxu0 0
    %2083 = vmatpush1.bf16.msra.mxu0 0
    %2084 = vmatprep.subr.bf16.mxu0 0
    %2085 = vmatpush1.bf16.msra.mxu0 0
    %2086 = vmatprep.subr.bf16.mxu0 0
    %2087 = vmatpush1.bf16.msra.mxu0 0
    %2088 = vmatprep.subr.bf16.mxu0 0
    %2089 = vmatpush1.bf16.msra.mxu0 0
    %2090 = vmatprep.subr.bf16.mxu0 0
    %2091 = vmatpush1.bf16.msra.mxu0 0
    %2092 = vmatprep.subr.bf16.mxu0 0
    %2093 = vmatpush1.bf16.msra.mxu0 0
    %2094 = vmatprep.subr.bf16.mxu0 0
    %2095 = vmatpush1.bf16.msra.mxu0 0
    %2096 = vmatprep.subr.bf16.mxu0 0
    %2097 = vmatpush1.bf16.msra.mxu0 0
    %2098 = vmatprep.subr.bf16.mxu0 0
    %2099 = vmatpush1.bf16.msra.mxu0 0
    %2100 = vmatprep.subr.bf16.mxu0 0
    %2101 = vmatpush1.bf16.msra.mxu0 0
    %2102 = vmatprep.subr.bf16.mxu0 0
    %2103 = vmatpush1.bf16.msra.mxu0 0
    %2104 = vmatprep.mubr.bf16.mxu0 0
    %2105 = vmatmul.mubr.bf16.gmra.mrb[0].mxu0 %v2061
    %v2106 = vpop.f32.mrb[0].mxu0
    %v2107 = vadd.f32 0.0, %v2106
    %v2108 = vpop.f32.mrb[0].mxu0
    %v2109 = vpop.f32.mrb[0].mxu0
    %v2110 = vadd.f32 0.0, %v2109
    %v2111 = vpop.f32.mrb[0].mxu0
    %2112 = vmatprep.mubr.bf16.mxu0 0
    %2113 = vmatmul.mubr.bf16.gmra.mrb[0].mxu0 %v2064
    %v2114 = vpop.f32.mrb[0].mxu0
    %v2115 = vadd.f32 0.0, %v2114
    %v2116 = vpop.f32.mrb[0].mxu0
    %v2117 = vpop.f32.mrb[0].mxu0
    %v2118 = vadd.f32 0.0, %v2117
    %v2119 = vpop.f32.mrb[0].mxu0
    %2120 = vmatprep.mubr.bf16.mxu0 0
    %2121 = vmatmul.mubr.bf16.gmra.mrb[0].mxu0 %v2067
    %v2122 = vpop.f32.mrb[0].mxu0
    %v2123 = vadd.f32 0.0, %v2122
    %v2124 = vpop.f32.mrb[0].mxu0
    %v2125 = vpop.f32.mrb[0].mxu0
    %v2126 = vpop.f32.mrb[0].mxu0
    %2127 = vdwg.mxu0
    %v2129 = vsel %vm2059, %v1991, 0
    %v2132 = vsel %vm2059, %v1992, 0
    %v2135 = vsel %vm2059, %v1993, 0
    %v2138 = vsel %vm119, %v2057, 0
    %2140 = vmatprep.subr.bf16.mxu0 0
    %2141 = vmatpush1.bf16.msra.mxu0 %v2138
    %2142 = vmatprep.subr.bf16.mxu0 0
    %2143 = vmatpush1.bf16.msra.mxu0 0
    %2144 = vmatprep.subr.bf16.mxu0 0
    %2145 = vmatpush1.bf16.msra.mxu0 0
    %2146 = vmatprep.subr.bf16.mxu0 0
    %2147 = vmatpush1.bf16.msra.mxu0 0
    %2148 = vmatprep.subr.bf16.mxu0 0
    %2149 = vmatpush1.bf16.msra.mxu0 0
    %2150 = vmatprep.subr.bf16.mxu0 0
    %2151 = vmatpush1.bf16.msra.mxu0 0
    %2152 = vmatprep.subr.bf16.mxu0 0
    %2153 = vmatpush1.bf16.msra.mxu0 0
    %2154 = vmatprep.subr.bf16.mxu0 0
    %2155 = vmatpush1.bf16.msra.mxu0 0
    %2156 = vmatprep.subr.bf16.mxu0 0
    %2157 = vmatpush1.bf16.msra.mxu0 0
    %2158 = vmatprep.subr.bf16.mxu0 0
    %2159 = vmatpush1.bf16.msra.mxu0 0
    %2160 = vmatprep.subr.bf16.mxu0 0
    %2161 = vmatpush1.bf16.msra.mxu0 0
    %2162 = vmatprep.subr.bf16.mxu0 0
    %2163 = vmatpush1.bf16.msra.mxu0 0
    %2164 = vmatprep.subr.bf16.mxu0 0
    %2165 = vmatpush1.bf16.msra.mxu0 0
    %2166 = vmatprep.subr.bf16.mxu0 0
    %2167 = vmatpush1.bf16.msra.mxu0 0
    %2168 = vmatprep.subr.bf16.mxu0 0
    %2169 = vmatpush1.bf16.msra.mxu0 0
    %2170 = vmatprep.subr.bf16.mxu0 0
    %2171 = vmatpush1.bf16.msra.mxu0 0
    %2172 = vmatprep.mubr.bf16.mxu0 0
    %2173 = vmatmul.mubr.bf16.gmra.mrb[0].mxu0 %v2129
    %v2174 = vpop.f32.mrb[0].mxu0
    %v2175 = vadd.f32 %v2107, %v2174
    %v2176 = vpop.f32.mrb[0].mxu0
    %v2177 = vpop.f32.mrb[0].mxu0
    %v2178 = vadd.f32 %v2110, %v2177
    %v2179 = vpop.f32.mrb[0].mxu0
    %2180 = vmatprep.mubr.bf16.mxu0 0
    %2181 = vmatmul.mubr.bf16.gmra.mrb[0].mxu0 %v2132
    %v2182 = vpop.f32.mrb[0].mxu0
    %v2183 = vadd.f32 %v2115, %v2182
    %v2184 = vpop.f32.mrb[0].mxu0
    %v2185 = vpop.f32.mrb[0].mxu0
    %v2186 = vadd.f32 %v2118, %v2185
    %v2187 = vpop.f32.mrb[0].mxu0
    %2188 = vmatprep.mubr.bf16.mxu0 0
    %2189 = vmatmul.mubr.bf16.gmra.mrb[0].mxu0 %v2135
    %v2190 = vpop.f32.mrb[0].mxu0
    %v2191 = vadd.f32 %v2123, %v2190
    %v2192 = vpop.f32.mrb[0].mxu0
    %v2193 = vpop.f32.mrb[0].mxu0
    %v2194 = vpop.f32.mrb[0].mxu0
    %2195 = vdwg.mxu0
    %vm2196 = vcmp.gt.f32.partialorder %v2175, 0.0
    %vm2197 = vcmp.gt.f32.partialorder %v2178, 0.0
    %vm2198 = vcmp.gt.f32.partialorder %v2183, 0.0
    %vm2199 = vcmp.gt.f32.partialorder %v2186, 0.0
    %vm2200 = vcmp.gt.f32.partialorder %v2191, 0.0
    %v2201 = vmul.f32 %v2175, 0.2
    %v2202 = vmul.f32 %v2178, 0.2
    %v2203 = vmul.f32 %v2183, 0.2
    %v2204 = vmul.f32 %v2186, 0.2
    %v2205 = vmul.f32 %v2191, 0.2
    %v2206 = vsel %vm2196, %v2175, %v2201
    %v2207 = vsel %vm2197, %v2178, %v2202
    %v2208 = vsel %vm2198, %v2183, %v2203
    %v2209 = vsel %vm2199, %v2186, %v2204
    %v2210 = vsel %vm2200, %v2191, %v2205
    %v2211 = vsel %vm2052, 1, 0
    %v2212 = vsel %vm2053, 1, 0
    %v2213 = vsel %vm2054, 1, 0
    %v2214 = vsel %vm2055, 1, 0
    %v2215 = vsel %vm2056, 1, 0
    %2216 = vset.pattern.permute.xlu0 0
    %2217 = vperm.xlu0 %2216, %v2211
    %v2218 = vpop.permute.xlu0 %2217
    %2219 = vset.pattern.permute.xlu0 0
    %2220 = vperm.xlu0 %2219, %v2212
    %v2221 = vpop.permute.xlu0 %2220
    %2222 = vset.pattern.permute.xlu0 0
    %2223 = vperm.xlu0 %2222, %v2213
    %v2224 = vpop.permute.xlu0 %2223
    %2225 = vset.pattern.permute.xlu0 0
    %2226 = vperm.xlu0 %2225, %v2214
    %v2227 = vpop.permute.xlu0 %2226
    %2228 = vset.pattern.permute.xlu0 0
    %2229 = vperm.xlu0 %2228, %v2215
    %v2230 = vpop.permute.xlu0 %2229
    %vm2231 = vcmp.eq.s32.totalorder %v2218, 1
    %vm2232 = vcmp.eq.s32.totalorder %v2221, 1
    %vm2233 = vcmp.eq.s32.totalorder %v2224, 1
    %vm2234 = vcmp.eq.s32.totalorder %v2227, 1
    %vm2235 = vcmp.eq.s32.totalorder %v2230, 1
    %v2236 = vsel %vm2231, %v2206, -1e+30
    %v2237 = vsel %vm2232, %v2207, -1e+30
    %v2238 = vsel %vm2233, %v2208, -1e+30
    %v2239 = vsel %vm2234, %v2209, -1e+30
    %v2240 = vsel %vm2235, %v2210, -1e+30
    %vm2241 = vcmask 31744
    %v2242 = vsel %vm2241, %v2236, -inf
    %v2243 = vsel %vm2241, %v2237, -inf
    %v2244 = vsel %vm2241, %v2238, -inf
    %v2245 = vsel %vm2241, %v2239, -inf
    %vm2246 = vcmask 25600
    %v2247 = vsel %vm2246, %v2240, -inf
    %v2248 = vmax.f32 %v2242, %v2247
    %v2249 = vmax.f32 %v2248, %v2243
    %v2250 = vmax.f32 %v2244, %v2245
    %v2251 = vmax.f32 %v2249, %v2250
    %v2252 = vrot.slane %v2251, 4
    %v2253 = vmax.f32 %v2251, %v2252
    %v2254 = vrot.slane %v2253, 2
    %v2255 = vmax.f32 %v2253, %v2254
    %v2256 = vrot.slane %v2255, 1
    %v2257 = vmax.f32 %v2255, %v2256
    %v2258 = vsub.f32 %v2206, %v2257
    %v2259 = vsub.f32 %v2207, %v2257
    %v2260 = vsub.f32 %v2208, %v2257
    %v2261 = vsub.f32 %v2209, %v2257
    %v2262 = vsub.f32 %v2210, %v2257
    %v2263 = vsel %vm2231, %v2258, -1e+30
    %v2264 = vsel %vm2232, %v2259, -1e+30
    %v2265 = vsel %vm2233, %v2260, -1e+30
    %v2266 = vsel %vm2234, %v2261, -1e+30
    %v2267 = vsel %vm2235, %v2262, -1e+30
    %v2268 = vmul.f32 %v2263, 1.442695
    %v2269 = vpow.pop %v2268
    %v2270 = vmul.f32 %v2264, 1.442695
    %v2271 = vpow.pop %v2270
    %v2272 = vmul.f32 %v2265, 1.442695
    %v2273 = vpow.pop %v2272
    %v2274 = vmul.f32 %v2266, 1.442695
    %v2275 = vpow.pop %v2274
    %v2276 = vmul.f32 %v2267, 1.442695
    %v2277 = vpow.pop %v2276
    %v2278 = vpack.c.bf16 %v2271, %v2269
    %v2279 = vpack.c.bf16 %v2275, %v2273
    %v2280 = vpack.c.bf16 %v2277, %v2277
    %vm2281 = vcmask 277504
    %v2283 = vsel %vm2281, %v2046, 0
    %v2286 = vsel %vm275, %v2280, 0
    %2288 = vmatprep.subr.bf16.mxu0 0
    %2289 = vmatpush1.bf16.msra.mxu0 %v2278
    %2290 = vmatprep.subr.bf16.mxu0 0
    %2291 = vmatpush1.bf16.msra.mxu0 %v2279
    %2292 = vmatprep.subr.bf16.mxu0 0
    %2293 = vmatpush1.bf16.msra.mxu0 %v2286
    %2294 = vmatprep.subr.bf16.mxu0 0
    %2295 = vmatpush1.bf16.msra.mxu0 0
    %2296 = vmatprep.subr.bf16.mxu0 0
    %2297 = vmatpush1.bf16.msra.mxu0 0
    %2298 = vmatprep.subr.bf16.mxu0 0
    %2299 = vmatpush1.bf16.msra.mxu0 0
    %2300 = vmatprep.subr.bf16.mxu0 0
    %2301 = vmatpush1.bf16.msra.mxu0 0
    %2302 = vmatprep.subr.bf16.mxu0 0
    %2303 = vmatpush1.bf16.msra.mxu0 0
    %2304 = vmatprep.subr.bf16.mxu0 0
    %2305 = vmatpush1.bf16.msra.mxu0 0
    %2306 = vmatprep.subr.bf16.mxu0 0
    %2307 = vmatpush1.bf16.msra.mxu0 0
    %2308 = vmatprep.subr.bf16.mxu0 0
    %2309 = vmatpush1.bf16.msra.mxu0 0
    %2310 = vmatprep.subr.bf16.mxu0 0
    %2311 = vmatpush1.bf16.msra.mxu0 0
    %2312 = vmatprep.subr.bf16.mxu0 0
    %2313 = vmatpush1.bf16.msra.mxu0 0
    %2314 = vmatprep.subr.bf16.mxu0 0
    %2315 = vmatpush1.bf16.msra.mxu0 0
    %2316 = vmatprep.subr.bf16.mxu0 0
    %2317 = vmatpush1.bf16.msra.mxu0 0
    %2318 = vmatprep.subr.bf16.mxu0 0
    %2319 = vmatpush1.bf16.msra.mxu0 0
    %2320 = vmatprep.mubr.bf16.mxu0 0
    %2321 = vmatmul.mubr.bf16.gmra.mrb[0].mxu0 %v2283
    %v2322 = vpop.f32.mrb[0].mxu0
    %v2323 = vadd.f32 0.0, %v2322
    %v2324 = vpop.f32.mrb[0].mxu0
    %v2325 = vpop.f32.mrb[0].mxu0
    %v2326 = vadd.f32 0.0, %v2325
    %v2327 = vpop.f32.mrb[0].mxu0
    %2328 = vdwg.mxu0
    %v2329 = vpack.c.bf16 %v2326, %v2323
    %v2331 = vsel %vm119, %v2329, 0
    %2333 = vmatprep.subr.bf16.mxu0 0
    %2334 = vmatpush1.bf16.msra.mxu0 %v2331
    %2335 = vmatprep.subr.bf16.mxu0 0
    %2336 = vmatpush1.bf16.msra.mxu0 0
    %2337 = vmatprep.subr.bf16.mxu0 0
    %2338 = vmatpush1.bf16.msra.mxu0 0
    %2339 = vmatprep.subr.bf16.mxu0 0
    %2340 = vmatpush1.bf16.msra.mxu0 0
    %2341 = vmatprep.subr.bf16.mxu0 0
    %2342 = vmatpush1.bf16.msra.mxu0 0
    %2343 = vmatprep.subr.bf16.mxu0 0
    %2344 = vmatpush1.bf16.msra.mxu0 0
    %2345 = vmatprep.subr.bf16.mxu0 0
    %2346 = vmatpush1.bf16.msra.mxu0 0
    %2347 = vmatprep.subr.bf16.mxu0 0
    %2348 = vmatpush1.bf16.msra.mxu0 0
    %2349 = vmatprep.subr.bf16.mxu0 0
    %2350 = vmatpush1.bf16.msra.mxu0 0
    %2351 = vmatprep.subr.bf16.mxu0 0
    %2352 = vmatpush1.bf16.msra.mxu0 0
    %2353 = vmatprep.subr.bf16.mxu0 0
    %2354 = vmatpush1.bf16.msra.mxu0 0
    %2355 = vmatprep.subr.bf16.mxu0 0
    %2356 = vmatpush1.bf16.msra.mxu0 0
    %2357 = vmatprep.subr.bf16.mxu0 0
    %2358 = vmatpush1.bf16.msra.mxu0 0
    %2359 = vmatprep.subr.bf16.mxu0 0
    %2360 = vmatpush1.bf16.msra.mxu0 0
    %2361 = vmatprep.subr.bf16.mxu0 0
    %2362 = vmatpush1.bf16.msra.mxu0 0
    %2363 = vmatprep.subr.bf16.mxu0 0
    %2364 = vmatpush1.bf16.msra.mxu0 0
    %2365 = vmatprep.mubr.bf16.mxu0 0
    %2366 = vmatmul.mubr.bf16.gmra.mrb[0].mxu0 %v2061
    %v2367 = vpop.f32.mrb[0].mxu0
    %v2368 = vadd.f32 1e-16, %v2367
    %v2369 = vpop.f32.mrb[0].mxu0
    %v2370 = vpop.f32.mrb[0].mxu0
    %v2371 = vadd.f32 1e-16, %v2370
    %v2372 = vpop.f32.mrb[0].mxu0
    %2373 = vmatprep.mubr.bf16.mxu0 0
    %2374 = vmatmul.mubr.bf16.gmra.mrb[0].mxu0 %v2064
    %v2375 = vpop.f32.mrb[0].mxu0
    %v2376 = vadd.f32 1e-16, %v2375
    %v2377 = vpop.f32.mrb[0].mxu0
    %v2378 = vpop.f32.mrb[0].mxu0
    %v2379 = vadd.f32 1e-16, %v2378
    %v2380 = vpop.f32.mrb[0].mxu0
    %2381 = vmatprep.mubr.bf16.mxu0 0
    %2382 = vmatmul.mubr.bf16.gmra.mrb[0].mxu0 %v2067
    %v2383 = vpop.f32.mrb[0].mxu0
    %v2384 = vadd.f32 1e-16, %v2383
    %v2385 = vpop.f32.mrb[0].mxu0
    %v2386 = vpop.f32.mrb[0].mxu0
    %v2387 = vpop.f32.mrb[0].mxu0
    %2388 = vdwg.mxu0
    %v2389 = vrcp.pop %v2368
    %v2390 = vrcp.pop %v2371
    %v2391 = vrcp.pop %v2376
    %v2392 = vrcp.pop %v2379
    %v2393 = vrcp.pop %v2384
    %v2394 = vmul.f32 %v2269, %v2389
    %v2395 = vmul.f32 %v2271, %v2390
    %v2396 = vmul.f32 %v2273, %v2391
    %v2397 = vmul.f32 %v2275, %v2392
    %v2398 = vmul.f32 %v2277, %v2393
    %v2399 = vpack.c.bf16 %v2395, %v2394
    %v2400 = vpack.c.bf16 %v2397, %v2396
    %v2401 = vpack.c.bf16 %v2398, %v2398
    %v2402 = vld [vmem:[%s7] sm:$0xff]
    %v2404 = vcombine.high %v2402, %v2402
    %v2406 = vunpack.c.l.s4 1983009808
    %v2407 = vunpack.c.0.s8 %v2406
    %v2408 = vlaneseq
    %v2409 = vshrl.u32 %v2408, 7
    %v2410 = vsub.s32 %v2407, %v2409
    %v2411 = vrot.slane %v2402, %v2410
    %v2413 = vunpack.c.l.s4 1983009808
    %v2414 = vunpack.c.0.s8 %v2413
    %v2415 = vlaneseq
    %v2416 = vshrl.u32 %v2415, 7
    %v2417 = vsub.s32 %v2414, %v2416
    %v2418 = vrot.slane %v2404, %v2417
    %v2419 = vcombine.high %v2411, %v2411
    %v2420 = vcombine.high %v2418, %v2418
    %v2422 = vsel %vm2241, %v2399, 0
    %v2425 = vsel %vm2241, %v2400, 0
    %v2428 = vsel %vm2241, %v2401, 0
    %v2431 = vsel %vm182, %v2411, 0
    %v2434 = vsel %vm182, %v2419, 0
    %v2437 = vsel %vm182, %v2418, 0
    %v2440 = vsel %vm182, %v2420, 0
    %2442 = vmatprep.subr.bf16.mxu0 %v2434
    %2443 = vmatpush1.bf16.msra.mxu0 %v2431
    %2444 = vmatprep.subr.bf16.mxu0 0
    %2445 = vmatpush1.bf16.msra.mxu0 0
    %2446 = vmatprep.subr.bf16.mxu0 0
    %2447 = vmatpush1.bf16.msra.mxu0 0
    %2448 = vmatprep.subr.bf16.mxu0 0
    %2449 = vmatpush1.bf16.msra.mxu0 0
    %2450 = vmatprep.subr.bf16.mxu0 0
    %2451 = vmatpush1.bf16.msra.mxu0 0
    %2452 = vmatprep.subr.bf16.mxu0 0
    %2453 = vmatpush1.bf16.msra.mxu0 0
    %2454 = vmatprep.subr.bf16.mxu0 0
    %2455 = vmatpush1.bf16.msra.mxu0 0
    %2456 = vmatprep.subr.bf16.mxu0 0
    %2457 = vmatpush1.bf16.msra.mxu0 0
    %2458 = vmatprep.subr.bf16.mxu0 0
    %2459 = vmatpush1.bf16.msra.mxu0 0
    %2460 = vmatprep.subr.bf16.mxu0 0
    %2461 = vmatpush1.bf16.msra.mxu0 0
    %2462 = vmatprep.subr.bf16.mxu0 0
    %2463 = vmatpush1.bf16.msra.mxu0 0
    %2464 = vmatprep.subr.bf16.mxu0 0
    %2465 = vmatpush1.bf16.msra.mxu0 0
    %2466 = vmatprep.subr.bf16.mxu0 0
    %2467 = vmatpush1.bf16.msra.mxu0 0
    %2468 = vmatprep.subr.bf16.mxu0 0
    %2469 = vmatpush1.bf16.msra.mxu0 0
    %2470 = vmatprep.subr.bf16.mxu0 0
    %2471 = vmatpush1.bf16.msra.mxu0 0
    %2472 = vmatprep.subr.bf16.mxu0 0
    %2473 = vmatpush1.bf16.msra.mxu0 0
    %2474 = vmatprep.mubr.bf16.mxu0 0
    %2475 = vmatmul.mubr.bf16.gmra.mrb[0].mxu0 %v2422
    %v2476 = vpop.f32.mrb[0].mxu0
    %v2477 = vadd.f32 0.0, %v2476
    %v2478 = vpop.f32.mrb[0].mxu0
    %v2479 = vadd.f32 0.0, %v2478
    %v2480 = vpop.f32.mrb[0].mxu0
    %v2481 = vadd.f32 0.0, %v2480
    %v2482 = vpop.f32.mrb[0].mxu0
    %v2483 = vadd.f32 0.0, %v2482
    %2484 = vmatprep.mubr.bf16.mxu0 0
    %2485 = vmatmul.mubr.bf16.gmra.mrb[0].mxu0 %v2425
    %v2486 = vpop.f32.mrb[0].mxu0
    %v2487 = vadd.f32 0.0, %v2486
    %v2488 = vpop.f32.mrb[0].mxu0
    %v2489 = vadd.f32 0.0, %v2488
    %v2490 = vpop.f32.mrb[0].mxu0
    %v2491 = vadd.f32 0.0, %v2490
    %v2492 = vpop.f32.mrb[0].mxu0
    %v2493 = vadd.f32 0.0, %v2492
    %2494 = vmatprep.mubr.bf16.mxu0 0
    %2495 = vmatmul.mubr.bf16.gmra.mrb[0].mxu0 %v2428
    %v2496 = vpop.f32.mrb[0].mxu0
    %v2497 = vadd.f32 0.0, %v2496
    %v2498 = vpop.f32.mrb[0].mxu0
    %v2499 = vadd.f32 0.0, %v2498
    %v2500 = vpop.f32.mrb[0].mxu0
    %v2501 = vpop.f32.mrb[0].mxu0
    %2502 = vdwg.mxu0
    %2503 = vmatprep.subr.bf16.mxu0 %v2440
    %2504 = vmatpush1.bf16.msra.mxu0 %v2437
    %2505 = vmatprep.subr.bf16.mxu0 0
    %2506 = vmatpush1.bf16.msra.mxu0 0
    %2507 = vmatprep.subr.bf16.mxu0 0
    %2508 = vmatpush1.bf16.msra.mxu0 0
    %2509 = vmatprep.subr.bf16.mxu0 0
    %2510 = vmatpush1.bf16.msra.mxu0 0
    %2511 = vmatprep.subr.bf16.mxu0 0
    %2512 = vmatpush1.bf16.msra.mxu0 0
    %2513 = vmatprep.subr.bf16.mxu0 0
    %2514 = vmatpush1.bf16.msra.mxu0 0
    %2515 = vmatprep.subr.bf16.mxu0 0
    %2516 = vmatpush1.bf16.msra.mxu0 0
    %2517 = vmatprep.subr.bf16.mxu0 0
    %2518 = vmatpush1.bf16.msra.mxu0 0
    %2519 = vmatprep.subr.bf16.mxu0 0
    %2520 = vmatpush1.bf16.msra.mxu0 0
    %2521 = vmatprep.subr.bf16.mxu0 0
    %2522 = vmatpush1.bf16.msra.mxu0 0
    %2523 = vmatprep.subr.bf16.mxu0 0
    %2524 = vmatpush1.bf16.msra.mxu0 0
    %2525 = vmatprep.subr.bf16.mxu0 0
    %2526 = vmatpush1.bf16.msra.mxu0 0
    %2527 = vmatprep.subr.bf16.mxu0 0
    %2528 = vmatpush1.bf16.msra.mxu0 0
    %2529 = vmatprep.subr.bf16.mxu0 0
    %2530 = vmatpush1.bf16.msra.mxu0 0
    %2531 = vmatprep.subr.bf16.mxu0 0
    %2532 = vmatpush1.bf16.msra.mxu0 0
    %2533 = vmatprep.subr.bf16.mxu0 0
    %2534 = vmatpush1.bf16.msra.mxu0 0
    %2535 = vmatprep.mubr.bf16.mxu0 0
    %2536 = vmatmul.mubr.bf16.gmra.mrb[0].mxu0 %v2422
    %v2537 = vpop.f32.mrb[0].mxu0
    %v2538 = vadd.f32 0.0, %v2537
    %v2539 = vpop.f32.mrb[0].mxu0
    %v2540 = vadd.f32 0.0, %v2539
    %v2541 = vpop.f32.mrb[0].mxu0
    %v2542 = vadd.f32 0.0, %v2541
    %v2543 = vpop.f32.mrb[0].mxu0
    %v2544 = vadd.f32 0.0, %v2543
    %2545 = vmatprep.mubr.bf16.mxu0 0
    %2546 = vmatmul.mubr.bf16.gmra.mrb[0].mxu0 %v2425
    %v2547 = vpop.f32.mrb[0].mxu0
    %v2548 = vadd.f32 0.0, %v2547
    %v2549 = vpop.f32.mrb[0].mxu0
    %v2550 = vadd.f32 0.0, %v2549
    %v2551 = vpop.f32.mrb[0].mxu0
    %v2552 = vadd.f32 0.0, %v2551
    %v2553 = vpop.f32.mrb[0].mxu0
    %v2554 = vadd.f32 0.0, %v2553
    %2555 = vmatprep.mubr.bf16.mxu0 0
    %2556 = vmatmul.mubr.bf16.gmra.mrb[0].mxu0 %v2428
    %v2557 = vpop.f32.mrb[0].mxu0
    %v2558 = vadd.f32 0.0, %v2557
    %v2559 = vpop.f32.mrb[0].mxu0
    %v2560 = vadd.f32 0.0, %v2559
    %v2561 = vpop.f32.mrb[0].mxu0
    %v2562 = vpop.f32.mrb[0].mxu0
    %2563 = vdwg.mxu0
    %v2565 = vsel %vm119, %v1274, 0
    %v2568 = vsel %vm119, %v1275, 0
    %v2571 = vsel %vm119, %v1276, 0
    %v2574 = vsel %vm119, %v1277, 0
    %2576 = vmatprep.subr.bf16.mxu0 %v2568
    %2577 = vmatpush1.bf16.msra.mxu0 %v2565
    %2578 = vmatprep.subr.bf16.mxu0 0
    %2579 = vmatpush1.bf16.msra.mxu0 0
    %2580 = vmatprep.subr.bf16.mxu0 0
    %2581 = vmatpush1.bf16.msra.mxu0 0
    %2582 = vmatprep.subr.bf16.mxu0 0
    %2583 = vmatpush1.bf16.msra.mxu0 0
    %2584 = vmatprep.subr.bf16.mxu0 0
    %2585 = vmatpush1.bf16.msra.mxu0 0
    %2586 = vmatprep.subr.bf16.mxu0 0
    %2587 = vmatpush1.bf16.msra.mxu0 0
    %2588 = vmatprep.subr.bf16.mxu0 0
    %2589 = vmatpush1.bf16.msra.mxu0 0
    %2590 = vmatprep.subr.bf16.mxu0 0
    %2591 = vmatpush1.bf16.msra.mxu0 0
    %2592 = vmatprep.subr.bf16.mxu0 0
    %2593 = vmatpush1.bf16.msra.mxu0 0
    %2594 = vmatprep.subr.bf16.mxu0 0
    %2595 = vmatpush1.bf16.msra.mxu0 0
    %2596 = vmatprep.subr.bf16.mxu0 0
    %2597 = vmatpush1.bf16.msra.mxu0 0
    %2598 = vmatprep.subr.bf16.mxu0 0
    %2599 = vmatpush1.bf16.msra.mxu0 0
    %2600 = vmatprep.subr.bf16.mxu0 0
    %2601 = vmatpush1.bf16.msra.mxu0 0
    %2602 = vmatprep.subr.bf16.mxu0 0
    %2603 = vmatpush1.bf16.msra.mxu0 0
    %2604 = vmatprep.subr.bf16.mxu0 0
    %2605 = vmatpush1.bf16.msra.mxu0 0
    %2606 = vmatprep.subr.bf16.mxu0 0
    %2607 = vmatpush1.bf16.msra.mxu0 0
    %2608 = vmatprep.mubr.bf16.mxu0 0
    %2609 = vmatmul.mubr.bf16.gmra.mrb[0].mxu0 %v2129
    %v2610 = vpop.f32.mrb[0].mxu0
    %v2611 = vadd.f32 0.0, %v2610
    %v2612 = vpop.f32.mrb[0].mxu0
    %v2613 = vadd.f32 0.0, %v2612
    %v2614 = vpop.f32.mrb[0].mxu0
    %v2615 = vadd.f32 0.0, %v2614
    %v2616 = vpop.f32.mrb[0].mxu0
    %v2617 = vadd.f32 0.0, %v2616
    %2618 = vmatprep.mubr.bf16.mxu0 0
    %2619 = vmatmul.mubr.bf16.gmra.mrb[0].mxu0 %v2132
    %v2620 = vpop.f32.mrb[0].mxu0
    %v2621 = vadd.f32 0.0, %v2620
    %v2622 = vpop.f32.mrb[0].mxu0
    %v2623 = vadd.f32 0.0, %v2622
    %v2624 = vpop.f32.mrb[0].mxu0
    %v2625 = vadd.f32 0.0, %v2624
    %v2626 = vpop.f32.mrb[0].mxu0
    %v2627 = vadd.f32 0.0, %v2626
    %2628 = vmatprep.mubr.bf16.mxu0 0
    %2629 = vmatmul.mubr.bf16.gmra.mrb[0].mxu0 %v2135
    %v2630 = vpop.f32.mrb[0].mxu0
    %v2631 = vadd.f32 0.0, %v2630
    %v2632 = vpop.f32.mrb[0].mxu0
    %v2633 = vadd.f32 0.0, %v2632
    %v2634 = vpop.f32.mrb[0].mxu0
    %v2635 = vpop.f32.mrb[0].mxu0
    %2636 = vdwg.mxu0
    %2637 = vmatprep.subr.bf16.mxu0 %v2574
    %2638 = vmatpush1.bf16.msra.mxu0 %v2571
    %2639 = vmatprep.subr.bf16.mxu0 0
    %2640 = vmatpush1.bf16.msra.mxu0 0
    %2641 = vmatprep.subr.bf16.mxu0 0
    %2642 = vmatpush1.bf16.msra.mxu0 0
    %2643 = vmatprep.subr.bf16.mxu0 0
    %2644 = vmatpush1.bf16.msra.mxu0 0
    %2645 = vmatprep.subr.bf16.mxu0 0
    %2646 = vmatpush1.bf16.msra.mxu0 0
    %2647 = vmatprep.subr.bf16.mxu0 0
    %2648 = vmatpush1.bf16.msra.mxu0 0
    %2649 = vmatprep.subr.bf16.mxu0 0
    %2650 = vmatpush1.bf16.msra.mxu0 0
    %2651 = vmatprep.subr.bf16.mxu0 0
    %2652 = vmatpush1.bf16.msra.mxu0 0
    %2653 = vmatprep.subr.bf16.mxu0 0
    %2654 = vmatpush1.bf16.msra.mxu0 0
    %2655 = vmatprep.subr.bf16.mxu0 0
    %2656 = vmatpush1.bf16.msra.mxu0 0
    %2657 = vmatprep.subr.bf16.mxu0 0
    %2658 = vmatpush1.bf16.msra.mxu0 0
    %2659 = vmatprep.subr.bf16.mxu0 0
    %2660 = vmatpush1.bf16.msra.mxu0 0
    %2661 = vmatprep.subr.bf16.mxu0 0
    %2662 = vmatpush1.bf16.msra.mxu0 0
    %2663 = vmatprep.subr.bf16.mxu0 0
    %2664 = vmatpush1.bf16.msra.mxu0 0
    %2665 = vmatprep.subr.bf16.mxu0 0
    %2666 = vmatpush1.bf16.msra.mxu0 0
    %2667 = vmatprep.subr.bf16.mxu0 0
    %2668 = vmatpush1.bf16.msra.mxu0 0
    %2669 = vmatprep.mubr.bf16.mxu0 0
    %2670 = vmatmul.mubr.bf16.gmra.mrb[0].mxu0 %v2129
    %v2671 = vpop.f32.mrb[0].mxu0
    %v2672 = vadd.f32 0.0, %v2671
    %v2673 = vpop.f32.mrb[0].mxu0
    %v2674 = vadd.f32 0.0, %v2673
    %v2675 = vpop.f32.mrb[0].mxu0
    %v2676 = vadd.f32 0.0, %v2675
    %v2677 = vpop.f32.mrb[0].mxu0
    %v2678 = vadd.f32 0.0, %v2677
    %2679 = vmatprep.mubr.bf16.mxu0 0
    %2680 = vmatmul.mubr.bf16.gmra.mrb[0].mxu0 %v2132
    %v2681 = vpop.f32.mrb[0].mxu0
    %v2682 = vadd.f32 0.0, %v2681
    %v2683 = vpop.f32.mrb[0].mxu0
    %v2684 = vadd.f32 0.0, %v2683
    %v2685 = vpop.f32.mrb[0].mxu0
    %v2686 = vadd.f32 0.0, %v2685
    %v2687 = vpop.f32.mrb[0].mxu0
    %v2688 = vadd.f32 0.0, %v2687
    %2689 = vmatprep.mubr.bf16.mxu0 0
    %2690 = vmatmul.mubr.bf16.gmra.mrb[0].mxu0 %v2135
    %v2691 = vpop.f32.mrb[0].mxu0
    %v2692 = vadd.f32 0.0, %v2691
    %v2693 = vpop.f32.mrb[0].mxu0
    %v2694 = vadd.f32 0.0, %v2693
    %v2695 = vpop.f32.mrb[0].mxu0
    %v2696 = vpop.f32.mrb[0].mxu0
    %2697 = vdwg.mxu0
    %v2698 = vmul.f32 %v2611, %v2477
    %v2699 = vmul.f32 %v2613, %v2479
    %v2700 = vmul.f32 %v2672, %v2538
    %v2701 = vmul.f32 %v2674, %v2540
    %v2702 = vmul.f32 %v2615, %v2481
    %v2703 = vmul.f32 %v2617, %v2483
    %v2704 = vmul.f32 %v2676, %v2542
    %v2705 = vmul.f32 %v2678, %v2544
    %v2706 = vmul.f32 %v2621, %v2487
    %v2707 = vmul.f32 %v2623, %v2489
    %v2708 = vmul.f32 %v2682, %v2548
    %v2709 = vmul.f32 %v2684, %v2550
    %v2710 = vmul.f32 %v2625, %v2491
    %v2711 = vmul.f32 %v2627, %v2493
    %v2712 = vmul.f32 %v2686, %v2552
    %v2713 = vmul.f32 %v2688, %v2554
    %v2714 = vmul.f32 %v2631, %v2497
    %v2715 = vmul.f32 %v2633, %v2499
    %v2716 = vmul.f32 %v2692, %v2558
    %v2717 = vmul.f32 %v2694, %v2560
    %v2718 = vpack.c.bf16 %v2702, %v2698
    %v2719 = vpack.c.bf16 %v2703, %v2699
    %v2720 = vpack.c.bf16 %v2704, %v2700
    %v2721 = vpack.c.bf16 %v2705, %v2701
    %v2722 = vpack.c.bf16 %v2710, %v2706
    %v2723 = vpack.c.bf16 %v2711, %v2707
    %v2724 = vpack.c.bf16 %v2712, %v2708
    %v2725 = vpack.c.bf16 %v2713, %v2709
    %v2726 = vpack.c.bf16 %v2714, %v2714
    %v2727 = vpack.c.bf16 %v2715, %v2715
    %v2728 = vpack.c.bf16 %v2716, %v2716
    %v2729 = vpack.c.bf16 %v2717, %v2717
    %v2730 = vld [vmem:[%s11] sm:$0xf]
    %v2732 = vlaneseq
    %v2733 = vshrl.u32 %v2732, 7
    %v2734 = vsub.s32 0, %v2733
    %v2735 = vrot.slane %v2730, %v2734
    %v2736 = vlaneseq
    %v2737 = vshrl.u32 %v2736, 7
    %v2738 = vsub.s32 1, %v2737
    %v2739 = vrot.slane %v2730, %v2738
    %v2740 = vlaneseq
    %v2741 = vshrl.u32 %v2740, 7
    %v2742 = vsub.s32 2, %v2741
    %v2743 = vrot.slane %v2730, %v2742
    %v2744 = vlaneseq
    %v2745 = vshrl.u32 %v2744, 7
    %v2746 = vsub.s32 3, %v2745
    %v2747 = vrot.slane %v2730, %v2746
    %v2753 = vsel %vm275, %v2726, 0
    %v2756 = vsel %vm275, %v2727, 0
    %v2759 = vsel %vm275, %v2728, 0
    %v2762 = vsel %vm275, %v2729, 0
    %2764 = vmatprep.subr.bf16.mxu0 %v2719
    %2765 = vmatpush1.bf16.msra.mxu0 %v2718
    %2766 = vmatprep.subr.bf16.mxu0 %v2723
    %2767 = vmatpush1.bf16.msra.mxu0 %v2722
    %2768 = vmatprep.subr.bf16.mxu0 %v2756
    %2769 = vmatpush1.bf16.msra.mxu0 %v2753
    %2770 = vmatprep.subr.bf16.mxu0 0
    %2771 = vmatpush1.bf16.msra.mxu0 0
    %2772 = vmatprep.subr.bf16.mxu0 0
    %2773 = vmatpush1.bf16.msra.mxu0 0
    %2774 = vmatprep.subr.bf16.mxu0 0
    %2775 = vmatpush1.bf16.msra.mxu0 0
    %2776 = vmatprep.subr.bf16.mxu0 0
    %2777 = vmatpush1.bf16.msra.mxu0 0
    %2778 = vmatprep.subr.bf16.mxu0 0
    %2779 = vmatpush1.bf16.msra.mxu0 0
    %2780 = vmatprep.subr.bf16.mxu0 0
    %2781 = vmatpush1.bf16.msra.mxu0 0
    %2782 = vmatprep.subr.bf16.mxu0 0
    %2783 = vmatpush1.bf16.msra.mxu0 0
    %2784 = vmatprep.subr.bf16.mxu0 0
    %2785 = vmatpush1.bf16.msra.mxu0 0
    %2786 = vmatprep.subr.bf16.mxu0 0
    %2787 = vmatpush1.bf16.msra.mxu0 0
    %2788 = vmatprep.subr.bf16.mxu0 0
    %2789 = vmatpush1.bf16.msra.mxu0 0
    %2790 = vmatprep.subr.bf16.mxu0 0
    %2791 = vmatpush1.bf16.msra.mxu0 0
    %2792 = vmatprep.subr.bf16.mxu0 0
    %2793 = vmatpush1.bf16.msra.mxu0 0
    %2794 = vmatprep.subr.bf16.mxu0 0
    %2795 = vmatpush1.bf16.msra.mxu0 0
    %2796 = vmatprep.mubr.bf16.mxu0 0
    %2797 = vmatmul.mubr.bf16.gmra.mrb[0].mxu0 %v2283
    %v2798 = vpop.f32.mrb[0].mxu0
    %v2799 = vadd.f32 %v2735, %v2798
    %v2800 = vpop.f32.mrb[0].mxu0
    %v2801 = vadd.f32 %v2739, %v2800
    %v2802 = vpop.f32.mrb[0].mxu0
    %v2803 = vadd.f32 %v2735, %v2802
    %v2804 = vpop.f32.mrb[0].mxu0
    %v2805 = vadd.f32 %v2739, %v2804
    %2806 = vdwg.mxu0
    %2807 = vmatprep.subr.bf16.mxu0 %v2721
    %2808 = vmatpush1.bf16.msra.mxu0 %v2720
    %2809 = vmatprep.subr.bf16.mxu0 %v2725
    %2810 = vmatpush1.bf16.msra.mxu0 %v2724
    %2811 = vmatprep.subr.bf16.mxu0 %v2762
    %2812 = vmatpush1.bf16.msra.mxu0 %v2759
    %2813 = vmatprep.subr.bf16.mxu0 0
    %2814 = vmatpush1.bf16.msra.mxu0 0
    %2815 = vmatprep.subr.bf16.mxu0 0
    %2816 = vmatpush1.bf16.msra.mxu0 0
    %2817 = vmatprep.subr.bf16.mxu0 0
    %2818 = vmatpush1.bf16.msra.mxu0 0
    %2819 = vmatprep.subr.bf16.mxu0 0
    %2820 = vmatpush1.bf16.msra.mxu0 0
    %2821 = vmatprep.subr.bf16.mxu0 0
    %2822 = vmatpush1.bf16.msra.mxu0 0
    %2823 = vmatprep.subr.bf16.mxu0 0
    %2824 = vmatpush1.bf16.msra.mxu0 0
    %2825 = vmatprep.subr.bf16.mxu0 0
    %2826 = vmatpush1.bf16.msra.mxu0 0
    %2827 = vmatprep.subr.bf16.mxu0 0
    %2828 = vmatpush1.bf16.msra.mxu0 0
    %2829 = vmatprep.subr.bf16.mxu0 0
    %2830 = vmatpush1.bf16.msra.mxu0 0
    %2831 = vmatprep.subr.bf16.mxu0 0
    %2832 = vmatpush1.bf16.msra.mxu0 0
    %2833 = vmatprep.subr.bf16.mxu0 0
    %2834 = vmatpush1.bf16.msra.mxu0 0
    %2835 = vmatprep.subr.bf16.mxu0 0
    %2836 = vmatpush1.bf16.msra.mxu0 0
    %2837 = vmatprep.subr.bf16.mxu0 0
    %2838 = vmatpush1.bf16.msra.mxu0 0
    %2839 = vmatprep.mubr.bf16.mxu0 0
    %2840 = vmatmul.mubr.bf16.gmra.mrb[0].mxu0 %v2283
    %v2841 = vpop.f32.mrb[0].mxu0
    %v2842 = vadd.f32 %v2743, %v2841
    %v2843 = vpop.f32.mrb[0].mxu0
    %v2844 = vadd.f32 %v2747, %v2843
    %v2845 = vpop.f32.mrb[0].mxu0
    %v2846 = vadd.f32 %v2743, %v2845
    %v2847 = vpop.f32.mrb[0].mxu0
    %v2848 = vadd.f32 %v2747, %v2847
    %2849 = vdwg.mxu0
    %v2850 = vmax.f32 %v2799, 0.0
    %v2851 = vmax.f32 %v2801, 0.0
    %v2852 = vmax.f32 %v2842, 0.0
    %v2853 = vmax.f32 %v2844, 0.0
    %v2854 = vmax.f32 %v2803, 0.0
    %v2855 = vmax.f32 %v2805, 0.0
    %v2856 = vmax.f32 %v2846, 0.0
    %v2857 = vmax.f32 %v2848, 0.0
    %2858 = vst [vmem:[%s13] sm:$0xff] %v2850
    %2859 = vst [vmem:[%s13 + $0x8] sm:$0xff] %v2851
    %2860 = vst [vmem:[%s13 + $0x10] sm:$0xff] %v2852
    %2861 = vst [vmem:[%s13 + $0x18] sm:$0xff] %v2853
    %2862 = vst [vmem:[%s13 + $0x20] sm:$0x3] %v2854
    %2863 = vst [vmem:[%s13 + $0x28] sm:$0x3] %v2855
    %2864 = vst [vmem:[%s13 + $0x30] sm:$0x3] %v2856
    %2865 = vst [vmem:[%s13 + $0x38] sm:$0x3] %v2857
    %v2866 = vld [vmem:[%s12] sm:$0xff]
    %v2867 = vld [vmem:[%s12 + $0x8] sm:$0xff]
    %v2868 = vld [vmem:[%s12 + $0x10] sm:$0xff]
    %v2869 = vld [vmem:[%s12 + $0x18] sm:$0xff]
    %v2870 = vld [vmem:[%s12 + $0x20] sm:$0xff]
    %v2871 = vld [vmem:[%s12 + $0x28] sm:$0xff]
    %v2872 = vld [vmem:[%s12 + $0x30] sm:$0xff]
    %v2873 = vld [vmem:[%s12 + $0x38] sm:$0xff]
    %v2874 = vld [vmem:[%s12 + $0x40] sm:$0xff]
    %v2875 = vld [vmem:[%s12 + $0x48] sm:$0xff]
    %v2876 = vld [vmem:[%s12 + $0x50] sm:$0xff]
    %v2877 = vld [vmem:[%s12 + $0x58] sm:$0xff]
    %v2878 = vld [vmem:[%s12 + $0x60] sm:$0xff]
    %v2879 = vld [vmem:[%s12 + $0x68] sm:$0xff]
    %v2880 = vld [vmem:[%s12 + $0x70] sm:$0xff]
    %v2881 = vld [vmem:[%s12 + $0x78] sm:$0xff]
    %v2882 = vld [vmem:[%s12 + $0x80] sm:$0xff]
    %v2883 = vld [vmem:[%s12 + $0x88] sm:$0xff]
    %v2884 = vld [vmem:[%s12 + $0x90] sm:$0xff]
    %v2885 = vld [vmem:[%s12 + $0x98] sm:$0xff]
    %v2886 = vld [vmem:[%s12 + $0xa0] sm:$0xff]
    %v2887 = vld [vmem:[%s12 + $0xa8] sm:$0xff]
    %v2888 = vld [vmem:[%s12 + $0xb0] sm:$0xff]
    %v2889 = vld [vmem:[%s12 + $0xb8] sm:$0xff]
    %v2890 = vld [vmem:[%s12 + $0xc0] sm:$0xff]
    %v2891 = vld [vmem:[%s12 + $0xc8] sm:$0xff]
    %v2892 = vld [vmem:[%s12 + $0xd0] sm:$0xff]
    %v2893 = vld [vmem:[%s12 + $0xd8] sm:$0xff]
    %v2894 = vld [vmem:[%s12 + $0xe0] sm:$0xff]
    %v2895 = vld [vmem:[%s12 + $0xe8] sm:$0xff]
    %v2896 = vld [vmem:[%s12 + $0xf0] sm:$0xff]
    %v2897 = vld [vmem:[%s12 + $0xf8] sm:$0xff]
    %v2898 = vld [vmem:[%s12 + $0x100] sm:$0xff]
    %v2899 = vld [vmem:[%s12 + $0x108] sm:$0xff]
    %v2900 = vld [vmem:[%s12 + $0x110] sm:$0xff]
    %v2901 = vld [vmem:[%s12 + $0x118] sm:$0xff]
    %v2902 = vld [vmem:[%s12 + $0x120] sm:$0xff]
    %v2903 = vld [vmem:[%s12 + $0x128] sm:$0xff]
    %v2904 = vld [vmem:[%s12 + $0x130] sm:$0xff]
    %v2905 = vld [vmem:[%s12 + $0x138] sm:$0xff]
    %v2906 = vld [vmem:[%s12 + $0x140] sm:$0xff]
    %v2907 = vld [vmem:[%s12 + $0x148] sm:$0xff]
    %v2908 = vld [vmem:[%s12 + $0x150] sm:$0xff]
    %v2909 = vld [vmem:[%s12 + $0x158] sm:$0xff]
    %v2910 = vld [vmem:[%s12 + $0x160] sm:$0xff]
    %v2911 = vld [vmem:[%s12 + $0x168] sm:$0xff]
    %v2912 = vld [vmem:[%s12 + $0x170] sm:$0xff]
    %v2913 = vld [vmem:[%s12 + $0x178] sm:$0xff]
    %v2914 = vld [vmem:[%s12 + $0x180] sm:$0xff]
    %v2915 = vld [vmem:[%s12 + $0x188] sm:$0xff]
    %v2916 = vld [vmem:[%s12 + $0x190] sm:$0xff]
    %v2917 = vld [vmem:[%s12 + $0x198] sm:$0xff]
    %v2918 = vld [vmem:[%s12 + $0x1a0] sm:$0xff]
    %v2919 = vld [vmem:[%s12 + $0x1a8] sm:$0xff]
    %v2920 = vld [vmem:[%s12 + $0x1b0] sm:$0xff]
    %v2921 = vld [vmem:[%s12 + $0x1b8] sm:$0xff]
    %v2922 = vld [vmem:[%s12 + $0x1c0] sm:$0xff]
    %v2923 = vld [vmem:[%s12 + $0x1c8] sm:$0xff]
    %v2924 = vld [vmem:[%s12 + $0x1d0] sm:$0xff]
    %v2925 = vld [vmem:[%s12 + $0x1d8] sm:$0xff]
    %v2926 = vld [vmem:[%s12 + $0x1e0] sm:$0xff]
    %v2927 = vld [vmem:[%s12 + $0x1e8] sm:$0xff]
    %v2928 = vld [vmem:[%s12 + $0x1f0] sm:$0xff]
    %v2929 = vld [vmem:[%s12 + $0x1f8] sm:$0xff]
    %2930 = vmatprep.subr.mxu0 0.0
    %2931 = vmatpush1.msra.mxu0 %v2866
    %2932 = vmatprep.subr.mxu0 0.0
    %2933 = vmatpush1.msra.mxu0 %v2867
    %2934 = vmatprep.subr.mxu0 0.0
    %2935 = vmatpush1.msra.mxu0 %v2868
    %2936 = vmatprep.subr.mxu0 0.0
    %2937 = vmatpush1.msra.mxu0 %v2869
    %2938 = vmatprep.subr.mxu0 0.0
    %2939 = vmatpush1.msra.mxu0 %v2870
    %2940 = vmatprep.subr.mxu0 0.0
    %2941 = vmatpush1.msra.mxu0 %v2871
    %2942 = vmatprep.subr.mxu0 0.0
    %2943 = vmatpush1.msra.mxu0 %v2872
    %2944 = vmatprep.subr.mxu0 0.0
    %2945 = vmatpush1.msra.mxu0 %v2873
    %2946 = vmatprep.subr.mxu0 0.0
    %2947 = vmatpush1.msra.mxu0 %v2874
    %2948 = vmatprep.subr.mxu0 0.0
    %2949 = vmatpush1.msra.mxu0 %v2875
    %2950 = vmatprep.subr.mxu0 0.0
    %2951 = vmatpush1.msra.mxu0 %v2876
    %2952 = vmatprep.subr.mxu0 0.0
    %2953 = vmatpush1.msra.mxu0 %v2877
    %2954 = vmatprep.subr.mxu0 0.0
    %2955 = vmatpush1.msra.mxu0 %v2878
    %2956 = vmatprep.subr.mxu0 0.0
    %2957 = vmatpush1.msra.mxu0 %v2879
    %2958 = vmatprep.subr.mxu0 0.0
    %2959 = vmatpush1.msra.mxu0 %v2880
    %2960 = vmatprep.subr.mxu0 0.0
    %2961 = vmatpush1.msra.mxu0 %v2881
    %2962 = vmatprep.subr.mxu0 0.0
    %2963 = vmatpush1.msra.mxu0 %v2882
    %2964 = vmatprep.subr.mxu0 0.0
    %2965 = vmatpush1.msra.mxu0 %v2883
    %2966 = vmatprep.subr.mxu0 0.0
    %2967 = vmatpush1.msra.mxu0 %v2884
    %2968 = vmatprep.subr.mxu0 0.0
    %2969 = vmatpush1.msra.mxu0 %v2885
    %2970 = vmatprep.subr.mxu0 0.0
    %2971 = vmatpush1.msra.mxu0 %v2886
    %2972 = vmatprep.subr.mxu0 0.0
    %2973 = vmatpush1.msra.mxu0 %v2887
    %2974 = vmatprep.subr.mxu0 0.0
    %2975 = vmatpush1.msra.mxu0 %v2888
    %2976 = vmatprep.subr.mxu0 0.0
    %2977 = vmatpush1.msra.mxu0 %v2889
    %2978 = vmatprep.subr.mxu0 0.0
    %2979 = vmatpush1.msra.mxu0 %v2890
    %2980 = vmatprep.subr.mxu0 0.0
    %2981 = vmatpush1.msra.mxu0 %v2891
    %2982 = vmatprep.subr.mxu0 0.0
    %2983 = vmatpush1.msra.mxu0 %v2892
    %2984 = vmatprep.subr.mxu0 0.0
    %2985 = vmatpush1.msra.mxu0 %v2893
    %2986 = vmatprep.subr.mxu0 0.0
    %2987 = vmatpush1.msra.mxu0 %v2894
    %2988 = vmatprep.subr.mxu0 0.0
    %2989 = vmatpush1.msra.mxu0 %v2895
    %2990 = vmatprep.subr.mxu0 0.0
    %2991 = vmatpush1.msra.mxu0 %v2896
    %2992 = vmatprep.subr.mxu0 0.0
    %2993 = vmatpush1.msra.mxu0 %v2897
    %2994 = vmatprep.mubr.f32.mxu0 %v2851
    %2995 = vmatmul.mubr.f32.gmra.mrb[0].mxu0 %v2850
    %v2996 = vpop.f32.mrb[0].mxu0
    %v2997 = vadd.f32 0.0, %v2996
    %v2998 = vpop.f32.mrb[0].mxu0
    %2999 = vmatprep.mubr.f32.mxu0 %v2855
    %3000 = vmatmul.mubr.f32.gmra.mrb[0].mxu0 %v2854
    %v3001 = vpop.f32.mrb[0].mxu0
    %v3002 = vadd.f32 0.0, %v3001
    %v3003 = vpop.f32.mrb[0].mxu0
    %3004 = vdwg.mxu0
    %3005 = vmatprep.subr.mxu0 0.0
    %3006 = vmatpush1.msra.mxu0 %v2898
    %3007 = vmatprep.subr.mxu0 0.0
    %3008 = vmatpush1.msra.mxu0 %v2899
    %3009 = vmatprep.subr.mxu0 0.0
    %3010 = vmatpush1.msra.mxu0 %v2900
    %3011 = vmatprep.subr.mxu0 0.0
    %3012 = vmatpush1.msra.mxu0 %v2901
    %3013 = vmatprep.subr.mxu0 0.0
    %3014 = vmatpush1.msra.mxu0 %v2902
    %3015 = vmatprep.subr.mxu0 0.0
    %3016 = vmatpush1.msra.mxu0 %v2903
    %3017 = vmatprep.subr.mxu0 0.0
    %3018 = vmatpush1.msra.mxu0 %v2904
    %3019 = vmatprep.subr.mxu0 0.0
    %3020 = vmatpush1.msra.mxu0 %v2905
    %3021 = vmatprep.subr.mxu0 0.0
    %3022 = vmatpush1.msra.mxu0 %v2906
    %3023 = vmatprep.subr.mxu0 0.0
    %3024 = vmatpush1.msra.mxu0 %v2907
    %3025 = vmatprep.subr.mxu0 0.0
    %3026 = vmatpush1.msra.mxu0 %v2908
    %3027 = vmatprep.subr.mxu0 0.0
    %3028 = vmatpush1.msra.mxu0 %v2909
    %3029 = vmatprep.subr.mxu0 0.0
    %3030 = vmatpush1.msra.mxu0 %v2910
    %3031 = vmatprep.subr.mxu0 0.0
    %3032 = vmatpush1.msra.mxu0 %v2911
    %3033 = vmatprep.subr.mxu0 0.0
    %3034 = vmatpush1.msra.mxu0 %v2912
    %3035 = vmatprep.subr.mxu0 0.0
    %3036 = vmatpush1.msra.mxu0 %v2913
    %3037 = vmatprep.subr.mxu0 0.0
    %3038 = vmatpush1.msra.mxu0 %v2914
    %3039 = vmatprep.subr.mxu0 0.0
    %3040 = vmatpush1.msra.mxu0 %v2915
    %3041 = vmatprep.subr.mxu0 0.0
    %3042 = vmatpush1.msra.mxu0 %v2916
    %3043 = vmatprep.subr.mxu0 0.0
    %3044 = vmatpush1.msra.mxu0 %v2917
    %3045 = vmatprep.subr.mxu0 0.0
    %3046 = vmatpush1.msra.mxu0 %v2918
    %3047 = vmatprep.subr.mxu0 0.0
    %3048 = vmatpush1.msra.mxu0 %v2919
    %3049 = vmatprep.subr.mxu0 0.0
    %3050 = vmatpush1.msra.mxu0 %v2920
    %3051 = vmatprep.subr.mxu0 0.0
    %3052 = vmatpush1.msra.mxu0 %v2921
    %3053 = vmatprep.subr.mxu0 0.0
    %3054 = vmatpush1.msra.mxu0 %v2922
    %3055 = vmatprep.subr.mxu0 0.0
    %3056 = vmatpush1.msra.mxu0 %v2923
    %3057 = vmatprep.subr.mxu0 0.0
    %3058 = vmatpush1.msra.mxu0 %v2924
    %3059 = vmatprep.subr.mxu0 0.0
    %3060 = vmatpush1.msra.mxu0 %v2925
    %3061 = vmatprep.subr.mxu0 0.0
    %3062 = vmatpush1.msra.mxu0 %v2926
    %3063 = vmatprep.subr.mxu0 0.0
    %3064 = vmatpush1.msra.mxu0 %v2927
    %3065 = vmatprep.subr.mxu0 0.0
    %3066 = vmatpush1.msra.mxu0 %v2928
    %3067 = vmatprep.subr.mxu0 0.0
    %3068 = vmatpush1.msra.mxu0 %v2929
    %3069 = vmatprep.mubr.f32.mxu0 %v2853
    %3070 = vmatmul.mubr.f32.gmra.mrb[0].mxu0 %v2852
    %v3071 = vpop.f32.mrb[0].mxu0
    %v3072 = vadd.f32 %v2997, %v3071
    %v3073 = vpop.f32.mrb[0].mxu0
    %3074 = vmatprep.mubr.f32.mxu0 %v2857
    %3075 = vmatmul.mubr.f32.gmra.mrb[0].mxu0 %v2856
    %v3076 = vpop.f32.mrb[0].mxu0
    %v3077 = vadd.f32 %v3002, %v3076
    %v3078 = vpop.f32.mrb[0].mxu0
    %3079 = vdwg.mxu0
    %v3080 = vtanh.pop %v3072
    %v3081 = vtanh.pop %v3077
    %vm3082 = vcmask 7168
    %3083 = vst.msk [vmem:[%s14] sm:$0xff] %vm3082, %v3080
    %vm3084 = vcmask 1024
    %3085 = vst.msk [vmem:[%s14 + $0x8] sm:$0x3] %vm3084, %v3081
    // Predicated region
    $region65: #{forward.4} parent=1 // pred_check
      _
    $region66: #{forward.4} parent=1 // pred_check_branch
      %3087 = sbr.rel (0) target = $region68
    $region67: #{forward.4} parent=1 // pred_region
      _
    $region68: #{forward.4} parent=1 // pred_fallthru
      _
    // Predicated region
    $region69: #{forward.4} parent=1 // pred_check
      _
    $region70: #{forward.4} parent=1 // pred_check_branch
      %3089 = sbr.rel (0) target = $region72
    $region71: #{forward.4} parent=1 // pred_region
      _
    $region72: #{forward.4} parent=1 // pred_fallthru
      _
    // Predicated region
    $region73: #{forward.4} parent=1 // pred_check
      _
    $region74: #{forward.4} parent=1 // pred_check_branch
      %3091 = sbr.rel (0) target = $region76
    $region75: #{forward.4} parent=1 // pred_region
      _
    $region76: #{forward.4} parent=1 // pred_fallthru
      _
    // Predicated region
    $region77: #{forward.4} parent=1 // pred_check
      _
    $region78: #{forward.4} parent=1 // pred_check_branch
      %3093 = sbr.rel (0) target = $region80
    $region79: #{forward.4} parent=1 // pred_region
      _
    $region80: #{forward.4} parent=1 // pred_fallthru
      _
    // Predicated region
    $region81: #{forward.4} parent=1 // pred_check
      _
    $region82: #{forward.4} parent=1 // pred_check_branch
      %3095 = sbr.rel (0) target = $region84
    $region83: #{forward.4} parent=1 // pred_region
      _
    $region84: #{forward.4} parent=1 // pred_fallthru
      _
    // Predicated region
    $region85: #{forward.4} parent=1 // pred_check
      _
    $region86: #{forward.4} parent=1 // pred_check_branch
      %3097 = sbr.rel (0) target = $region88
    $region87: #{forward.4} parent=1 // pred_region
      _
    $region88: #{forward.4} parent=1 // pred_fallthru
      _
    %3098 = vsyncpa [#allocation4], 1

</llo_original>
